<compile_context>
chip_gen: v7x
topology: tpu7x:2x2x1
jax: 0.10.0
libtpu: 0.0.40
codegen_flags: <defaults>
</compile_context>

<pallas_src>
import functools
import math

import jax
import jax.numpy as jnp
from jax.experimental import pallas as pl
from jax.experimental.pallas import tpu as pltpu


# ----------------------------- fused kernel --------------------------------

def _textrnn_kernel(*refs, T, B, H, V, L):
    """Fused TextRNN forward.

    refs layout:
      inputs : ids(T*B,1) i32, lengths(B,1) i32, emb(Vpad,E) f32,
               fc_w(2H,O) f32, fc_b(1,O) f32,
               then per layer l, per direction (fwd, bwd):
                 w_ih(in_l,4H), w_hh(H,4H), b(1,4H)
      outputs: logits(B,O)
      scratch: fseq(T*B,H), bseq(T*B,H), gxf(T*B,4H), gxb(T*B,4H)  (f32 VMEM)
    """
    n_in = 5 + 6 * L
    ids_ref, len_ref, emb_ref, fcw_ref, fcb_ref = refs[0:5]
    w_refs = refs[5:n_in]
    out_ref = refs[n_in]
    fseq_ref, bseq_ref, gxf_ref, gxb_ref = refs[n_in + 1:n_in + 5]

    TB = T * B
    lengths = len_ref[...]                                      # (B, 1) int32

    # --- Embedding for the whole sequence: one (TB, V) @ (V, E) bf16 matmul.
    ids = ids_ref[...]                                          # (TB, 1)
    vocab_iota = jax.lax.broadcasted_iota(jnp.int32, (TB, V), 1)
    onehot = (vocab_iota == ids).astype(jnp.bfloat16)
    x_bf = jnp.dot(onehot, emb_ref[...].astype(jnp.bfloat16),
                   preferred_element_type=jnp.float32).astype(jnp.bfloat16)

    h_fwd = h_bwd = None
    for l in range(L):
        base = 6 * l
        wih_f = w_refs[base + 0]
        whh_f = w_refs[base + 1]
        b_f = w_refs[base + 2]
        wih_b = w_refs[base + 3]
        whh_b = w_refs[base + 4]
        b_b = w_refs[base + 5]
        is_last = (l == L - 1)

        # --- Hoisted input projection (+ combined bias) for ALL timesteps:
        #     one (TB, in) @ (in, 4H) bf16 matmul per direction.
        gxf_ref[...] = (jnp.dot(x_bf, wih_f[...].astype(jnp.bfloat16),
                                preferred_element_type=jnp.float32)
                        + b_f[...])
        gxb_ref[...] = (jnp.dot(x_bf, wih_b[...].astype(jnp.bfloat16),
                                preferred_element_type=jnp.float32)
                        + b_b[...])

        whh_f_bf = whh_f[...].astype(jnp.bfloat16)              # (H, 4H)
        whh_b_bf = whh_b[...].astype(jnp.bfloat16)

        def cell(gates, h_prev, c_prev, t):
            # Full-lane-width EUP ops, then static 32-lane chunk slices.
            sig = jax.nn.sigmoid(gates)                         # (B, 4H)
            tnh = jnp.tanh(gates)
            i_g = sig[:, 0 * H:1 * H]
            f_g = sig[:, 1 * H:2 * H]
            g_g = tnh[:, 2 * H:3 * H]
            o_g = sig[:, 3 * H:4 * H]
            c_new = f_g * c_prev + i_g * g_g
            h_new = o_g * jnp.tanh(c_new)
            # Packed-sequence semantics: only advance state while t < length.
            valid = t < lengths                                 # (B, 1) bool
            return (jnp.where(valid, h_new, h_prev),
                    jnp.where(valid, c_new, c_prev),
                    h_new)

        def step(i, carry):
            hf, cf, hb, cb = carry
            tf = i
            tb = T - 1 - i
            gf = (gxf_ref[pl.ds(tf * B, B), :]
                  + jnp.dot(hf.astype(jnp.bfloat16), whh_f_bf,
                            preferred_element_type=jnp.float32))
            gb = (gxb_ref[pl.ds(tb * B, B), :]
                  + jnp.dot(hb.astype(jnp.bfloat16), whh_b_bf,
                            preferred_element_type=jnp.float32))
            hf2, cf2, hf_raw = cell(gf, hf, cf, tf)
            hb2, cb2, hb_raw = cell(gb, hb, cb, tb)
            if not is_last:
                # Padded-position values are never consumed by the next layer
                # (its valid-mask discards them), so no zero-masking needed.
                fseq_ref[pl.ds(tf * B, B), :] = hf_raw
                bseq_ref[pl.ds(tb * B, B), :] = hb_raw
            return (hf2, cf2, hb2, cb2)

        zero = jnp.zeros((B, H), jnp.float32)
        h_fwd, _, h_bwd, _ = jax.lax.fori_loop(
            0, T, step, (zero, zero, zero, zero), unroll=True)

        if not is_last:
            # One concat per layer (not per step): next layer's input slab.
            x_bf = jnp.concatenate([fseq_ref[...], bseq_ref[...]],
                                   axis=-1).astype(jnp.bfloat16)

    # hidden[-2] (last-layer fwd final) ++ hidden[-1] (last-layer bwd final)
    hidden = jnp.concatenate([h_fwd, h_bwd], axis=-1)           # (B, 2H) f32
    out_ref[...] = (jnp.dot(hidden, fcw_ref[...],
                            preferred_element_type=jnp.float32)
                    + fcb_ref[...]).astype(out_ref.dtype)


# ----------------------------- wrapper --------------------------------------

def textrnn_forward(params, text, lengths, *, hidden_size, num_layers):
    T, B = text.shape
    Vp, _E = params["embedding"].shape        # embedding already lane-padded
    O = params["fc_w"].shape[1]
    H = hidden_size

    inputs = [text.reshape(T * B, 1).astype(jnp.int32),
              lengths.reshape(B, 1).astype(jnp.int32),
              params["embedding"],
              params["fc_w"],
              params["fc_b"].reshape(1, O)]
    for lp in params["layers"]:
        for d in ("fwd", "bwd"):
            inputs += [lp[d]["w_ih"], lp[d]["w_hh"], lp[d]["b"]]

    # TODO(synk): for v7x with large vocabularies, keep the embedding in HBM
    # (memory_space=pl.ANY) and DMA-gather the T*B needed rows instead of the
    # VMEM one-hot matmul, and add a parallel batch grid axis for the 2 TCs.
    kernel = functools.partial(_textrnn_kernel, T=T, B=B, H=H, V=Vp,
                               L=num_layers)
    return pl.pallas_call(
        kernel,
        out_shape=jax.ShapeDtypeStruct((B, O), jnp.float32),
        scratch_shapes=[pltpu.VMEM((T * B, H), jnp.float32),      # fwd seq out
                        pltpu.VMEM((T * B, H), jnp.float32),      # bwd seq out
                        pltpu.VMEM((T * B, 4 * H), jnp.float32),  # fwd x-proj
                        pltpu.VMEM((T * B, 4 * H), jnp.float32)], # bwd x-proj
        compiler_params=pltpu.CompilerParams(
            vmem_limit_bytes=64 * 1024 * 1024),
    )(*inputs)


# ----------------------------- parameter init -------------------------------

def _kaiming_normal(key, out_features, in_features):
    # nn.init.kaiming_normal_ (fan_in, relu gain): std = sqrt(2 / fan_in)
    return jax.random.normal(key, (out_features, in_features),
                             jnp.float32) * math.sqrt(2.0 / in_features)


def _orthogonal(key, rows, cols):
    # nn.init.orthogonal_: QR of a gaussian -> orthonormal columns (rows >= cols)
    a = jax.random.normal(key, (rows, cols), jnp.float32)
    q, _ = jnp.linalg.qr(a)
    return q


def init_textrnn_params(key, vocab, emb_dim, hidden, num_layers, output_dim):
    n_keys = 2 + 4 * num_layers
    keys = list(jax.random.split(key, n_keys))
    embedding = jax.random.normal(keys[0], (vocab, emb_dim), jnp.float32)
    # Pad vocab to a multiple of 128 ONCE here (not per forward call) so the
    # in-kernel one-hot contraction is lane-dense.
    Vp = max(128, ((vocab + 127) // 128) * 128)
    emb_padded = jnp.zeros((Vp, emb_dim), jnp.float32).at[:vocab, :].set(embedding)

    H = hidden
    layers = []
    kidx = 2
    for l in range(num_layers):
        in_dim = emb_dim if l == 0 else 2 * hidden
        layer = {}
        for d in ("fwd", "bwd"):
            w_ih = _kaiming_normal(keys[kidx], 4 * H, in_dim); kidx += 1
            w_hh = _orthogonal(keys[kidx], 4 * H, H); kidx += 1
            # bias_ih = 0; bias_hh = 0 except the forget-gate chunk (index 1 of
            # the i,f,g,o gate order) which is filled with 1.
            b = jnp.concatenate([jnp.zeros((H,), jnp.float32),
                                 jnp.ones((H,), jnp.float32),
                                 jnp.zeros((2 * H,), jnp.float32)])
            layer[d] = {"w_ih": jnp.transpose(w_ih),   # (in_dim, 4H)
                        "w_hh": jnp.transpose(w_hh),   # (H, 4H)
                        "b": b.reshape(1, 4 * H)}
        layers.append(layer)

    fc_w = _kaiming_normal(keys[1], output_dim, 2 * H)   # (O, 2H)
    fc_b = jnp.zeros((output_dim,), jnp.float32)
    return {"embedding": emb_padded, "layers": layers,
            "fc_w": jnp.transpose(fc_w), "fc_b": fc_b}


# ----------------------------- main ------------------------------------------

if __name__ == "__main__":
    SEQ_LEN, BATCH = 8, 2
    VOCAB, EMB_DIM, HIDDEN, NUM_LAYERS, OUT_DIM = 50, 64, 32, 2, 4

    key = jax.random.PRNGKey(0)
    k_ids, k_params = jax.random.split(key)

    # text: (T, B) token ids (nn.LSTM default is time-major / batch_first=False);
    # lengths sorted descending, as pack_padded_sequence requires.
    text = jax.random.randint(k_ids, (SEQ_LEN, BATCH), 0, VOCAB, dtype=jnp.int32)
    text_lengths = jnp.array([8, 6], dtype=jnp.int32)

    params = init_textrnn_params(k_params, VOCAB, EMB_DIM, HIDDEN,
                                 NUM_LAYERS, OUT_DIM)

    # TODO(synk): dropout (embeddings / inter-layer LSTM / pre-FC) is eval-mode
    # identity; training-mode stochastic dropout is not implemented.
    logits = textrnn_forward(params, text, text_lengths,
                             hidden_size=HIDDEN, num_layers=NUM_LAYERS)
    jax.block_until_ready(logits)
    assert logits.shape == (BATCH, OUT_DIM)
    assert bool(jnp.all(jnp.isfinite(logits)))
    print("KERNEL_OK")
</pallas_src>

<mosaic_0001>
module attributes {stable_mosaic.version = 11 : i64} {
  func.func @_textrnn_kernel(%arg0: memref<16x1xi32, #tpu.memory_space<vmem>>, %arg1: memref<2x1xi32, #tpu.memory_space<vmem>>, %arg2: memref<128x64xf32, #tpu.memory_space<vmem>>, %arg3: memref<64x4xf32, #tpu.memory_space<vmem>>, %arg4: memref<1x4xf32, #tpu.memory_space<vmem>>, %arg5: memref<64x128xf32, #tpu.memory_space<vmem>>, %arg6: memref<32x128xf32, #tpu.memory_space<vmem>>, %arg7: memref<1x128xf32, #tpu.memory_space<vmem>>, %arg8: memref<64x128xf32, #tpu.memory_space<vmem>>, %arg9: memref<32x128xf32, #tpu.memory_space<vmem>>, %arg10: memref<1x128xf32, #tpu.memory_space<vmem>>, %arg11: memref<64x128xf32, #tpu.memory_space<vmem>>, %arg12: memref<32x128xf32, #tpu.memory_space<vmem>>, %arg13: memref<1x128xf32, #tpu.memory_space<vmem>>, %arg14: memref<64x128xf32, #tpu.memory_space<vmem>>, %arg15: memref<32x128xf32, #tpu.memory_space<vmem>>, %arg16: memref<1x128xf32, #tpu.memory_space<vmem>>, %arg17: memref<2x4xf32, #tpu.memory_space<vmem>>, %arg18: memref<16x32xf32, #tpu.memory_space<vmem>>, %arg19: memref<16x32xf32, #tpu.memory_space<vmem>>, %arg20: memref<16x128xf32, #tpu.memory_space<vmem>>, %arg21: memref<16x128xf32, #tpu.memory_space<vmem>>) attributes {dimension_semantics = [], scalar_prefetch = 0 : i64, scratch_operands = 4 : i64, tpu.core_type = #tpu.core_type<tc>} {
    %c0 = arith.constant 0 : index
    %c0_0 = arith.constant 0 : index
    %0 = vector.load %arg1[%c0, %c0_0] : memref<2x1xi32, #tpu.memory_space<vmem>>, vector<2x1xi32>
    %c0_1 = arith.constant 0 : index
    %c0_2 = arith.constant 0 : index
    %1 = vector.load %arg0[%c0_1, %c0_2] : memref<16x1xi32, #tpu.memory_space<vmem>>, vector<16x1xi32>
    %2 = tpu.iota {dimensions = array<i32: 1>} : vector<16x128xi32>
    %3 = vector.broadcast %1 : vector<16x1xi32> to vector<16x128xi32>
    %4 = arith.cmpi eq, %2, %3 : vector<16x128xi32>
    %5 = arith.extui %4 : vector<16x128xi1> to vector<16x128xi32>
    %6 = arith.sitofp %5 : vector<16x128xi32> to vector<16x128xf32>
    %7 = arith.truncf %6 : vector<16x128xf32> to vector<16x128xbf16>
    %c0_3 = arith.constant 0 : index
    %c0_4 = arith.constant 0 : index
    %8 = vector.load %arg2[%c0_3, %c0_4] : memref<128x64xf32, #tpu.memory_space<vmem>>, vector<128x64xf32>
    %9 = arith.truncf %8 : vector<128x64xf32> to vector<128x64xbf16>
    %cst = arith.constant dense<0.000000e+00> : vector<16x64xf32>
    %10 = tpu.matmul %7, %9, %cst {dimension_numbers = #tpu.dot_dimension_numbers<[1], [0], [0], [1], [0, 0, 1, 1], [], []>} : vector<16x128xbf16>, vector<128x64xbf16>, vector<16x64xf32> -> vector<16x64xf32>
    %11 = arith.truncf %10 : vector<16x64xf32> to vector<16x64xbf16>
    %c0_5 = arith.constant 0 : index
    %c0_6 = arith.constant 0 : index
    %12 = vector.load %arg5[%c0_5, %c0_6] : memref<64x128xf32, #tpu.memory_space<vmem>>, vector<64x128xf32>
    %13 = arith.truncf %12 : vector<64x128xf32> to vector<64x128xbf16>
    %cst_7 = arith.constant dense<0.000000e+00> : vector<16x128xf32>
    %14 = tpu.matmul %11, %13, %cst_7 {dimension_numbers = #tpu.dot_dimension_numbers<[1], [0], [0], [1], [0, 0, 1, 1], [], []>} : vector<16x64xbf16>, vector<64x128xbf16>, vector<16x128xf32> -> vector<16x128xf32>
    %c0_8 = arith.constant 0 : index
    %c0_9 = arith.constant 0 : index
    %15 = vector.load %arg7[%c0_8, %c0_9] : memref<1x128xf32, #tpu.memory_space<vmem>>, vector<1x128xf32>
    %16 = vector.broadcast %15 : vector<1x128xf32> to vector<16x128xf32>
    %17 = arith.addf %14, %16 : vector<16x128xf32>
    %c0_10 = arith.constant 0 : index
    %c0_11 = arith.constant 0 : index
    %18 = vector.load %arg20[%c0_10, %c0_11] : memref<16x128xf32, #tpu.memory_space<vmem>>, vector<16x128xf32>
    tpu.vector_store %arg20[%c0_10, %c0_11], %17 {strides = array<i32>} : memref<16x128xf32, #tpu.memory_space<vmem>>, vector<16x128xf32>,
    %c0_12 = arith.constant 0 : index
    %c0_13 = arith.constant 0 : index
    %19 = vector.load %arg8[%c0_12, %c0_13] : memref<64x128xf32, #tpu.memory_space<vmem>>, vector<64x128xf32>
    %20 = arith.truncf %19 : vector<64x128xf32> to vector<64x128xbf16>
    %cst_14 = arith.constant dense<0.000000e+00> : vector<16x128xf32>
    %21 = tpu.matmul %11, %20, %cst_14 {dimension_numbers = #tpu.dot_dimension_numbers<[1], [0], [0], [1], [0, 0, 1, 1], [], []>} : vector<16x64xbf16>, vector<64x128xbf16>, vector<16x128xf32> -> vector<16x128xf32>
    %c0_15 = arith.constant 0 : index
    %c0_16 = arith.constant 0 : index
    %22 = vector.load %arg10[%c0_15, %c0_16] : memref<1x128xf32, #tpu.memory_space<vmem>>, vector<1x128xf32>
    %23 = vector.broadcast %22 : vector<1x128xf32> to vector<16x128xf32>
    %24 = arith.addf %21, %23 : vector<16x128xf32>
    %c0_17 = arith.constant 0 : index
    %c0_18 = arith.constant 0 : index
    %25 = vector.load %arg21[%c0_17, %c0_18] : memref<16x128xf32, #tpu.memory_space<vmem>>, vector<16x128xf32>
    tpu.vector_store %arg21[%c0_17, %c0_18], %24 {strides = array<i32>} : memref<16x128xf32, #tpu.memory_space<vmem>>, vector<16x128xf32>,
    %c0_19 = arith.constant 0 : index
    %c0_20 = arith.constant 0 : index
    %26 = vector.load %arg6[%c0_19, %c0_20] : memref<32x128xf32, #tpu.memory_space<vmem>>, vector<32x128xf32>
    %27 = arith.truncf %26 : vector<32x128xf32> to vector<32x128xbf16>
    %c0_21 = arith.constant 0 : index
    %c0_22 = arith.constant 0 : index
    %28 = vector.load %arg9[%c0_21, %c0_22] : memref<32x128xf32, #tpu.memory_space<vmem>>, vector<32x128xf32>
    %29 = arith.truncf %28 : vector<32x128xf32> to vector<32x128xbf16>
    %cst_23 = arith.constant 0.000000e+00 : f32
    %30 = vector.broadcast %cst_23 : f32 to vector<2x32xf32>
    %c0_i32 = arith.constant 0 : i32
    %c7_i32 = arith.constant 7 : i32
    %31 = arith.subi %c7_i32, %c0_i32 : i32
    %c2_i32 = arith.constant 2 : i32
    %32 = arith.muli %c0_i32, %c2_i32 : i32
    %33 = arith.index_cast %32 : i32 to index
    %c0_24 = arith.constant 0 : index
    %34 = vector.load %arg20[%33, %c0_24] : memref<16x128xf32, #tpu.memory_space<vmem>>, vector<2x128xf32>
    %35 = arith.truncf %30 : vector<2x32xf32> to vector<2x32xbf16>
    %cst_25 = arith.constant dense<0.000000e+00> : vector<2x128xf32>
    %36 = tpu.matmul %35, %27, %cst_25 {dimension_numbers = #tpu.dot_dimension_numbers<[1], [0], [0], [1], [0, 0, 1, 1], [], []>} : vector<2x32xbf16>, vector<32x128xbf16>, vector<2x128xf32> -> vector<2x128xf32>
    %37 = arith.addf %34, %36 : vector<2x128xf32>
    %c2_i32_26 = arith.constant 2 : i32
    %38 = arith.muli %31, %c2_i32_26 : i32
    %39 = arith.index_cast %38 : i32 to index
    %c0_27 = arith.constant 0 : index
    %40 = vector.load %arg21[%39, %c0_27] : memref<16x128xf32, #tpu.memory_space<vmem>>, vector<2x128xf32>
    %41 = arith.truncf %30 : vector<2x32xf32> to vector<2x32xbf16>
    %cst_28 = arith.constant dense<0.000000e+00> : vector<2x128xf32>
    %42 = tpu.matmul %41, %29, %cst_28 {dimension_numbers = #tpu.dot_dimension_numbers<[1], [0], [0], [1], [0, 0, 1, 1], [], []>} : vector<2x32xbf16>, vector<32x128xbf16>, vector<2x128xf32> -> vector<2x128xf32>
    %43 = arith.addf %40, %42 : vector<2x128xf32>
    %44 = arith.negf %37 : vector<2x128xf32>
    %45 = math.exp %44 : vector<2x128xf32>
    %cst_29 = arith.constant 1.000000e+00 : f32
    %46 = vector.broadcast %cst_29 : f32 to vector<2x128xf32>
    %47 = arith.addf %46, %45 : vector<2x128xf32>
    %48 = arith.divf %46, %47 : vector<2x128xf32>
    %49 = math.tanh %37 : vector<2x128xf32>
    %50 = vector.extract_strided_slice %48 {offsets = [0, 0], sizes = [2, 32], strides = [1, 1]} : vector<2x128xf32> to vector<2x32xf32>
    %51 = vector.extract_strided_slice %48 {offsets = [0, 32], sizes = [2, 32], strides = [1, 1]} : vector<2x128xf32> to vector<2x32xf32>
    %52 = vector.extract_strided_slice %49 {offsets = [0, 64], sizes = [2, 32], strides = [1, 1]} : vector<2x128xf32> to vector<2x32xf32>
    %53 = vector.extract_strided_slice %48 {offsets = [0, 96], sizes = [2, 32], strides = [1, 1]} : vector<2x128xf32> to vector<2x32xf32>
    %54 = arith.mulf %51, %30 : vector<2x32xf32>
    %55 = arith.mulf %50, %52 : vector<2x32xf32>
    %56 = arith.addf %54, %55 : vector<2x32xf32>
    %57 = math.tanh %56 : vector<2x32xf32>
    %58 = arith.mulf %53, %57 : vector<2x32xf32>
    %59 = vector.broadcast %c0_i32 : i32 to vector<2x1xi32>
    %60 = arith.cmpi slt, %59, %0 : vector<2x1xi32>
    %61 = vector.shape_cast %60 : vector<2x1xi1> to vector<2x1xi1>
    %62 = vector.broadcast %61 : vector<2x1xi1> to vector<2x32xi1>
    %63 = arith.select %62, %58, %30 : vector<2x32xi1>, vector<2x32xf32>
    %64 = vector.shape_cast %60 : vector<2x1xi1> to vector<2x1xi1>
    %65 = vector.broadcast %64 : vector<2x1xi1> to vector<2x32xi1>
    %66 = arith.select %65, %56, %30 : vector<2x32xi1>, vector<2x32xf32>
    %67 = arith.negf %43 : vector<2x128xf32>
    %68 = math.exp %67 : vector<2x128xf32>
    %cst_30 = arith.constant 1.000000e+00 : f32
    %69 = vector.broadcast %cst_30 : f32 to vector<2x128xf32>
    %70 = arith.addf %69, %68 : vector<2x128xf32>
    %71 = arith.divf %69, %70 : vector<2x128xf32>
    %72 = math.tanh %43 : vector<2x128xf32>
    %73 = vector.extract_strided_slice %71 {offsets = [0, 0], sizes = [2, 32], strides = [1, 1]} : vector<2x128xf32> to vector<2x32xf32>
    %74 = vector.extract_strided_slice %71 {offsets = [0, 32], sizes = [2, 32], strides = [1, 1]} : vector<2x128xf32> to vector<2x32xf32>
    %75 = vector.extract_strided_slice %72 {offsets = [0, 64], sizes = [2, 32], strides = [1, 1]} : vector<2x128xf32> to vector<2x32xf32>
    %76 = vector.extract_strided_slice %71 {offsets = [0, 96], sizes = [2, 32], strides = [1, 1]} : vector<2x128xf32> to vector<2x32xf32>
    %77 = arith.mulf %74, %30 : vector<2x32xf32>
    %78 = arith.mulf %73, %75 : vector<2x32xf32>
    %79 = arith.addf %77, %78 : vector<2x32xf32>
    %80 = math.tanh %79 : vector<2x32xf32>
    %81 = arith.mulf %76, %80 : vector<2x32xf32>
    %82 = vector.broadcast %31 : i32 to vector<2x1xi32>
    %83 = arith.cmpi slt, %82, %0 : vector<2x1xi32>
    %84 = vector.shape_cast %83 : vector<2x1xi1> to vector<2x1xi1>
    %85 = vector.broadcast %84 : vector<2x1xi1> to vector<2x32xi1>
    %86 = arith.select %85, %81, %30 : vector<2x32xi1>, vector<2x32xf32>
    %87 = vector.shape_cast %83 : vector<2x1xi1> to vector<2x1xi1>
    %88 = vector.broadcast %87 : vector<2x1xi1> to vector<2x32xi1>
    %89 = arith.select %88, %79, %30 : vector<2x32xi1>, vector<2x32xf32>
    %c2_i32_31 = arith.constant 2 : i32
    %90 = arith.muli %c0_i32, %c2_i32_31 : i32
    %91 = arith.index_cast %90 : i32 to index
    %c0_32 = arith.constant 0 : index
    %92 = vector.load %arg18[%91, %c0_32] : memref<16x32xf32, #tpu.memory_space<vmem>>, vector<2x32xf32>
    tpu.vector_store %arg18[%91, %c0_32], %58 {strides = array<i32>} : memref<16x32xf32, #tpu.memory_space<vmem>>, vector<2x32xf32>,
    %c2_i32_33 = arith.constant 2 : i32
    %93 = arith.muli %31, %c2_i32_33 : i32
    %94 = arith.index_cast %93 : i32 to index
    %c0_34 = arith.constant 0 : index
    %95 = vector.load %arg19[%94, %c0_34] : memref<16x32xf32, #tpu.memory_space<vmem>>, vector<2x32xf32>
    tpu.vector_store %arg19[%94, %c0_34], %81 {strides = array<i32>} : memref<16x32xf32, #tpu.memory_space<vmem>>, vector<2x32xf32>,
    %c1_i32 = arith.constant 1 : i32
    %c7_i32_35 = arith.constant 7 : i32
    %96 = arith.subi %c7_i32_35, %c1_i32 : i32
    %c2_i32_36 = arith.constant 2 : i32
    %97 = arith.muli %c1_i32, %c2_i32_36 : i32
    %98 = arith.index_cast %97 : i32 to index
    %c0_37 = arith.constant 0 : index
    %99 = vector.load %arg20[%98, %c0_37] : memref<16x128xf32, #tpu.memory_space<vmem>>, vector<2x128xf32>
    %100 = arith.truncf %63 : vector<2x32xf32> to vector<2x32xbf16>
    %cst_38 = arith.constant dense<0.000000e+00> : vector<2x128xf32>
    %101 = tpu.matmul %100, %27, %cst_38 {dimension_numbers = #tpu.dot_dimension_numbers<[1], [0], [0], [1], [0, 0, 1, 1], [], []>} : vector<2x32xbf16>, vector<32x128xbf16>, vector<2x128xf32> -> vector<2x128xf32>
    %102 = arith.addf %99, %101 : vector<2x128xf32>
    %c2_i32_39 = arith.constant 2 : i32
    %103 = arith.muli %96, %c2_i32_39 : i32
    %104 = arith.index_cast %103 : i32 to index
    %c0_40 = arith.constant 0 : index
    %105 = vector.load %arg21[%104, %c0_40] : memref<16x128xf32, #tpu.memory_space<vmem>>, vector<2x128xf32>
    %106 = arith.truncf %86 : vector<2x32xf32> to vector<2x32xbf16>
    %cst_41 = arith.constant dense<0.000000e+00> : vector<2x128xf32>
    %107 = tpu.matmul %106, %29, %cst_41 {dimension_numbers = #tpu.dot_dimension_numbers<[1], [0], [0], [1], [0, 0, 1, 1], [], []>} : vector<2x32xbf16>, vector<32x128xbf16>, vector<2x128xf32> -> vector<2x128xf32>
    %108 = arith.addf %105, %107 : vector<2x128xf32>
    %109 = arith.negf %102 : vector<2x128xf32>
    %110 = math.exp %109 : vector<2x128xf32>
    %cst_42 = arith.constant 1.000000e+00 : f32
    %111 = vector.broadcast %cst_42 : f32 to vector<2x128xf32>
    %112 = arith.addf %111, %110 : vector<2x128xf32>
    %113 = arith.divf %111, %112 : vector<2x128xf32>
    %114 = math.tanh %102 : vector<2x128xf32>
    %115 = vector.extract_strided_slice %113 {offsets = [0, 0], sizes = [2, 32], strides = [1, 1]} : vector<2x128xf32> to vector<2x32xf32>
    %116 = vector.extract_strided_slice %113 {offsets = [0, 32], sizes = [2, 32], strides = [1, 1]} : vector<2x128xf32> to vector<2x32xf32>
    %117 = vector.extract_strided_slice %114 {offsets = [0, 64], sizes = [2, 32], strides = [1, 1]} : vector<2x128xf32> to vector<2x32xf32>
    %118 = vector.extract_strided_slice %113 {offsets = [0, 96], sizes = [2, 32], strides = [1, 1]} : vector<2x128xf32> to vector<2x32xf32>
    %119 = arith.mulf %116, %66 : vector<2x32xf32>
    %120 = arith.mulf %115, %117 : vector<2x32xf32>
    %121 = arith.addf %119, %120 : vector<2x32xf32>
    %122 = math.tanh %121 : vector<2x32xf32>
    %123 = arith.mulf %118, %122 : vector<2x32xf32>
    %124 = vector.broadcast %c1_i32 : i32 to vector<2x1xi32>
    %125 = arith.cmpi slt, %124, %0 : vector<2x1xi32>
    %126 = vector.shape_cast %125 : vector<2x1xi1> to vector<2x1xi1>
    %127 = vector.broadcast %126 : vector<2x1xi1> to vector<2x32xi1>
    %128 = arith.select %127, %123, %63 : vector<2x32xi1>, vector<2x32xf32>
    %129 = vector.shape_cast %125 : vector<2x1xi1> to vector<2x1xi1>
    %130 = vector.broadcast %129 : vector<2x1xi1> to vector<2x32xi1>
    %131 = arith.select %130, %121, %66 : vector<2x32xi1>, vector<2x32xf32>
    %132 = arith.negf %108 : vector<2x128xf32>
    %133 = math.exp %132 : vector<2x128xf32>
    %cst_43 = arith.constant 1.000000e+00 : f32
    %134 = vector.broadcast %cst_43 : f32 to vector<2x128xf32>
    %135 = arith.addf %134, %133 : vector<2x128xf32>
    %136 = arith.divf %134, %135 : vector<2x128xf32>
    %137 = math.tanh %108 : vector<2x128xf32>
    %138 = vector.extract_strided_slice %136 {offsets = [0, 0], sizes = [2, 32], strides = [1, 1]} : vector<2x128xf32> to vector<2x32xf32>
    %139 = vector.extract_strided_slice %136 {offsets = [0, 32], sizes = [2, 32], strides = [1, 1]} : vector<2x128xf32> to vector<2x32xf32>
    %140 = vector.extract_strided_slice %137 {offsets = [0, 64], sizes = [2, 32], strides = [1, 1]} : vector<2x128xf32> to vector<2x32xf32>
    %141 = vector.extract_strided_slice %136 {offsets = [0, 96], sizes = [2, 32], strides = [1, 1]} : vector<2x128xf32> to vector<2x32xf32>
    %142 = arith.mulf %139, %89 : vector<2x32xf32>
    %143 = arith.mulf %138, %140 : vector<2x32xf32>
    %144 = arith.addf %142, %143 : vector<2x32xf32>
    %145 = math.tanh %144 : vector<2x32xf32>
    %146 = arith.mulf %141, %145 : vector<2x32xf32>
    %147 = vector.broadcast %96 : i32 to vector<2x1xi32>
    %148 = arith.cmpi slt, %147, %0 : vector<2x1xi32>
    %149 = vector.shape_cast %148 : vector<2x1xi1> to vector<2x1xi1>
    %150 = vector.broadcast %149 : vector<2x1xi1> to vector<2x32xi1>
    %151 = arith.select %150, %146, %86 : vector<2x32xi1>, vector<2x32xf32>
    %152 = vector.shape_cast %148 : vector<2x1xi1> to vector<2x1xi1>
    %153 = vector.broadcast %152 : vector<2x1xi1> to vector<2x32xi1>
    %154 = arith.select %153, %144, %89 : vector<2x32xi1>, vector<2x32xf32>
    %c2_i32_44 = arith.constant 2 : i32
    %155 = arith.muli %c1_i32, %c2_i32_44 : i32
    %156 = arith.index_cast %155 : i32 to index
    %c0_45 = arith.constant 0 : index
    %157 = vector.load %arg18[%156, %c0_45] : memref<16x32xf32, #tpu.memory_space<vmem>>, vector<2x32xf32>
    tpu.vector_store %arg18[%156, %c0_45], %123 {strides = array<i32>} : memref<16x32xf32, #tpu.memory_space<vmem>>, vector<2x32xf32>,
    %c2_i32_46 = arith.constant 2 : i32
    %158 = arith.muli %96, %c2_i32_46 : i32
    %159 = arith.index_cast %158 : i32 to index
    %c0_47 = arith.constant 0 : index
    %160 = vector.load %arg19[%159, %c0_47] : memref<16x32xf32, #tpu.memory_space<vmem>>, vector<2x32xf32>
    tpu.vector_store %arg19[%159, %c0_47], %146 {strides = array<i32>} : memref<16x32xf32, #tpu.memory_space<vmem>>, vector<2x32xf32>,
    %c2_i32_48 = arith.constant 2 : i32
    %c7_i32_49 = arith.constant 7 : i32
    %161 = arith.subi %c7_i32_49, %c2_i32_48 : i32
    %c2_i32_50 = arith.constant 2 : i32
    %162 = arith.muli %c2_i32_48, %c2_i32_50 : i32
    %163 = arith.index_cast %162 : i32 to index
    %c0_51 = arith.constant 0 : index
    %164 = vector.load %arg20[%163, %c0_51] : memref<16x128xf32, #tpu.memory_space<vmem>>, vector<2x128xf32>
    %165 = arith.truncf %128 : vector<2x32xf32> to vector<2x32xbf16>
    %cst_52 = arith.constant dense<0.000000e+00> : vector<2x128xf32>
    %166 = tpu.matmul %165, %27, %cst_52 {dimension_numbers = #tpu.dot_dimension_numbers<[1], [0], [0], [1], [0, 0, 1, 1], [], []>} : vector<2x32xbf16>, vector<32x128xbf16>, vector<2x128xf32> -> vector<2x128xf32>
    %167 = arith.addf %164, %166 : vector<2x128xf32>
    %c2_i32_53 = arith.constant 2 : i32
    %168 = arith.muli %161, %c2_i32_53 : i32
    %169 = arith.index_cast %168 : i32 to index
    %c0_54 = arith.constant 0 : index
    %170 = vector.load %arg21[%169, %c0_54] : memref<16x128xf32, #tpu.memory_space<vmem>>, vector<2x128xf32>
    %171 = arith.truncf %151 : vector<2x32xf32> to vector<2x32xbf16>
    %cst_55 = arith.constant dense<0.000000e+00> : vector<2x128xf32>
    %172 = tpu.matmul %171, %29, %cst_55 {dimension_numbers = #tpu.dot_dimension_numbers<[1], [0], [0], [1], [0, 0, 1, 1], [], []>} : vector<2x32xbf16>, vector<32x128xbf16>, vector<2x128xf32> -> vector<2x128xf32>
    %173 = arith.addf %170, %172 : vector<2x128xf32>
    %174 = arith.negf %167 : vector<2x128xf32>
    %175 = math.exp %174 : vector<2x128xf32>
    %cst_56 = arith.constant 1.000000e+00 : f32
    %176 = vector.broadcast %cst_56 : f32 to vector<2x128xf32>
    %177 = arith.addf %176, %175 : vector<2x128xf32>
    %178 = arith.divf %176, %177 : vector<2x128xf32>
    %179 = math.tanh %167 : vector<2x128xf32>
    %180 = vector.extract_strided_slice %178 {offsets = [0, 0], sizes = [2, 32], strides = [1, 1]} : vector<2x128xf32> to vector<2x32xf32>
    %181 = vector.extract_strided_slice %178 {offsets = [0, 32], sizes = [2, 32], strides = [1, 1]} : vector<2x128xf32> to vector<2x32xf32>
    %182 = vector.extract_strided_slice %179 {offsets = [0, 64], sizes = [2, 32], strides = [1, 1]} : vector<2x128xf32> to vector<2x32xf32>
    %183 = vector.extract_strided_slice %178 {offsets = [0, 96], sizes = [2, 32], strides = [1, 1]} : vector<2x128xf32> to vector<2x32xf32>
    %184 = arith.mulf %181, %131 : vector<2x32xf32>
    %185 = arith.mulf %180, %182 : vector<2x32xf32>
    %186 = arith.addf %184, %185 : vector<2x32xf32>
    %187 = math.tanh %186 : vector<2x32xf32>
    %188 = arith.mulf %183, %187 : vector<2x32xf32>
    %189 = vector.broadcast %c2_i32_48 : i32 to vector<2x1xi32>
    %190 = arith.cmpi slt, %189, %0 : vector<2x1xi32>
    %191 = vector.shape_cast %190 : vector<2x1xi1> to vector<2x1xi1>
    %192 = vector.broadcast %191 : vector<2x1xi1> to vector<2x32xi1>
    %193 = arith.select %192, %188, %128 : vector<2x32xi1>, vector<2x32xf32>
    %194 = vector.shape_cast %190 : vector<2x1xi1> to vector<2x1xi1>
    %195 = vector.broadcast %194 : vector<2x1xi1> to vector<2x32xi1>
    %196 = arith.select %195, %186, %131 : vector<2x32xi1>, vector<2x32xf32>
    %197 = arith.negf %173 : vector<2x128xf32>
    %198 = math.exp %197 : vector<2x128xf32>
    %cst_57 = arith.constant 1.000000e+00 : f32
    %199 = vector.broadcast %cst_57 : f32 to vector<2x128xf32>
    %200 = arith.addf %199, %198 : vector<2x128xf32>
    %201 = arith.divf %199, %200 : vector<2x128xf32>
    %202 = math.tanh %173 : vector<2x128xf32>
    %203 = vector.extract_strided_slice %201 {offsets = [0, 0], sizes = [2, 32], strides = [1, 1]} : vector<2x128xf32> to vector<2x32xf32>
    %204 = vector.extract_strided_slice %201 {offsets = [0, 32], sizes = [2, 32], strides = [1, 1]} : vector<2x128xf32> to vector<2x32xf32>
    %205 = vector.extract_strided_slice %202 {offsets = [0, 64], sizes = [2, 32], strides = [1, 1]} : vector<2x128xf32> to vector<2x32xf32>
    %206 = vector.extract_strided_slice %201 {offsets = [0, 96], sizes = [2, 32], strides = [1, 1]} : vector<2x128xf32> to vector<2x32xf32>
    %207 = arith.mulf %204, %154 : vector<2x32xf32>
    %208 = arith.mulf %203, %205 : vector<2x32xf32>
    %209 = arith.addf %207, %208 : vector<2x32xf32>
    %210 = math.tanh %209 : vector<2x32xf32>
    %211 = arith.mulf %206, %210 : vector<2x32xf32>
    %212 = vector.broadcast %161 : i32 to vector<2x1xi32>
    %213 = arith.cmpi slt, %212, %0 : vector<2x1xi32>
    %214 = vector.shape_cast %213 : vector<2x1xi1> to vector<2x1xi1>
    %215 = vector.broadcast %214 : vector<2x1xi1> to vector<2x32xi1>
    %216 = arith.select %215, %211, %151 : vector<2x32xi1>, vector<2x32xf32>
    %217 = vector.shape_cast %213 : vector<2x1xi1> to vector<2x1xi1>
    %218 = vector.broadcast %217 : vector<2x1xi1> to vector<2x32xi1>
    %219 = arith.select %218, %209, %154 : vector<2x32xi1>, vector<2x32xf32>
    %c2_i32_58 = arith.constant 2 : i32
    %220 = arith.muli %c2_i32_48, %c2_i32_58 : i32
    %221 = arith.index_cast %220 : i32 to index
    %c0_59 = arith.constant 0 : index
    %222 = vector.load %arg18[%221, %c0_59] : memref<16x32xf32, #tpu.memory_space<vmem>>, vector<2x32xf32>
    tpu.vector_store %arg18[%221, %c0_59], %188 {strides = array<i32>} : memref<16x32xf32, #tpu.memory_space<vmem>>, vector<2x32xf32>,
    %c2_i32_60 = arith.constant 2 : i32
    %223 = arith.muli %161, %c2_i32_60 : i32
    %224 = arith.index_cast %223 : i32 to index
    %c0_61 = arith.constant 0 : index
    %225 = vector.load %arg19[%224, %c0_61] : memref<16x32xf32, #tpu.memory_space<vmem>>, vector<2x32xf32>
    tpu.vector_store %arg19[%224, %c0_61], %211 {strides = array<i32>} : memref<16x32xf32, #tpu.memory_space<vmem>>, vector<2x32xf32>,
    %c3_i32 = arith.constant 3 : i32
    %c7_i32_62 = arith.constant 7 : i32
    %226 = arith.subi %c7_i32_62, %c3_i32 : i32
    %c2_i32_63 = arith.constant 2 : i32
    %227 = arith.muli %c3_i32, %c2_i32_63 : i32
    %228 = arith.index_cast %227 : i32 to index
    %c0_64 = arith.constant 0 : index
    %229 = vector.load %arg20[%228, %c0_64] : memref<16x128xf32, #tpu.memory_space<vmem>>, vector<2x128xf32>
    %230 = arith.truncf %193 : vector<2x32xf32> to vector<2x32xbf16>
    %cst_65 = arith.constant dense<0.000000e+00> : vector<2x128xf32>
    %231 = tpu.matmul %230, %27, %cst_65 {dimension_numbers = #tpu.dot_dimension_numbers<[1], [0], [0], [1], [0, 0, 1, 1], [], []>} : vector<2x32xbf16>, vector<32x128xbf16>, vector<2x128xf32> -> vector<2x128xf32>
    %232 = arith.addf %229, %231 : vector<2x128xf32>
    %c2_i32_66 = arith.constant 2 : i32
    %233 = arith.muli %226, %c2_i32_66 : i32
    %234 = arith.index_cast %233 : i32 to index
    %c0_67 = arith.constant 0 : index
    %235 = vector.load %arg21[%234, %c0_67] : memref<16x128xf32, #tpu.memory_space<vmem>>, vector<2x128xf32>
    %236 = arith.truncf %216 : vector<2x32xf32> to vector<2x32xbf16>
    %cst_68 = arith.constant dense<0.000000e+00> : vector<2x128xf32>
    %237 = tpu.matmul %236, %29, %cst_68 {dimension_numbers = #tpu.dot_dimension_numbers<[1], [0], [0], [1], [0, 0, 1, 1], [], []>} : vector<2x32xbf16>, vector<32x128xbf16>, vector<2x128xf32> -> vector<2x128xf32>
    %238 = arith.addf %235, %237 : vector<2x128xf32>
    %239 = arith.negf %232 : vector<2x128xf32>
    %240 = math.exp %239 : vector<2x128xf32>
    %cst_69 = arith.constant 1.000000e+00 : f32
    %241 = vector.broadcast %cst_69 : f32 to vector<2x128xf32>
    %242 = arith.addf %241, %240 : vector<2x128xf32>
    %243 = arith.divf %241, %242 : vector<2x128xf32>
    %244 = math.tanh %232 : vector<2x128xf32>
    %245 = vector.extract_strided_slice %243 {offsets = [0, 0], sizes = [2, 32], strides = [1, 1]} : vector<2x128xf32> to vector<2x32xf32>
    %246 = vector.extract_strided_slice %243 {offsets = [0, 32], sizes = [2, 32], strides = [1, 1]} : vector<2x128xf32> to vector<2x32xf32>
    %247 = vector.extract_strided_slice %244 {offsets = [0, 64], sizes = [2, 32], strides = [1, 1]} : vector<2x128xf32> to vector<2x32xf32>
    %248 = vector.extract_strided_slice %243 {offsets = [0, 96], sizes = [2, 32], strides = [1, 1]} : vector<2x128xf32> to vector<2x32xf32>
    %249 = arith.mulf %246, %196 : vector<2x32xf32>
    %250 = arith.mulf %245, %247 : vector<2x32xf32>
    %251 = arith.addf %249, %250 : vector<2x32xf32>
    %252 = math.tanh %251 : vector<2x32xf32>
    %253 = arith.mulf %248, %252 : vector<2x32xf32>
    %254 = vector.broadcast %c3_i32 : i32 to vector<2x1xi32>
    %255 = arith.cmpi slt, %254, %0 : vector<2x1xi32>
    %256 = vector.shape_cast %255 : vector<2x1xi1> to vector<2x1xi1>
    %257 = vector.broadcast %256 : vector<2x1xi1> to vector<2x32xi1>
    %258 = arith.select %257, %253, %193 : vector<2x32xi1>, vector<2x32xf32>
    %259 = vector.shape_cast %255 : vector<2x1xi1> to vector<2x1xi1>
    %260 = vector.broadcast %259 : vector<2x1xi1> to vector<2x32xi1>
    %261 = arith.select %260, %251, %196 : vector<2x32xi1>, vector<2x32xf32>
    %262 = arith.negf %238 : vector<2x128xf32>
    %263 = math.exp %262 : vector<2x128xf32>
    %cst_70 = arith.constant 1.000000e+00 : f32
    %264 = vector.broadcast %cst_70 : f32 to vector<2x128xf32>
    %265 = arith.addf %264, %263 : vector<2x128xf32>
    %266 = arith.divf %264, %265 : vector<2x128xf32>
    %267 = math.tanh %238 : vector<2x128xf32>
    %268 = vector.extract_strided_slice %266 {offsets = [0, 0], sizes = [2, 32], strides = [1, 1]} : vector<2x128xf32> to vector<2x32xf32>
    %269 = vector.extract_strided_slice %266 {offsets = [0, 32], sizes = [2, 32], strides = [1, 1]} : vector<2x128xf32> to vector<2x32xf32>
    %270 = vector.extract_strided_slice %267 {offsets = [0, 64], sizes = [2, 32], strides = [1, 1]} : vector<2x128xf32> to vector<2x32xf32>
    %271 = vector.extract_strided_slice %266 {offsets = [0, 96], sizes = [2, 32], strides = [1, 1]} : vector<2x128xf32> to vector<2x32xf32>
    %272 = arith.mulf %269, %219 : vector<2x32xf32>
    %273 = arith.mulf %268, %270 : vector<2x32xf32>
    %274 = arith.addf %272, %273 : vector<2x32xf32>
    %275 = math.tanh %274 : vector<2x32xf32>
    %276 = arith.mulf %271, %275 : vector<2x32xf32>
    %277 = vector.broadcast %226 : i32 to vector<2x1xi32>
    %278 = arith.cmpi slt, %277, %0 : vector<2x1xi32>
    %279 = vector.shape_cast %278 : vector<2x1xi1> to vector<2x1xi1>
    %280 = vector.broadcast %279 : vector<2x1xi1> to vector<2x32xi1>
    %281 = arith.select %280, %276, %216 : vector<2x32xi1>, vector<2x32xf32>
    %282 = vector.shape_cast %278 : vector<2x1xi1> to vector<2x1xi1>
    %283 = vector.broadcast %282 : vector<2x1xi1> to vector<2x32xi1>
    %284 = arith.select %283, %274, %219 : vector<2x32xi1>, vector<2x32xf32>
    %c2_i32_71 = arith.constant 2 : i32
    %285 = arith.muli %c3_i32, %c2_i32_71 : i32
    %286 = arith.index_cast %285 : i32 to index
    %c0_72 = arith.constant 0 : index
    %287 = vector.load %arg18[%286, %c0_72] : memref<16x32xf32, #tpu.memory_space<vmem>>, vector<2x32xf32>
    tpu.vector_store %arg18[%286, %c0_72], %253 {strides = array<i32>} : memref<16x32xf32, #tpu.memory_space<vmem>>, vector<2x32xf32>,
    %c2_i32_73 = arith.constant 2 : i32
    %288 = arith.muli %226, %c2_i32_73 : i32
    %289 = arith.index_cast %288 : i32 to index
    %c0_74 = arith.constant 0 : index
    %290 = vector.load %arg19[%289, %c0_74] : memref<16x32xf32, #tpu.memory_space<vmem>>, vector<2x32xf32>
    tpu.vector_store %arg19[%289, %c0_74], %276 {strides = array<i32>} : memref<16x32xf32, #tpu.memory_space<vmem>>, vector<2x32xf32>,
    %c4_i32 = arith.constant 4 : i32
    %c7_i32_75 = arith.constant 7 : i32
    %291 = arith.subi %c7_i32_75, %c4_i32 : i32
    %c2_i32_76 = arith.constant 2 : i32
    %292 = arith.muli %c4_i32, %c2_i32_76 : i32
    %293 = arith.index_cast %292 : i32 to index
    %c0_77 = arith.constant 0 : index
    %294 = vector.load %arg20[%293, %c0_77] : memref<16x128xf32, #tpu.memory_space<vmem>>, vector<2x128xf32>
    %295 = arith.truncf %258 : vector<2x32xf32> to vector<2x32xbf16>
    %cst_78 = arith.constant dense<0.000000e+00> : vector<2x128xf32>
    %296 = tpu.matmul %295, %27, %cst_78 {dimension_numbers = #tpu.dot_dimension_numbers<[1], [0], [0], [1], [0, 0, 1, 1], [], []>} : vector<2x32xbf16>, vector<32x128xbf16>, vector<2x128xf32> -> vector<2x128xf32>
    %297 = arith.addf %294, %296 : vector<2x128xf32>
    %c2_i32_79 = arith.constant 2 : i32
    %298 = arith.muli %291, %c2_i32_79 : i32
    %299 = arith.index_cast %298 : i32 to index
    %c0_80 = arith.constant 0 : index
    %300 = vector.load %arg21[%299, %c0_80] : memref<16x128xf32, #tpu.memory_space<vmem>>, vector<2x128xf32>
    %301 = arith.truncf %281 : vector<2x32xf32> to vector<2x32xbf16>
    %cst_81 = arith.constant dense<0.000000e+00> : vector<2x128xf32>
    %302 = tpu.matmul %301, %29, %cst_81 {dimension_numbers = #tpu.dot_dimension_numbers<[1], [0], [0], [1], [0, 0, 1, 1], [], []>} : vector<2x32xbf16>, vector<32x128xbf16>, vector<2x128xf32> -> vector<2x128xf32>
    %303 = arith.addf %300, %302 : vector<2x128xf32>
    %304 = arith.negf %297 : vector<2x128xf32>
    %305 = math.exp %304 : vector<2x128xf32>
    %cst_82 = arith.constant 1.000000e+00 : f32
    %306 = vector.broadcast %cst_82 : f32 to vector<2x128xf32>
    %307 = arith.addf %306, %305 : vector<2x128xf32>
    %308 = arith.divf %306, %307 : vector<2x128xf32>
    %309 = math.tanh %297 : vector<2x128xf32>
    %310 = vector.extract_strided_slice %308 {offsets = [0, 0], sizes = [2, 32], strides = [1, 1]} : vector<2x128xf32> to vector<2x32xf32>
    %311 = vector.extract_strided_slice %308 {offsets = [0, 32], sizes = [2, 32], strides = [1, 1]} : vector<2x128xf32> to vector<2x32xf32>
    %312 = vector.extract_strided_slice %309 {offsets = [0, 64], sizes = [2, 32], strides = [1, 1]} : vector<2x128xf32> to vector<2x32xf32>
    %313 = vector.extract_strided_slice %308 {offsets = [0, 96], sizes = [2, 32], strides = [1, 1]} : vector<2x128xf32> to vector<2x32xf32>
    %314 = arith.mulf %311, %261 : vector<2x32xf32>
    %315 = arith.mulf %310, %312 : vector<2x32xf32>
    %316 = arith.addf %314, %315 : vector<2x32xf32>
    %317 = math.tanh %316 : vector<2x32xf32>
    %318 = arith.mulf %313, %317 : vector<2x32xf32>
    %319 = vector.broadcast %c4_i32 : i32 to vector<2x1xi32>
    %320 = arith.cmpi slt, %319, %0 : vector<2x1xi32>
    %321 = vector.shape_cast %320 : vector<2x1xi1> to vector<2x1xi1>
    %322 = vector.broadcast %321 : vector<2x1xi1> to vector<2x32xi1>
    %323 = arith.select %322, %318, %258 : vector<2x32xi1>, vector<2x32xf32>
    %324 = vector.shape_cast %320 : vector<2x1xi1> to vector<2x1xi1>
    %325 = vector.broadcast %324 : vector<2x1xi1> to vector<2x32xi1>
    %326 = arith.select %325, %316, %261 : vector<2x32xi1>, vector<2x32xf32>
    %327 = arith.negf %303 : vector<2x128xf32>
    %328 = math.exp %327 : vector<2x128xf32>
    %cst_83 = arith.constant 1.000000e+00 : f32
    %329 = vector.broadcast %cst_83 : f32 to vector<2x128xf32>
    %330 = arith.addf %329, %328 : vector<2x128xf32>
    %331 = arith.divf %329, %330 : vector<2x128xf32>
    %332 = math.tanh %303 : vector<2x128xf32>
    %333 = vector.extract_strided_slice %331 {offsets = [0, 0], sizes = [2, 32], strides = [1, 1]} : vector<2x128xf32> to vector<2x32xf32>
    %334 = vector.extract_strided_slice %331 {offsets = [0, 32], sizes = [2, 32], strides = [1, 1]} : vector<2x128xf32> to vector<2x32xf32>
    %335 = vector.extract_strided_slice %332 {offsets = [0, 64], sizes = [2, 32], strides = [1, 1]} : vector<2x128xf32> to vector<2x32xf32>
    %336 = vector.extract_strided_slice %331 {offsets = [0, 96], sizes = [2, 32], strides = [1, 1]} : vector<2x128xf32> to vector<2x32xf32>
    %337 = arith.mulf %334, %284 : vector<2x32xf32>
    %338 = arith.mulf %333, %335 : vector<2x32xf32>
    %339 = arith.addf %337, %338 : vector<2x32xf32>
    %340 = math.tanh %339 : vector<2x32xf32>
    %341 = arith.mulf %336, %340 : vector<2x32xf32>
    %342 = vector.broadcast %291 : i32 to vector<2x1xi32>
    %343 = arith.cmpi slt, %342, %0 : vector<2x1xi32>
    %344 = vector.shape_cast %343 : vector<2x1xi1> to vector<2x1xi1>
    %345 = vector.broadcast %344 : vector<2x1xi1> to vector<2x32xi1>
    %346 = arith.select %345, %341, %281 : vector<2x32xi1>, vector<2x32xf32>
    %347 = vector.shape_cast %343 : vector<2x1xi1> to vector<2x1xi1>
    %348 = vector.broadcast %347 : vector<2x1xi1> to vector<2x32xi1>
    %349 = arith.select %348, %339, %284 : vector<2x32xi1>, vector<2x32xf32>
    %c2_i32_84 = arith.constant 2 : i32
    %350 = arith.muli %c4_i32, %c2_i32_84 : i32
    %351 = arith.index_cast %350 : i32 to index
    %c0_85 = arith.constant 0 : index
    %352 = vector.load %arg18[%351, %c0_85] : memref<16x32xf32, #tpu.memory_space<vmem>>, vector<2x32xf32>
    tpu.vector_store %arg18[%351, %c0_85], %318 {strides = array<i32>} : memref<16x32xf32, #tpu.memory_space<vmem>>, vector<2x32xf32>,
    %c2_i32_86 = arith.constant 2 : i32
    %353 = arith.muli %291, %c2_i32_86 : i32
    %354 = arith.index_cast %353 : i32 to index
    %c0_87 = arith.constant 0 : index
    %355 = vector.load %arg19[%354, %c0_87] : memref<16x32xf32, #tpu.memory_space<vmem>>, vector<2x32xf32>
    tpu.vector_store %arg19[%354, %c0_87], %341 {strides = array<i32>} : memref<16x32xf32, #tpu.memory_space<vmem>>, vector<2x32xf32>,
    %c5_i32 = arith.constant 5 : i32
    %c7_i32_88 = arith.constant 7 : i32
    %356 = arith.subi %c7_i32_88, %c5_i32 : i32
    %c2_i32_89 = arith.constant 2 : i32
    %357 = arith.muli %c5_i32, %c2_i32_89 : i32
    %358 = arith.index_cast %357 : i32 to index
    %c0_90 = arith.constant 0 : index
    %359 = vector.load %arg20[%358, %c0_90] : memref<16x128xf32, #tpu.memory_space<vmem>>, vector<2x128xf32>
    %360 = arith.truncf %323 : vector<2x32xf32> to vector<2x32xbf16>
    %cst_91 = arith.constant dense<0.000000e+00> : vector<2x128xf32>
    %361 = tpu.matmul %360, %27, %cst_91 {dimension_numbers = #tpu.dot_dimension_numbers<[1], [0], [0], [1], [0, 0, 1, 1], [], []>} : vector<2x32xbf16>, vector<32x128xbf16>, vector<2x128xf32> -> vector<2x128xf32>
    %362 = arith.addf %359, %361 : vector<2x128xf32>
    %c2_i32_92 = arith.constant 2 : i32
    %363 = arith.muli %356, %c2_i32_92 : i32
    %364 = arith.index_cast %363 : i32 to index
    %c0_93 = arith.constant 0 : index
    %365 = vector.load %arg21[%364, %c0_93] : memref<16x128xf32, #tpu.memory_space<vmem>>, vector<2x128xf32>
    %366 = arith.truncf %346 : vector<2x32xf32> to vector<2x32xbf16>
    %cst_94 = arith.constant dense<0.000000e+00> : vector<2x128xf32>
    %367 = tpu.matmul %366, %29, %cst_94 {dimension_numbers = #tpu.dot_dimension_numbers<[1], [0], [0], [1], [0, 0, 1, 1], [], []>} : vector<2x32xbf16>, vector<32x128xbf16>, vector<2x128xf32> -> vector<2x128xf32>
    %368 = arith.addf %365, %367 : vector<2x128xf32>
    %369 = arith.negf %362 : vector<2x128xf32>
    %370 = math.exp %369 : vector<2x128xf32>
    %cst_95 = arith.constant 1.000000e+00 : f32
    %371 = vector.broadcast %cst_95 : f32 to vector<2x128xf32>
    %372 = arith.addf %371, %370 : vector<2x128xf32>
    %373 = arith.divf %371, %372 : vector<2x128xf32>
    %374 = math.tanh %362 : vector<2x128xf32>
    %375 = vector.extract_strided_slice %373 {offsets = [0, 0], sizes = [2, 32], strides = [1, 1]} : vector<2x128xf32> to vector<2x32xf32>
    %376 = vector.extract_strided_slice %373 {offsets = [0, 32], sizes = [2, 32], strides = [1, 1]} : vector<2x128xf32> to vector<2x32xf32>
    %377 = vector.extract_strided_slice %374 {offsets = [0, 64], sizes = [2, 32], strides = [1, 1]} : vector<2x128xf32> to vector<2x32xf32>
    %378 = vector.extract_strided_slice %373 {offsets = [0, 96], sizes = [2, 32], strides = [1, 1]} : vector<2x128xf32> to vector<2x32xf32>
    %379 = arith.mulf %376, %326 : vector<2x32xf32>
    %380 = arith.mulf %375, %377 : vector<2x32xf32>
    %381 = arith.addf %379, %380 : vector<2x32xf32>
    %382 = math.tanh %381 : vector<2x32xf32>
    %383 = arith.mulf %378, %382 : vector<2x32xf32>
    %384 = vector.broadcast %c5_i32 : i32 to vector<2x1xi32>
    %385 = arith.cmpi slt, %384, %0 : vector<2x1xi32>
    %386 = vector.shape_cast %385 : vector<2x1xi1> to vector<2x1xi1>
    %387 = vector.broadcast %386 : vector<2x1xi1> to vector<2x32xi1>
    %388 = arith.select %387, %383, %323 : vector<2x32xi1>, vector<2x32xf32>
    %389 = vector.shape_cast %385 : vector<2x1xi1> to vector<2x1xi1>
    %390 = vector.broadcast %389 : vector<2x1xi1> to vector<2x32xi1>
    %391 = arith.select %390, %381, %326 : vector<2x32xi1>, vector<2x32xf32>
    %392 = arith.negf %368 : vector<2x128xf32>
    %393 = math.exp %392 : vector<2x128xf32>
    %cst_96 = arith.constant 1.000000e+00 : f32
    %394 = vector.broadcast %cst_96 : f32 to vector<2x128xf32>
    %395 = arith.addf %394, %393 : vector<2x128xf32>
    %396 = arith.divf %394, %395 : vector<2x128xf32>
    %397 = math.tanh %368 : vector<2x128xf32>
    %398 = vector.extract_strided_slice %396 {offsets = [0, 0], sizes = [2, 32], strides = [1, 1]} : vector<2x128xf32> to vector<2x32xf32>
    %399 = vector.extract_strided_slice %396 {offsets = [0, 32], sizes = [2, 32], strides = [1, 1]} : vector<2x128xf32> to vector<2x32xf32>
    %400 = vector.extract_strided_slice %397 {offsets = [0, 64], sizes = [2, 32], strides = [1, 1]} : vector<2x128xf32> to vector<2x32xf32>
    %401 = vector.extract_strided_slice %396 {offsets = [0, 96], sizes = [2, 32], strides = [1, 1]} : vector<2x128xf32> to vector<2x32xf32>
    %402 = arith.mulf %399, %349 : vector<2x32xf32>
    %403 = arith.mulf %398, %400 : vector<2x32xf32>
    %404 = arith.addf %402, %403 : vector<2x32xf32>
    %405 = math.tanh %404 : vector<2x32xf32>
    %406 = arith.mulf %401, %405 : vector<2x32xf32>
    %407 = vector.broadcast %356 : i32 to vector<2x1xi32>
    %408 = arith.cmpi slt, %407, %0 : vector<2x1xi32>
    %409 = vector.shape_cast %408 : vector<2x1xi1> to vector<2x1xi1>
    %410 = vector.broadcast %409 : vector<2x1xi1> to vector<2x32xi1>
    %411 = arith.select %410, %406, %346 : vector<2x32xi1>, vector<2x32xf32>
    %412 = vector.shape_cast %408 : vector<2x1xi1> to vector<2x1xi1>
    %413 = vector.broadcast %412 : vector<2x1xi1> to vector<2x32xi1>
    %414 = arith.select %413, %404, %349 : vector<2x32xi1>, vector<2x32xf32>
    %c2_i32_97 = arith.constant 2 : i32
    %415 = arith.muli %c5_i32, %c2_i32_97 : i32
    %416 = arith.index_cast %415 : i32 to index
    %c0_98 = arith.constant 0 : index
    %417 = vector.load %arg18[%416, %c0_98] : memref<16x32xf32, #tpu.memory_space<vmem>>, vector<2x32xf32>
    tpu.vector_store %arg18[%416, %c0_98], %383 {strides = array<i32>} : memref<16x32xf32, #tpu.memory_space<vmem>>, vector<2x32xf32>,
    %c2_i32_99 = arith.constant 2 : i32
    %418 = arith.muli %356, %c2_i32_99 : i32
    %419 = arith.index_cast %418 : i32 to index
    %c0_100 = arith.constant 0 : index
    %420 = vector.load %arg19[%419, %c0_100] : memref<16x32xf32, #tpu.memory_space<vmem>>, vector<2x32xf32>
    tpu.vector_store %arg19[%419, %c0_100], %406 {strides = array<i32>} : memref<16x32xf32, #tpu.memory_space<vmem>>, vector<2x32xf32>,
    %c6_i32 = arith.constant 6 : i32
    %c7_i32_101 = arith.constant 7 : i32
    %421 = arith.subi %c7_i32_101, %c6_i32 : i32
    %c2_i32_102 = arith.constant 2 : i32
    %422 = arith.muli %c6_i32, %c2_i32_102 : i32
    %423 = arith.index_cast %422 : i32 to index
    %c0_103 = arith.constant 0 : index
    %424 = vector.load %arg20[%423, %c0_103] : memref<16x128xf32, #tpu.memory_space<vmem>>, vector<2x128xf32>
    %425 = arith.truncf %388 : vector<2x32xf32> to vector<2x32xbf16>
    %cst_104 = arith.constant dense<0.000000e+00> : vector<2x128xf32>
    %426 = tpu.matmul %425, %27, %cst_104 {dimension_numbers = #tpu.dot_dimension_numbers<[1], [0], [0], [1], [0, 0, 1, 1], [], []>} : vector<2x32xbf16>, vector<32x128xbf16>, vector<2x128xf32> -> vector<2x128xf32>
    %427 = arith.addf %424, %426 : vector<2x128xf32>
    %c2_i32_105 = arith.constant 2 : i32
    %428 = arith.muli %421, %c2_i32_105 : i32
    %429 = arith.index_cast %428 : i32 to index
    %c0_106 = arith.constant 0 : index
    %430 = vector.load %arg21[%429, %c0_106] : memref<16x128xf32, #tpu.memory_space<vmem>>, vector<2x128xf32>
    %431 = arith.truncf %411 : vector<2x32xf32> to vector<2x32xbf16>
    %cst_107 = arith.constant dense<0.000000e+00> : vector<2x128xf32>
    %432 = tpu.matmul %431, %29, %cst_107 {dimension_numbers = #tpu.dot_dimension_numbers<[1], [0], [0], [1], [0, 0, 1, 1], [], []>} : vector<2x32xbf16>, vector<32x128xbf16>, vector<2x128xf32> -> vector<2x128xf32>
    %433 = arith.addf %430, %432 : vector<2x128xf32>
    %434 = arith.negf %427 : vector<2x128xf32>
    %435 = math.exp %434 : vector<2x128xf32>
    %cst_108 = arith.constant 1.000000e+00 : f32
    %436 = vector.broadcast %cst_108 : f32 to vector<2x128xf32>
    %437 = arith.addf %436, %435 : vector<2x128xf32>
    %438 = arith.divf %436, %437 : vector<2x128xf32>
    %439 = math.tanh %427 : vector<2x128xf32>
    %440 = vector.extract_strided_slice %438 {offsets = [0, 0], sizes = [2, 32], strides = [1, 1]} : vector<2x128xf32> to vector<2x32xf32>
    %441 = vector.extract_strided_slice %438 {offsets = [0, 32], sizes = [2, 32], strides = [1, 1]} : vector<2x128xf32> to vector<2x32xf32>
    %442 = vector.extract_strided_slice %439 {offsets = [0, 64], sizes = [2, 32], strides = [1, 1]} : vector<2x128xf32> to vector<2x32xf32>
    %443 = vector.extract_strided_slice %438 {offsets = [0, 96], sizes = [2, 32], strides = [1, 1]} : vector<2x128xf32> to vector<2x32xf32>
    %444 = arith.mulf %441, %391 : vector<2x32xf32>
    %445 = arith.mulf %440, %442 : vector<2x32xf32>
    %446 = arith.addf %444, %445 : vector<2x32xf32>
    %447 = math.tanh %446 : vector<2x32xf32>
    %448 = arith.mulf %443, %447 : vector<2x32xf32>
    %449 = vector.broadcast %c6_i32 : i32 to vector<2x1xi32>
    %450 = arith.cmpi slt, %449, %0 : vector<2x1xi32>
    %451 = vector.shape_cast %450 : vector<2x1xi1> to vector<2x1xi1>
    %452 = vector.broadcast %451 : vector<2x1xi1> to vector<2x32xi1>
    %453 = arith.select %452, %448, %388 : vector<2x32xi1>, vector<2x32xf32>
    %454 = vector.shape_cast %450 : vector<2x1xi1> to vector<2x1xi1>
    %455 = vector.broadcast %454 : vector<2x1xi1> to vector<2x32xi1>
    %456 = arith.select %455, %446, %391 : vector<2x32xi1>, vector<2x32xf32>
    %457 = arith.negf %433 : vector<2x128xf32>
    %458 = math.exp %457 : vector<2x128xf32>
    %cst_109 = arith.constant 1.000000e+00 : f32
    %459 = vector.broadcast %cst_109 : f32 to vector<2x128xf32>
    %460 = arith.addf %459, %458 : vector<2x128xf32>
    %461 = arith.divf %459, %460 : vector<2x128xf32>
    %462 = math.tanh %433 : vector<2x128xf32>
    %463 = vector.extract_strided_slice %461 {offsets = [0, 0], sizes = [2, 32], strides = [1, 1]} : vector<2x128xf32> to vector<2x32xf32>
    %464 = vector.extract_strided_slice %461 {offsets = [0, 32], sizes = [2, 32], strides = [1, 1]} : vector<2x128xf32> to vector<2x32xf32>
    %465 = vector.extract_strided_slice %462 {offsets = [0, 64], sizes = [2, 32], strides = [1, 1]} : vector<2x128xf32> to vector<2x32xf32>
    %466 = vector.extract_strided_slice %461 {offsets = [0, 96], sizes = [2, 32], strides = [1, 1]} : vector<2x128xf32> to vector<2x32xf32>
    %467 = arith.mulf %464, %414 : vector<2x32xf32>
    %468 = arith.mulf %463, %465 : vector<2x32xf32>
    %469 = arith.addf %467, %468 : vector<2x32xf32>
    %470 = math.tanh %469 : vector<2x32xf32>
    %471 = arith.mulf %466, %470 : vector<2x32xf32>
    %472 = vector.broadcast %421 : i32 to vector<2x1xi32>
    %473 = arith.cmpi slt, %472, %0 : vector<2x1xi32>
    %474 = vector.shape_cast %473 : vector<2x1xi1> to vector<2x1xi1>
    %475 = vector.broadcast %474 : vector<2x1xi1> to vector<2x32xi1>
    %476 = arith.select %475, %471, %411 : vector<2x32xi1>, vector<2x32xf32>
    %477 = vector.shape_cast %473 : vector<2x1xi1> to vector<2x1xi1>
    %478 = vector.broadcast %477 : vector<2x1xi1> to vector<2x32xi1>
    %479 = arith.select %478, %469, %414 : vector<2x32xi1>, vector<2x32xf32>
    %c2_i32_110 = arith.constant 2 : i32
    %480 = arith.muli %c6_i32, %c2_i32_110 : i32
    %481 = arith.index_cast %480 : i32 to index
    %c0_111 = arith.constant 0 : index
    %482 = vector.load %arg18[%481, %c0_111] : memref<16x32xf32, #tpu.memory_space<vmem>>, vector<2x32xf32>
    tpu.vector_store %arg18[%481, %c0_111], %448 {strides = array<i32>} : memref<16x32xf32, #tpu.memory_space<vmem>>, vector<2x32xf32>,
    %c2_i32_112 = arith.constant 2 : i32
    %483 = arith.muli %421, %c2_i32_112 : i32
    %484 = arith.index_cast %483 : i32 to index
    %c0_113 = arith.constant 0 : index
    %485 = vector.load %arg19[%484, %c0_113] : memref<16x32xf32, #tpu.memory_space<vmem>>, vector<2x32xf32>
    tpu.vector_store %arg19[%484, %c0_113], %471 {strides = array<i32>} : memref<16x32xf32, #tpu.memory_space<vmem>>, vector<2x32xf32>,
    %c7_i32_114 = arith.constant 7 : i32
    %c7_i32_115 = arith.constant 7 : i32
    %486 = arith.subi %c7_i32_115, %c7_i32_114 : i32
    %c2_i32_116 = arith.constant 2 : i32
    %487 = arith.muli %c7_i32_114, %c2_i32_116 : i32
    %488 = arith.index_cast %487 : i32 to index
    %c0_117 = arith.constant 0 : index
    %489 = vector.load %arg20[%488, %c0_117] : memref<16x128xf32, #tpu.memory_space<vmem>>, vector<2x128xf32>
    %490 = arith.truncf %453 : vector<2x32xf32> to vector<2x32xbf16>
    %cst_118 = arith.constant dense<0.000000e+00> : vector<2x128xf32>
    %491 = tpu.matmul %490, %27, %cst_118 {dimension_numbers = #tpu.dot_dimension_numbers<[1], [0], [0], [1], [0, 0, 1, 1], [], []>} : vector<2x32xbf16>, vector<32x128xbf16>, vector<2x128xf32> -> vector<2x128xf32>
    %492 = arith.addf %489, %491 : vector<2x128xf32>
    %c2_i32_119 = arith.constant 2 : i32
    %493 = arith.muli %486, %c2_i32_119 : i32
    %494 = arith.index_cast %493 : i32 to index
    %c0_120 = arith.constant 0 : index
    %495 = vector.load %arg21[%494, %c0_120] : memref<16x128xf32, #tpu.memory_space<vmem>>, vector<2x128xf32>
    %496 = arith.truncf %476 : vector<2x32xf32> to vector<2x32xbf16>
    %cst_121 = arith.constant dense<0.000000e+00> : vector<2x128xf32>
    %497 = tpu.matmul %496, %29, %cst_121 {dimension_numbers = #tpu.dot_dimension_numbers<[1], [0], [0], [1], [0, 0, 1, 1], [], []>} : vector<2x32xbf16>, vector<32x128xbf16>, vector<2x128xf32> -> vector<2x128xf32>
    %498 = arith.addf %495, %497 : vector<2x128xf32>
    %499 = arith.negf %492 : vector<2x128xf32>
    %500 = math.exp %499 : vector<2x128xf32>
    %cst_122 = arith.constant 1.000000e+00 : f32
    %501 = vector.broadcast %cst_122 : f32 to vector<2x128xf32>
    %502 = arith.addf %501, %500 : vector<2x128xf32>
    %503 = arith.divf %501, %502 : vector<2x128xf32>
    %504 = math.tanh %492 : vector<2x128xf32>
    %505 = vector.extract_strided_slice %503 {offsets = [0, 0], sizes = [2, 32], strides = [1, 1]} : vector<2x128xf32> to vector<2x32xf32>
    %506 = vector.extract_strided_slice %503 {offsets = [0, 32], sizes = [2, 32], strides = [1, 1]} : vector<2x128xf32> to vector<2x32xf32>
    %507 = vector.extract_strided_slice %504 {offsets = [0, 64], sizes = [2, 32], strides = [1, 1]} : vector<2x128xf32> to vector<2x32xf32>
    %508 = vector.extract_strided_slice %503 {offsets = [0, 96], sizes = [2, 32], strides = [1, 1]} : vector<2x128xf32> to vector<2x32xf32>
    %509 = arith.mulf %506, %456 : vector<2x32xf32>
    %510 = arith.mulf %505, %507 : vector<2x32xf32>
    %511 = arith.addf %509, %510 : vector<2x32xf32>
    %512 = math.tanh %511 : vector<2x32xf32>
    %513 = arith.mulf %508, %512 : vector<2x32xf32>
    %514 = vector.broadcast %c7_i32_114 : i32 to vector<2x1xi32>
    %515 = arith.cmpi slt, %514, %0 : vector<2x1xi32>
    %516 = vector.shape_cast %515 : vector<2x1xi1> to vector<2x1xi1>
    %517 = vector.broadcast %516 : vector<2x1xi1> to vector<2x32xi1>
    %518 = arith.select %517, %513, %453 : vector<2x32xi1>, vector<2x32xf32>
    %519 = vector.shape_cast %515 : vector<2x1xi1> to vector<2x1xi1>
    %520 = vector.broadcast %519 : vector<2x1xi1> to vector<2x32xi1>
    %521 = arith.select %520, %511, %456 : vector<2x32xi1>, vector<2x32xf32>
    %522 = arith.negf %498 : vector<2x128xf32>
    %523 = math.exp %522 : vector<2x128xf32>
    %cst_123 = arith.constant 1.000000e+00 : f32
    %524 = vector.broadcast %cst_123 : f32 to vector<2x128xf32>
    %525 = arith.addf %524, %523 : vector<2x128xf32>
    %526 = arith.divf %524, %525 : vector<2x128xf32>
    %527 = math.tanh %498 : vector<2x128xf32>
    %528 = vector.extract_strided_slice %526 {offsets = [0, 0], sizes = [2, 32], strides = [1, 1]} : vector<2x128xf32> to vector<2x32xf32>
    %529 = vector.extract_strided_slice %526 {offsets = [0, 32], sizes = [2, 32], strides = [1, 1]} : vector<2x128xf32> to vector<2x32xf32>
    %530 = vector.extract_strided_slice %527 {offsets = [0, 64], sizes = [2, 32], strides = [1, 1]} : vector<2x128xf32> to vector<2x32xf32>
    %531 = vector.extract_strided_slice %526 {offsets = [0, 96], sizes = [2, 32], strides = [1, 1]} : vector<2x128xf32> to vector<2x32xf32>
    %532 = arith.mulf %529, %479 : vector<2x32xf32>
    %533 = arith.mulf %528, %530 : vector<2x32xf32>
    %534 = arith.addf %532, %533 : vector<2x32xf32>
    %535 = math.tanh %534 : vector<2x32xf32>
    %536 = arith.mulf %531, %535 : vector<2x32xf32>
    %537 = vector.broadcast %486 : i32 to vector<2x1xi32>
    %538 = arith.cmpi slt, %537, %0 : vector<2x1xi32>
    %539 = vector.shape_cast %538 : vector<2x1xi1> to vector<2x1xi1>
    %540 = vector.broadcast %539 : vector<2x1xi1> to vector<2x32xi1>
    %541 = arith.select %540, %536, %476 : vector<2x32xi1>, vector<2x32xf32>
    %542 = vector.shape_cast %538 : vector<2x1xi1> to vector<2x1xi1>
    %543 = vector.broadcast %542 : vector<2x1xi1> to vector<2x32xi1>
    %544 = arith.select %543, %534, %479 : vector<2x32xi1>, vector<2x32xf32>
    %c2_i32_124 = arith.constant 2 : i32
    %545 = arith.muli %c7_i32_114, %c2_i32_124 : i32
    %546 = arith.index_cast %545 : i32 to index
    %c0_125 = arith.constant 0 : index
    %547 = vector.load %arg18[%546, %c0_125] : memref<16x32xf32, #tpu.memory_space<vmem>>, vector<2x32xf32>
    tpu.vector_store %arg18[%546, %c0_125], %513 {strides = array<i32>} : memref<16x32xf32, #tpu.memory_space<vmem>>, vector<2x32xf32>,
    %c2_i32_126 = arith.constant 2 : i32
    %548 = arith.muli %486, %c2_i32_126 : i32
    %549 = arith.index_cast %548 : i32 to index
    %c0_127 = arith.constant 0 : index
    %550 = vector.load %arg19[%549, %c0_127] : memref<16x32xf32, #tpu.memory_space<vmem>>, vector<2x32xf32>
    tpu.vector_store %arg19[%549, %c0_127], %536 {strides = array<i32>} : memref<16x32xf32, #tpu.memory_space<vmem>>, vector<2x32xf32>,
    %c8_i32 = arith.constant 8 : i32
    %c0_128 = arith.constant 0 : index
    %c0_129 = arith.constant 0 : index
    %551 = vector.load %arg18[%c0_128, %c0_129] : memref<16x32xf32, #tpu.memory_space<vmem>>, vector<16x32xf32>
    %c0_130 = arith.constant 0 : index
    %c0_131 = arith.constant 0 : index
    %552 = vector.load %arg19[%c0_130, %c0_131] : memref<16x32xf32, #tpu.memory_space<vmem>>, vector<16x32xf32>
    %553 = tpu.concatenate %551, %552 in 1 : vector<16x32xf32>, vector<16x32xf32> -> vector<16x64xf32>
    %554 = arith.truncf %553 : vector<16x64xf32> to vector<16x64xbf16>
    %c0_132 = arith.constant 0 : index
    %c0_133 = arith.constant 0 : index
    %555 = vector.load %arg11[%c0_132, %c0_133] : memref<64x128xf32, #tpu.memory_space<vmem>>, vector<64x128xf32>
    %556 = arith.truncf %555 : vector<64x128xf32> to vector<64x128xbf16>
    %cst_134 = arith.constant dense<0.000000e+00> : vector<16x128xf32>
    %557 = tpu.matmul %554, %556, %cst_134 {dimension_numbers = #tpu.dot_dimension_numbers<[1], [0], [0], [1], [0, 0, 1, 1], [], []>} : vector<16x64xbf16>, vector<64x128xbf16>, vector<16x128xf32> -> vector<16x128xf32>
    %c0_135 = arith.constant 0 : index
    %c0_136 = arith.constant 0 : index
    %558 = vector.load %arg13[%c0_135, %c0_136] : memref<1x128xf32, #tpu.memory_space<vmem>>, vector<1x128xf32>
    %559 = vector.broadcast %558 : vector<1x128xf32> to vector<16x128xf32>
    %560 = arith.addf %557, %559 : vector<16x128xf32>
    %c0_137 = arith.constant 0 : index
    %c0_138 = arith.constant 0 : index
    %561 = vector.load %arg20[%c0_137, %c0_138] : memref<16x128xf32, #tpu.memory_space<vmem>>, vector<16x128xf32>
    tpu.vector_store %arg20[%c0_137, %c0_138], %560 {strides = array<i32>} : memref<16x128xf32, #tpu.memory_space<vmem>>, vector<16x128xf32>,
    %c0_139 = arith.constant 0 : index
    %c0_140 = arith.constant 0 : index
    %562 = vector.load %arg14[%c0_139, %c0_140] : memref<64x128xf32, #tpu.memory_space<vmem>>, vector<64x128xf32>
    %563 = arith.truncf %562 : vector<64x128xf32> to vector<64x128xbf16>
    %cst_141 = arith.constant dense<0.000000e+00> : vector<16x128xf32>
    %564 = tpu.matmul %554, %563, %cst_141 {dimension_numbers = #tpu.dot_dimension_numbers<[1], [0], [0], [1], [0, 0, 1, 1], [], []>} : vector<16x64xbf16>, vector<64x128xbf16>, vector<16x128xf32> -> vector<16x128xf32>
    %c0_142 = arith.constant 0 : index
    %c0_143 = arith.constant 0 : index
    %565 = vector.load %arg16[%c0_142, %c0_143] : memref<1x128xf32, #tpu.memory_space<vmem>>, vector<1x128xf32>
    %566 = vector.broadcast %565 : vector<1x128xf32> to vector<16x128xf32>
    %567 = arith.addf %564, %566 : vector<16x128xf32>
    %c0_144 = arith.constant 0 : index
    %c0_145 = arith.constant 0 : index
    %568 = vector.load %arg21[%c0_144, %c0_145] : memref<16x128xf32, #tpu.memory_space<vmem>>, vector<16x128xf32>
    tpu.vector_store %arg21[%c0_144, %c0_145], %567 {strides = array<i32>} : memref<16x128xf32, #tpu.memory_space<vmem>>, vector<16x128xf32>,
    %c0_146 = arith.constant 0 : index
    %c0_147 = arith.constant 0 : index
    %569 = vector.load %arg12[%c0_146, %c0_147] : memref<32x128xf32, #tpu.memory_space<vmem>>, vector<32x128xf32>
    %570 = arith.truncf %569 : vector<32x128xf32> to vector<32x128xbf16>
    %c0_148 = arith.constant 0 : index
    %c0_149 = arith.constant 0 : index
    %571 = vector.load %arg15[%c0_148, %c0_149] : memref<32x128xf32, #tpu.memory_space<vmem>>, vector<32x128xf32>
    %572 = arith.truncf %571 : vector<32x128xf32> to vector<32x128xbf16>
    %cst_150 = arith.constant 0.000000e+00 : f32
    %573 = vector.broadcast %cst_150 : f32 to vector<2x32xf32>
    %c0_i32_151 = arith.constant 0 : i32
    %c7_i32_152 = arith.constant 7 : i32
    %574 = arith.subi %c7_i32_152, %c0_i32_151 : i32
    %c2_i32_153 = arith.constant 2 : i32
    %575 = arith.muli %c0_i32_151, %c2_i32_153 : i32
    %576 = arith.index_cast %575 : i32 to index
    %c0_154 = arith.constant 0 : index
    %577 = vector.load %arg20[%576, %c0_154] : memref<16x128xf32, #tpu.memory_space<vmem>>, vector<2x128xf32>
    %578 = arith.truncf %573 : vector<2x32xf32> to vector<2x32xbf16>
    %cst_155 = arith.constant dense<0.000000e+00> : vector<2x128xf32>
    %579 = tpu.matmul %578, %570, %cst_155 {dimension_numbers = #tpu.dot_dimension_numbers<[1], [0], [0], [1], [0, 0, 1, 1], [], []>} : vector<2x32xbf16>, vector<32x128xbf16>, vector<2x128xf32> -> vector<2x128xf32>
    %580 = arith.addf %577, %579 : vector<2x128xf32>
    %c2_i32_156 = arith.constant 2 : i32
    %581 = arith.muli %574, %c2_i32_156 : i32
    %582 = arith.index_cast %581 : i32 to index
    %c0_157 = arith.constant 0 : index
    %583 = vector.load %arg21[%582, %c0_157] : memref<16x128xf32, #tpu.memory_space<vmem>>, vector<2x128xf32>
    %584 = arith.truncf %573 : vector<2x32xf32> to vector<2x32xbf16>
    %cst_158 = arith.constant dense<0.000000e+00> : vector<2x128xf32>
    %585 = tpu.matmul %584, %572, %cst_158 {dimension_numbers = #tpu.dot_dimension_numbers<[1], [0], [0], [1], [0, 0, 1, 1], [], []>} : vector<2x32xbf16>, vector<32x128xbf16>, vector<2x128xf32> -> vector<2x128xf32>
    %586 = arith.addf %583, %585 : vector<2x128xf32>
    %587 = arith.negf %580 : vector<2x128xf32>
    %588 = math.exp %587 : vector<2x128xf32>
    %cst_159 = arith.constant 1.000000e+00 : f32
    %589 = vector.broadcast %cst_159 : f32 to vector<2x128xf32>
    %590 = arith.addf %589, %588 : vector<2x128xf32>
    %591 = arith.divf %589, %590 : vector<2x128xf32>
    %592 = math.tanh %580 : vector<2x128xf32>
    %593 = vector.extract_strided_slice %591 {offsets = [0, 0], sizes = [2, 32], strides = [1, 1]} : vector<2x128xf32> to vector<2x32xf32>
    %594 = vector.extract_strided_slice %591 {offsets = [0, 32], sizes = [2, 32], strides = [1, 1]} : vector<2x128xf32> to vector<2x32xf32>
    %595 = vector.extract_strided_slice %592 {offsets = [0, 64], sizes = [2, 32], strides = [1, 1]} : vector<2x128xf32> to vector<2x32xf32>
    %596 = vector.extract_strided_slice %591 {offsets = [0, 96], sizes = [2, 32], strides = [1, 1]} : vector<2x128xf32> to vector<2x32xf32>
    %597 = arith.mulf %594, %573 : vector<2x32xf32>
    %598 = arith.mulf %593, %595 : vector<2x32xf32>
    %599 = arith.addf %597, %598 : vector<2x32xf32>
    %600 = math.tanh %599 : vector<2x32xf32>
    %601 = arith.mulf %596, %600 : vector<2x32xf32>
    %602 = vector.broadcast %c0_i32_151 : i32 to vector<2x1xi32>
    %603 = arith.cmpi slt, %602, %0 : vector<2x1xi32>
    %604 = vector.shape_cast %603 : vector<2x1xi1> to vector<2x1xi1>
    %605 = vector.broadcast %604 : vector<2x1xi1> to vector<2x32xi1>
    %606 = arith.select %605, %601, %573 : vector<2x32xi1>, vector<2x32xf32>
    %607 = vector.shape_cast %603 : vector<2x1xi1> to vector<2x1xi1>
    %608 = vector.broadcast %607 : vector<2x1xi1> to vector<2x32xi1>
    %609 = arith.select %608, %599, %573 : vector<2x32xi1>, vector<2x32xf32>
    %610 = arith.negf %586 : vector<2x128xf32>
    %611 = math.exp %610 : vector<2x128xf32>
    %cst_160 = arith.constant 1.000000e+00 : f32
    %612 = vector.broadcast %cst_160 : f32 to vector<2x128xf32>
    %613 = arith.addf %612, %611 : vector<2x128xf32>
    %614 = arith.divf %612, %613 : vector<2x128xf32>
    %615 = math.tanh %586 : vector<2x128xf32>
    %616 = vector.extract_strided_slice %614 {offsets = [0, 0], sizes = [2, 32], strides = [1, 1]} : vector<2x128xf32> to vector<2x32xf32>
    %617 = vector.extract_strided_slice %614 {offsets = [0, 32], sizes = [2, 32], strides = [1, 1]} : vector<2x128xf32> to vector<2x32xf32>
    %618 = vector.extract_strided_slice %615 {offsets = [0, 64], sizes = [2, 32], strides = [1, 1]} : vector<2x128xf32> to vector<2x32xf32>
    %619 = vector.extract_strided_slice %614 {offsets = [0, 96], sizes = [2, 32], strides = [1, 1]} : vector<2x128xf32> to vector<2x32xf32>
    %620 = arith.mulf %617, %573 : vector<2x32xf32>
    %621 = arith.mulf %616, %618 : vector<2x32xf32>
    %622 = arith.addf %620, %621 : vector<2x32xf32>
    %623 = math.tanh %622 : vector<2x32xf32>
    %624 = arith.mulf %619, %623 : vector<2x32xf32>
    %625 = vector.broadcast %574 : i32 to vector<2x1xi32>
    %626 = arith.cmpi slt, %625, %0 : vector<2x1xi32>
    %627 = vector.shape_cast %626 : vector<2x1xi1> to vector<2x1xi1>
    %628 = vector.broadcast %627 : vector<2x1xi1> to vector<2x32xi1>
    %629 = arith.select %628, %624, %573 : vector<2x32xi1>, vector<2x32xf32>
    %630 = vector.shape_cast %626 : vector<2x1xi1> to vector<2x1xi1>
    %631 = vector.broadcast %630 : vector<2x1xi1> to vector<2x32xi1>
    %632 = arith.select %631, %622, %573 : vector<2x32xi1>, vector<2x32xf32>
    %c1_i32_161 = arith.constant 1 : i32
    %c7_i32_162 = arith.constant 7 : i32
    %633 = arith.subi %c7_i32_162, %c1_i32_161 : i32
    %c2_i32_163 = arith.constant 2 : i32
    %634 = arith.muli %c1_i32_161, %c2_i32_163 : i32
    %635 = arith.index_cast %634 : i32 to index
    %c0_164 = arith.constant 0 : index
    %636 = vector.load %arg20[%635, %c0_164] : memref<16x128xf32, #tpu.memory_space<vmem>>, vector<2x128xf32>
    %637 = arith.truncf %606 : vector<2x32xf32> to vector<2x32xbf16>
    %cst_165 = arith.constant dense<0.000000e+00> : vector<2x128xf32>
    %638 = tpu.matmul %637, %570, %cst_165 {dimension_numbers = #tpu.dot_dimension_numbers<[1], [0], [0], [1], [0, 0, 1, 1], [], []>} : vector<2x32xbf16>, vector<32x128xbf16>, vector<2x128xf32> -> vector<2x128xf32>
    %639 = arith.addf %636, %638 : vector<2x128xf32>
    %c2_i32_166 = arith.constant 2 : i32
    %640 = arith.muli %633, %c2_i32_166 : i32
    %641 = arith.index_cast %640 : i32 to index
    %c0_167 = arith.constant 0 : index
    %642 = vector.load %arg21[%641, %c0_167] : memref<16x128xf32, #tpu.memory_space<vmem>>, vector<2x128xf32>
    %643 = arith.truncf %629 : vector<2x32xf32> to vector<2x32xbf16>
    %cst_168 = arith.constant dense<0.000000e+00> : vector<2x128xf32>
    %644 = tpu.matmul %643, %572, %cst_168 {dimension_numbers = #tpu.dot_dimension_numbers<[1], [0], [0], [1], [0, 0, 1, 1], [], []>} : vector<2x32xbf16>, vector<32x128xbf16>, vector<2x128xf32> -> vector<2x128xf32>
    %645 = arith.addf %642, %644 : vector<2x128xf32>
    %646 = arith.negf %639 : vector<2x128xf32>
    %647 = math.exp %646 : vector<2x128xf32>
    %cst_169 = arith.constant 1.000000e+00 : f32
    %648 = vector.broadcast %cst_169 : f32 to vector<2x128xf32>
    %649 = arith.addf %648, %647 : vector<2x128xf32>
    %650 = arith.divf %648, %649 : vector<2x128xf32>
    %651 = math.tanh %639 : vector<2x128xf32>
    %652 = vector.extract_strided_slice %650 {offsets = [0, 0], sizes = [2, 32], strides = [1, 1]} : vector<2x128xf32> to vector<2x32xf32>
    %653 = vector.extract_strided_slice %650 {offsets = [0, 32], sizes = [2, 32], strides = [1, 1]} : vector<2x128xf32> to vector<2x32xf32>
    %654 = vector.extract_strided_slice %651 {offsets = [0, 64], sizes = [2, 32], strides = [1, 1]} : vector<2x128xf32> to vector<2x32xf32>
    %655 = vector.extract_strided_slice %650 {offsets = [0, 96], sizes = [2, 32], strides = [1, 1]} : vector<2x128xf32> to vector<2x32xf32>
    %656 = arith.mulf %653, %609 : vector<2x32xf32>
    %657 = arith.mulf %652, %654 : vector<2x32xf32>
    %658 = arith.addf %656, %657 : vector<2x32xf32>
    %659 = math.tanh %658 : vector<2x32xf32>
    %660 = arith.mulf %655, %659 : vector<2x32xf32>
    %661 = vector.broadcast %c1_i32_161 : i32 to vector<2x1xi32>
    %662 = arith.cmpi slt, %661, %0 : vector<2x1xi32>
    %663 = vector.shape_cast %662 : vector<2x1xi1> to vector<2x1xi1>
    %664 = vector.broadcast %663 : vector<2x1xi1> to vector<2x32xi1>
    %665 = arith.select %664, %660, %606 : vector<2x32xi1>, vector<2x32xf32>
    %666 = vector.shape_cast %662 : vector<2x1xi1> to vector<2x1xi1>
    %667 = vector.broadcast %666 : vector<2x1xi1> to vector<2x32xi1>
    %668 = arith.select %667, %658, %609 : vector<2x32xi1>, vector<2x32xf32>
    %669 = arith.negf %645 : vector<2x128xf32>
    %670 = math.exp %669 : vector<2x128xf32>
    %cst_170 = arith.constant 1.000000e+00 : f32
    %671 = vector.broadcast %cst_170 : f32 to vector<2x128xf32>
    %672 = arith.addf %671, %670 : vector<2x128xf32>
    %673 = arith.divf %671, %672 : vector<2x128xf32>
    %674 = math.tanh %645 : vector<2x128xf32>
    %675 = vector.extract_strided_slice %673 {offsets = [0, 0], sizes = [2, 32], strides = [1, 1]} : vector<2x128xf32> to vector<2x32xf32>
    %676 = vector.extract_strided_slice %673 {offsets = [0, 32], sizes = [2, 32], strides = [1, 1]} : vector<2x128xf32> to vector<2x32xf32>
    %677 = vector.extract_strided_slice %674 {offsets = [0, 64], sizes = [2, 32], strides = [1, 1]} : vector<2x128xf32> to vector<2x32xf32>
    %678 = vector.extract_strided_slice %673 {offsets = [0, 96], sizes = [2, 32], strides = [1, 1]} : vector<2x128xf32> to vector<2x32xf32>
    %679 = arith.mulf %676, %632 : vector<2x32xf32>
    %680 = arith.mulf %675, %677 : vector<2x32xf32>
    %681 = arith.addf %679, %680 : vector<2x32xf32>
    %682 = math.tanh %681 : vector<2x32xf32>
    %683 = arith.mulf %678, %682 : vector<2x32xf32>
    %684 = vector.broadcast %633 : i32 to vector<2x1xi32>
    %685 = arith.cmpi slt, %684, %0 : vector<2x1xi32>
    %686 = vector.shape_cast %685 : vector<2x1xi1> to vector<2x1xi1>
    %687 = vector.broadcast %686 : vector<2x1xi1> to vector<2x32xi1>
    %688 = arith.select %687, %683, %629 : vector<2x32xi1>, vector<2x32xf32>
    %689 = vector.shape_cast %685 : vector<2x1xi1> to vector<2x1xi1>
    %690 = vector.broadcast %689 : vector<2x1xi1> to vector<2x32xi1>
    %691 = arith.select %690, %681, %632 : vector<2x32xi1>, vector<2x32xf32>
    %c2_i32_171 = arith.constant 2 : i32
    %c7_i32_172 = arith.constant 7 : i32
    %692 = arith.subi %c7_i32_172, %c2_i32_171 : i32
    %c2_i32_173 = arith.constant 2 : i32
    %693 = arith.muli %c2_i32_171, %c2_i32_173 : i32
    %694 = arith.index_cast %693 : i32 to index
    %c0_174 = arith.constant 0 : index
    %695 = vector.load %arg20[%694, %c0_174] : memref<16x128xf32, #tpu.memory_space<vmem>>, vector<2x128xf32>
    %696 = arith.truncf %665 : vector<2x32xf32> to vector<2x32xbf16>
    %cst_175 = arith.constant dense<0.000000e+00> : vector<2x128xf32>
    %697 = tpu.matmul %696, %570, %cst_175 {dimension_numbers = #tpu.dot_dimension_numbers<[1], [0], [0], [1], [0, 0, 1, 1], [], []>} : vector<2x32xbf16>, vector<32x128xbf16>, vector<2x128xf32> -> vector<2x128xf32>
    %698 = arith.addf %695, %697 : vector<2x128xf32>
    %c2_i32_176 = arith.constant 2 : i32
    %699 = arith.muli %692, %c2_i32_176 : i32
    %700 = arith.index_cast %699 : i32 to index
    %c0_177 = arith.constant 0 : index
    %701 = vector.load %arg21[%700, %c0_177] : memref<16x128xf32, #tpu.memory_space<vmem>>, vector<2x128xf32>
    %702 = arith.truncf %688 : vector<2x32xf32> to vector<2x32xbf16>
    %cst_178 = arith.constant dense<0.000000e+00> : vector<2x128xf32>
    %703 = tpu.matmul %702, %572, %cst_178 {dimension_numbers = #tpu.dot_dimension_numbers<[1], [0], [0], [1], [0, 0, 1, 1], [], []>} : vector<2x32xbf16>, vector<32x128xbf16>, vector<2x128xf32> -> vector<2x128xf32>
    %704 = arith.addf %701, %703 : vector<2x128xf32>
    %705 = arith.negf %698 : vector<2x128xf32>
    %706 = math.exp %705 : vector<2x128xf32>
    %cst_179 = arith.constant 1.000000e+00 : f32
    %707 = vector.broadcast %cst_179 : f32 to vector<2x128xf32>
    %708 = arith.addf %707, %706 : vector<2x128xf32>
    %709 = arith.divf %707, %708 : vector<2x128xf32>
    %710 = math.tanh %698 : vector<2x128xf32>
    %711 = vector.extract_strided_slice %709 {offsets = [0, 0], sizes = [2, 32], strides = [1, 1]} : vector<2x128xf32> to vector<2x32xf32>
    %712 = vector.extract_strided_slice %709 {offsets = [0, 32], sizes = [2, 32], strides = [1, 1]} : vector<2x128xf32> to vector<2x32xf32>
    %713 = vector.extract_strided_slice %710 {offsets = [0, 64], sizes = [2, 32], strides = [1, 1]} : vector<2x128xf32> to vector<2x32xf32>
    %714 = vector.extract_strided_slice %709 {offsets = [0, 96], sizes = [2, 32], strides = [1, 1]} : vector<2x128xf32> to vector<2x32xf32>
    %715 = arith.mulf %712, %668 : vector<2x32xf32>
    %716 = arith.mulf %711, %713 : vector<2x32xf32>
    %717 = arith.addf %715, %716 : vector<2x32xf32>
    %718 = math.tanh %717 : vector<2x32xf32>
    %719 = arith.mulf %714, %718 : vector<2x32xf32>
    %720 = vector.broadcast %c2_i32_171 : i32 to vector<2x1xi32>
    %721 = arith.cmpi slt, %720, %0 : vector<2x1xi32>
    %722 = vector.shape_cast %721 : vector<2x1xi1> to vector<2x1xi1>
    %723 = vector.broadcast %722 : vector<2x1xi1> to vector<2x32xi1>
    %724 = arith.select %723, %719, %665 : vector<2x32xi1>, vector<2x32xf32>
    %725 = vector.shape_cast %721 : vector<2x1xi1> to vector<2x1xi1>
    %726 = vector.broadcast %725 : vector<2x1xi1> to vector<2x32xi1>
    %727 = arith.select %726, %717, %668 : vector<2x32xi1>, vector<2x32xf32>
    %728 = arith.negf %704 : vector<2x128xf32>
    %729 = math.exp %728 : vector<2x128xf32>
    %cst_180 = arith.constant 1.000000e+00 : f32
    %730 = vector.broadcast %cst_180 : f32 to vector<2x128xf32>
    %731 = arith.addf %730, %729 : vector<2x128xf32>
    %732 = arith.divf %730, %731 : vector<2x128xf32>
    %733 = math.tanh %704 : vector<2x128xf32>
    %734 = vector.extract_strided_slice %732 {offsets = [0, 0], sizes = [2, 32], strides = [1, 1]} : vector<2x128xf32> to vector<2x32xf32>
    %735 = vector.extract_strided_slice %732 {offsets = [0, 32], sizes = [2, 32], strides = [1, 1]} : vector<2x128xf32> to vector<2x32xf32>
    %736 = vector.extract_strided_slice %733 {offsets = [0, 64], sizes = [2, 32], strides = [1, 1]} : vector<2x128xf32> to vector<2x32xf32>
    %737 = vector.extract_strided_slice %732 {offsets = [0, 96], sizes = [2, 32], strides = [1, 1]} : vector<2x128xf32> to vector<2x32xf32>
    %738 = arith.mulf %735, %691 : vector<2x32xf32>
    %739 = arith.mulf %734, %736 : vector<2x32xf32>
    %740 = arith.addf %738, %739 : vector<2x32xf32>
    %741 = math.tanh %740 : vector<2x32xf32>
    %742 = arith.mulf %737, %741 : vector<2x32xf32>
    %743 = vector.broadcast %692 : i32 to vector<2x1xi32>
    %744 = arith.cmpi slt, %743, %0 : vector<2x1xi32>
    %745 = vector.shape_cast %744 : vector<2x1xi1> to vector<2x1xi1>
    %746 = vector.broadcast %745 : vector<2x1xi1> to vector<2x32xi1>
    %747 = arith.select %746, %742, %688 : vector<2x32xi1>, vector<2x32xf32>
    %748 = vector.shape_cast %744 : vector<2x1xi1> to vector<2x1xi1>
    %749 = vector.broadcast %748 : vector<2x1xi1> to vector<2x32xi1>
    %750 = arith.select %749, %740, %691 : vector<2x32xi1>, vector<2x32xf32>
    %c3_i32_181 = arith.constant 3 : i32
    %c7_i32_182 = arith.constant 7 : i32
    %751 = arith.subi %c7_i32_182, %c3_i32_181 : i32
    %c2_i32_183 = arith.constant 2 : i32
    %752 = arith.muli %c3_i32_181, %c2_i32_183 : i32
    %753 = arith.index_cast %752 : i32 to index
    %c0_184 = arith.constant 0 : index
    %754 = vector.load %arg20[%753, %c0_184] : memref<16x128xf32, #tpu.memory_space<vmem>>, vector<2x128xf32>
    %755 = arith.truncf %724 : vector<2x32xf32> to vector<2x32xbf16>
    %cst_185 = arith.constant dense<0.000000e+00> : vector<2x128xf32>
    %756 = tpu.matmul %755, %570, %cst_185 {dimension_numbers = #tpu.dot_dimension_numbers<[1], [0], [0], [1], [0, 0, 1, 1], [], []>} : vector<2x32xbf16>, vector<32x128xbf16>, vector<2x128xf32> -> vector<2x128xf32>
    %757 = arith.addf %754, %756 : vector<2x128xf32>
    %c2_i32_186 = arith.constant 2 : i32
    %758 = arith.muli %751, %c2_i32_186 : i32
    %759 = arith.index_cast %758 : i32 to index
    %c0_187 = arith.constant 0 : index
    %760 = vector.load %arg21[%759, %c0_187] : memref<16x128xf32, #tpu.memory_space<vmem>>, vector<2x128xf32>
    %761 = arith.truncf %747 : vector<2x32xf32> to vector<2x32xbf16>
    %cst_188 = arith.constant dense<0.000000e+00> : vector<2x128xf32>
    %762 = tpu.matmul %761, %572, %cst_188 {dimension_numbers = #tpu.dot_dimension_numbers<[1], [0], [0], [1], [0, 0, 1, 1], [], []>} : vector<2x32xbf16>, vector<32x128xbf16>, vector<2x128xf32> -> vector<2x128xf32>
    %763 = arith.addf %760, %762 : vector<2x128xf32>
    %764 = arith.negf %757 : vector<2x128xf32>
    %765 = math.exp %764 : vector<2x128xf32>
    %cst_189 = arith.constant 1.000000e+00 : f32
    %766 = vector.broadcast %cst_189 : f32 to vector<2x128xf32>
    %767 = arith.addf %766, %765 : vector<2x128xf32>
    %768 = arith.divf %766, %767 : vector<2x128xf32>
    %769 = math.tanh %757 : vector<2x128xf32>
    %770 = vector.extract_strided_slice %768 {offsets = [0, 0], sizes = [2, 32], strides = [1, 1]} : vector<2x128xf32> to vector<2x32xf32>
    %771 = vector.extract_strided_slice %768 {offsets = [0, 32], sizes = [2, 32], strides = [1, 1]} : vector<2x128xf32> to vector<2x32xf32>
    %772 = vector.extract_strided_slice %769 {offsets = [0, 64], sizes = [2, 32], strides = [1, 1]} : vector<2x128xf32> to vector<2x32xf32>
    %773 = vector.extract_strided_slice %768 {offsets = [0, 96], sizes = [2, 32], strides = [1, 1]} : vector<2x128xf32> to vector<2x32xf32>
    %774 = arith.mulf %771, %727 : vector<2x32xf32>
    %775 = arith.mulf %770, %772 : vector<2x32xf32>
    %776 = arith.addf %774, %775 : vector<2x32xf32>
    %777 = math.tanh %776 : vector<2x32xf32>
    %778 = arith.mulf %773, %777 : vector<2x32xf32>
    %779 = vector.broadcast %c3_i32_181 : i32 to vector<2x1xi32>
    %780 = arith.cmpi slt, %779, %0 : vector<2x1xi32>
    %781 = vector.shape_cast %780 : vector<2x1xi1> to vector<2x1xi1>
    %782 = vector.broadcast %781 : vector<2x1xi1> to vector<2x32xi1>
    %783 = arith.select %782, %778, %724 : vector<2x32xi1>, vector<2x32xf32>
    %784 = vector.shape_cast %780 : vector<2x1xi1> to vector<2x1xi1>
    %785 = vector.broadcast %784 : vector<2x1xi1> to vector<2x32xi1>
    %786 = arith.select %785, %776, %727 : vector<2x32xi1>, vector<2x32xf32>
    %787 = arith.negf %763 : vector<2x128xf32>
    %788 = math.exp %787 : vector<2x128xf32>
    %cst_190 = arith.constant 1.000000e+00 : f32
    %789 = vector.broadcast %cst_190 : f32 to vector<2x128xf32>
    %790 = arith.addf %789, %788 : vector<2x128xf32>
    %791 = arith.divf %789, %790 : vector<2x128xf32>
    %792 = math.tanh %763 : vector<2x128xf32>
    %793 = vector.extract_strided_slice %791 {offsets = [0, 0], sizes = [2, 32], strides = [1, 1]} : vector<2x128xf32> to vector<2x32xf32>
    %794 = vector.extract_strided_slice %791 {offsets = [0, 32], sizes = [2, 32], strides = [1, 1]} : vector<2x128xf32> to vector<2x32xf32>
    %795 = vector.extract_strided_slice %792 {offsets = [0, 64], sizes = [2, 32], strides = [1, 1]} : vector<2x128xf32> to vector<2x32xf32>
    %796 = vector.extract_strided_slice %791 {offsets = [0, 96], sizes = [2, 32], strides = [1, 1]} : vector<2x128xf32> to vector<2x32xf32>
    %797 = arith.mulf %794, %750 : vector<2x32xf32>
    %798 = arith.mulf %793, %795 : vector<2x32xf32>
    %799 = arith.addf %797, %798 : vector<2x32xf32>
    %800 = math.tanh %799 : vector<2x32xf32>
    %801 = arith.mulf %796, %800 : vector<2x32xf32>
    %802 = vector.broadcast %751 : i32 to vector<2x1xi32>
    %803 = arith.cmpi slt, %802, %0 : vector<2x1xi32>
    %804 = vector.shape_cast %803 : vector<2x1xi1> to vector<2x1xi1>
    %805 = vector.broadcast %804 : vector<2x1xi1> to vector<2x32xi1>
    %806 = arith.select %805, %801, %747 : vector<2x32xi1>, vector<2x32xf32>
    %807 = vector.shape_cast %803 : vector<2x1xi1> to vector<2x1xi1>
    %808 = vector.broadcast %807 : vector<2x1xi1> to vector<2x32xi1>
    %809 = arith.select %808, %799, %750 : vector<2x32xi1>, vector<2x32xf32>
    %c4_i32_191 = arith.constant 4 : i32
    %c7_i32_192 = arith.constant 7 : i32
    %810 = arith.subi %c7_i32_192, %c4_i32_191 : i32
    %c2_i32_193 = arith.constant 2 : i32
    %811 = arith.muli %c4_i32_191, %c2_i32_193 : i32
    %812 = arith.index_cast %811 : i32 to index
    %c0_194 = arith.constant 0 : index
    %813 = vector.load %arg20[%812, %c0_194] : memref<16x128xf32, #tpu.memory_space<vmem>>, vector<2x128xf32>
    %814 = arith.truncf %783 : vector<2x32xf32> to vector<2x32xbf16>
    %cst_195 = arith.constant dense<0.000000e+00> : vector<2x128xf32>
    %815 = tpu.matmul %814, %570, %cst_195 {dimension_numbers = #tpu.dot_dimension_numbers<[1], [0], [0], [1], [0, 0, 1, 1], [], []>} : vector<2x32xbf16>, vector<32x128xbf16>, vector<2x128xf32> -> vector<2x128xf32>
    %816 = arith.addf %813, %815 : vector<2x128xf32>
    %c2_i32_196 = arith.constant 2 : i32
    %817 = arith.muli %810, %c2_i32_196 : i32
    %818 = arith.index_cast %817 : i32 to index
    %c0_197 = arith.constant 0 : index
    %819 = vector.load %arg21[%818, %c0_197] : memref<16x128xf32, #tpu.memory_space<vmem>>, vector<2x128xf32>
    %820 = arith.truncf %806 : vector<2x32xf32> to vector<2x32xbf16>
    %cst_198 = arith.constant dense<0.000000e+00> : vector<2x128xf32>
    %821 = tpu.matmul %820, %572, %cst_198 {dimension_numbers = #tpu.dot_dimension_numbers<[1], [0], [0], [1], [0, 0, 1, 1], [], []>} : vector<2x32xbf16>, vector<32x128xbf16>, vector<2x128xf32> -> vector<2x128xf32>
    %822 = arith.addf %819, %821 : vector<2x128xf32>
    %823 = arith.negf %816 : vector<2x128xf32>
    %824 = math.exp %823 : vector<2x128xf32>
    %cst_199 = arith.constant 1.000000e+00 : f32
    %825 = vector.broadcast %cst_199 : f32 to vector<2x128xf32>
    %826 = arith.addf %825, %824 : vector<2x128xf32>
    %827 = arith.divf %825, %826 : vector<2x128xf32>
    %828 = math.tanh %816 : vector<2x128xf32>
    %829 = vector.extract_strided_slice %827 {offsets = [0, 0], sizes = [2, 32], strides = [1, 1]} : vector<2x128xf32> to vector<2x32xf32>
    %830 = vector.extract_strided_slice %827 {offsets = [0, 32], sizes = [2, 32], strides = [1, 1]} : vector<2x128xf32> to vector<2x32xf32>
    %831 = vector.extract_strided_slice %828 {offsets = [0, 64], sizes = [2, 32], strides = [1, 1]} : vector<2x128xf32> to vector<2x32xf32>
    %832 = vector.extract_strided_slice %827 {offsets = [0, 96], sizes = [2, 32], strides = [1, 1]} : vector<2x128xf32> to vector<2x32xf32>
    %833 = arith.mulf %830, %786 : vector<2x32xf32>
    %834 = arith.mulf %829, %831 : vector<2x32xf32>
    %835 = arith.addf %833, %834 : vector<2x32xf32>
    %836 = math.tanh %835 : vector<2x32xf32>
    %837 = arith.mulf %832, %836 : vector<2x32xf32>
    %838 = vector.broadcast %c4_i32_191 : i32 to vector<2x1xi32>
    %839 = arith.cmpi slt, %838, %0 : vector<2x1xi32>
    %840 = vector.shape_cast %839 : vector<2x1xi1> to vector<2x1xi1>
    %841 = vector.broadcast %840 : vector<2x1xi1> to vector<2x32xi1>
    %842 = arith.select %841, %837, %783 : vector<2x32xi1>, vector<2x32xf32>
    %843 = vector.shape_cast %839 : vector<2x1xi1> to vector<2x1xi1>
    %844 = vector.broadcast %843 : vector<2x1xi1> to vector<2x32xi1>
    %845 = arith.select %844, %835, %786 : vector<2x32xi1>, vector<2x32xf32>
    %846 = arith.negf %822 : vector<2x128xf32>
    %847 = math.exp %846 : vector<2x128xf32>
    %cst_200 = arith.constant 1.000000e+00 : f32
    %848 = vector.broadcast %cst_200 : f32 to vector<2x128xf32>
    %849 = arith.addf %848, %847 : vector<2x128xf32>
    %850 = arith.divf %848, %849 : vector<2x128xf32>
    %851 = math.tanh %822 : vector<2x128xf32>
    %852 = vector.extract_strided_slice %850 {offsets = [0, 0], sizes = [2, 32], strides = [1, 1]} : vector<2x128xf32> to vector<2x32xf32>
    %853 = vector.extract_strided_slice %850 {offsets = [0, 32], sizes = [2, 32], strides = [1, 1]} : vector<2x128xf32> to vector<2x32xf32>
    %854 = vector.extract_strided_slice %851 {offsets = [0, 64], sizes = [2, 32], strides = [1, 1]} : vector<2x128xf32> to vector<2x32xf32>
    %855 = vector.extract_strided_slice %850 {offsets = [0, 96], sizes = [2, 32], strides = [1, 1]} : vector<2x128xf32> to vector<2x32xf32>
    %856 = arith.mulf %853, %809 : vector<2x32xf32>
    %857 = arith.mulf %852, %854 : vector<2x32xf32>
    %858 = arith.addf %856, %857 : vector<2x32xf32>
    %859 = math.tanh %858 : vector<2x32xf32>
    %860 = arith.mulf %855, %859 : vector<2x32xf32>
    %861 = vector.broadcast %810 : i32 to vector<2x1xi32>
    %862 = arith.cmpi slt, %861, %0 : vector<2x1xi32>
    %863 = vector.shape_cast %862 : vector<2x1xi1> to vector<2x1xi1>
    %864 = vector.broadcast %863 : vector<2x1xi1> to vector<2x32xi1>
    %865 = arith.select %864, %860, %806 : vector<2x32xi1>, vector<2x32xf32>
    %866 = vector.shape_cast %862 : vector<2x1xi1> to vector<2x1xi1>
    %867 = vector.broadcast %866 : vector<2x1xi1> to vector<2x32xi1>
    %868 = arith.select %867, %858, %809 : vector<2x32xi1>, vector<2x32xf32>
    %c5_i32_201 = arith.constant 5 : i32
    %c7_i32_202 = arith.constant 7 : i32
    %869 = arith.subi %c7_i32_202, %c5_i32_201 : i32
    %c2_i32_203 = arith.constant 2 : i32
    %870 = arith.muli %c5_i32_201, %c2_i32_203 : i32
    %871 = arith.index_cast %870 : i32 to index
    %c0_204 = arith.constant 0 : index
    %872 = vector.load %arg20[%871, %c0_204] : memref<16x128xf32, #tpu.memory_space<vmem>>, vector<2x128xf32>
    %873 = arith.truncf %842 : vector<2x32xf32> to vector<2x32xbf16>
    %cst_205 = arith.constant dense<0.000000e+00> : vector<2x128xf32>
    %874 = tpu.matmul %873, %570, %cst_205 {dimension_numbers = #tpu.dot_dimension_numbers<[1], [0], [0], [1], [0, 0, 1, 1], [], []>} : vector<2x32xbf16>, vector<32x128xbf16>, vector<2x128xf32> -> vector<2x128xf32>
    %875 = arith.addf %872, %874 : vector<2x128xf32>
    %c2_i32_206 = arith.constant 2 : i32
    %876 = arith.muli %869, %c2_i32_206 : i32
    %877 = arith.index_cast %876 : i32 to index
    %c0_207 = arith.constant 0 : index
    %878 = vector.load %arg21[%877, %c0_207] : memref<16x128xf32, #tpu.memory_space<vmem>>, vector<2x128xf32>
    %879 = arith.truncf %865 : vector<2x32xf32> to vector<2x32xbf16>
    %cst_208 = arith.constant dense<0.000000e+00> : vector<2x128xf32>
    %880 = tpu.matmul %879, %572, %cst_208 {dimension_numbers = #tpu.dot_dimension_numbers<[1], [0], [0], [1], [0, 0, 1, 1], [], []>} : vector<2x32xbf16>, vector<32x128xbf16>, vector<2x128xf32> -> vector<2x128xf32>
    %881 = arith.addf %878, %880 : vector<2x128xf32>
    %882 = arith.negf %875 : vector<2x128xf32>
    %883 = math.exp %882 : vector<2x128xf32>
    %cst_209 = arith.constant 1.000000e+00 : f32
    %884 = vector.broadcast %cst_209 : f32 to vector<2x128xf32>
    %885 = arith.addf %884, %883 : vector<2x128xf32>
    %886 = arith.divf %884, %885 : vector<2x128xf32>
    %887 = math.tanh %875 : vector<2x128xf32>
    %888 = vector.extract_strided_slice %886 {offsets = [0, 0], sizes = [2, 32], strides = [1, 1]} : vector<2x128xf32> to vector<2x32xf32>
    %889 = vector.extract_strided_slice %886 {offsets = [0, 32], sizes = [2, 32], strides = [1, 1]} : vector<2x128xf32> to vector<2x32xf32>
    %890 = vector.extract_strided_slice %887 {offsets = [0, 64], sizes = [2, 32], strides = [1, 1]} : vector<2x128xf32> to vector<2x32xf32>
    %891 = vector.extract_strided_slice %886 {offsets = [0, 96], sizes = [2, 32], strides = [1, 1]} : vector<2x128xf32> to vector<2x32xf32>
    %892 = arith.mulf %889, %845 : vector<2x32xf32>
    %893 = arith.mulf %888, %890 : vector<2x32xf32>
    %894 = arith.addf %892, %893 : vector<2x32xf32>
    %895 = math.tanh %894 : vector<2x32xf32>
    %896 = arith.mulf %891, %895 : vector<2x32xf32>
    %897 = vector.broadcast %c5_i32_201 : i32 to vector<2x1xi32>
    %898 = arith.cmpi slt, %897, %0 : vector<2x1xi32>
    %899 = vector.shape_cast %898 : vector<2x1xi1> to vector<2x1xi1>
    %900 = vector.broadcast %899 : vector<2x1xi1> to vector<2x32xi1>
    %901 = arith.select %900, %896, %842 : vector<2x32xi1>, vector<2x32xf32>
    %902 = vector.shape_cast %898 : vector<2x1xi1> to vector<2x1xi1>
    %903 = vector.broadcast %902 : vector<2x1xi1> to vector<2x32xi1>
    %904 = arith.select %903, %894, %845 : vector<2x32xi1>, vector<2x32xf32>
    %905 = arith.negf %881 : vector<2x128xf32>
    %906 = math.exp %905 : vector<2x128xf32>
    %cst_210 = arith.constant 1.000000e+00 : f32
    %907 = vector.broadcast %cst_210 : f32 to vector<2x128xf32>
    %908 = arith.addf %907, %906 : vector<2x128xf32>
    %909 = arith.divf %907, %908 : vector<2x128xf32>
    %910 = math.tanh %881 : vector<2x128xf32>
    %911 = vector.extract_strided_slice %909 {offsets = [0, 0], sizes = [2, 32], strides = [1, 1]} : vector<2x128xf32> to vector<2x32xf32>
    %912 = vector.extract_strided_slice %909 {offsets = [0, 32], sizes = [2, 32], strides = [1, 1]} : vector<2x128xf32> to vector<2x32xf32>
    %913 = vector.extract_strided_slice %910 {offsets = [0, 64], sizes = [2, 32], strides = [1, 1]} : vector<2x128xf32> to vector<2x32xf32>
    %914 = vector.extract_strided_slice %909 {offsets = [0, 96], sizes = [2, 32], strides = [1, 1]} : vector<2x128xf32> to vector<2x32xf32>
    %915 = arith.mulf %912, %868 : vector<2x32xf32>
    %916 = arith.mulf %911, %913 : vector<2x32xf32>
    %917 = arith.addf %915, %916 : vector<2x32xf32>
    %918 = math.tanh %917 : vector<2x32xf32>
    %919 = arith.mulf %914, %918 : vector<2x32xf32>
    %920 = vector.broadcast %869 : i32 to vector<2x1xi32>
    %921 = arith.cmpi slt, %920, %0 : vector<2x1xi32>
    %922 = vector.shape_cast %921 : vector<2x1xi1> to vector<2x1xi1>
    %923 = vector.broadcast %922 : vector<2x1xi1> to vector<2x32xi1>
    %924 = arith.select %923, %919, %865 : vector<2x32xi1>, vector<2x32xf32>
    %925 = vector.shape_cast %921 : vector<2x1xi1> to vector<2x1xi1>
    %926 = vector.broadcast %925 : vector<2x1xi1> to vector<2x32xi1>
    %927 = arith.select %926, %917, %868 : vector<2x32xi1>, vector<2x32xf32>
    %c6_i32_211 = arith.constant 6 : i32
    %c7_i32_212 = arith.constant 7 : i32
    %928 = arith.subi %c7_i32_212, %c6_i32_211 : i32
    %c2_i32_213 = arith.constant 2 : i32
    %929 = arith.muli %c6_i32_211, %c2_i32_213 : i32
    %930 = arith.index_cast %929 : i32 to index
    %c0_214 = arith.constant 0 : index
    %931 = vector.load %arg20[%930, %c0_214] : memref<16x128xf32, #tpu.memory_space<vmem>>, vector<2x128xf32>
    %932 = arith.truncf %901 : vector<2x32xf32> to vector<2x32xbf16>
    %cst_215 = arith.constant dense<0.000000e+00> : vector<2x128xf32>
    %933 = tpu.matmul %932, %570, %cst_215 {dimension_numbers = #tpu.dot_dimension_numbers<[1], [0], [0], [1], [0, 0, 1, 1], [], []>} : vector<2x32xbf16>, vector<32x128xbf16>, vector<2x128xf32> -> vector<2x128xf32>
    %934 = arith.addf %931, %933 : vector<2x128xf32>
    %c2_i32_216 = arith.constant 2 : i32
    %935 = arith.muli %928, %c2_i32_216 : i32
    %936 = arith.index_cast %935 : i32 to index
    %c0_217 = arith.constant 0 : index
    %937 = vector.load %arg21[%936, %c0_217] : memref<16x128xf32, #tpu.memory_space<vmem>>, vector<2x128xf32>
    %938 = arith.truncf %924 : vector<2x32xf32> to vector<2x32xbf16>
    %cst_218 = arith.constant dense<0.000000e+00> : vector<2x128xf32>
    %939 = tpu.matmul %938, %572, %cst_218 {dimension_numbers = #tpu.dot_dimension_numbers<[1], [0], [0], [1], [0, 0, 1, 1], [], []>} : vector<2x32xbf16>, vector<32x128xbf16>, vector<2x128xf32> -> vector<2x128xf32>
    %940 = arith.addf %937, %939 : vector<2x128xf32>
    %941 = arith.negf %934 : vector<2x128xf32>
    %942 = math.exp %941 : vector<2x128xf32>
    %cst_219 = arith.constant 1.000000e+00 : f32
    %943 = vector.broadcast %cst_219 : f32 to vector<2x128xf32>
    %944 = arith.addf %943, %942 : vector<2x128xf32>
    %945 = arith.divf %943, %944 : vector<2x128xf32>
    %946 = math.tanh %934 : vector<2x128xf32>
    %947 = vector.extract_strided_slice %945 {offsets = [0, 0], sizes = [2, 32], strides = [1, 1]} : vector<2x128xf32> to vector<2x32xf32>
    %948 = vector.extract_strided_slice %945 {offsets = [0, 32], sizes = [2, 32], strides = [1, 1]} : vector<2x128xf32> to vector<2x32xf32>
    %949 = vector.extract_strided_slice %946 {offsets = [0, 64], sizes = [2, 32], strides = [1, 1]} : vector<2x128xf32> to vector<2x32xf32>
    %950 = vector.extract_strided_slice %945 {offsets = [0, 96], sizes = [2, 32], strides = [1, 1]} : vector<2x128xf32> to vector<2x32xf32>
    %951 = arith.mulf %948, %904 : vector<2x32xf32>
    %952 = arith.mulf %947, %949 : vector<2x32xf32>
    %953 = arith.addf %951, %952 : vector<2x32xf32>
    %954 = math.tanh %953 : vector<2x32xf32>
    %955 = arith.mulf %950, %954 : vector<2x32xf32>
    %956 = vector.broadcast %c6_i32_211 : i32 to vector<2x1xi32>
    %957 = arith.cmpi slt, %956, %0 : vector<2x1xi32>
    %958 = vector.shape_cast %957 : vector<2x1xi1> to vector<2x1xi1>
    %959 = vector.broadcast %958 : vector<2x1xi1> to vector<2x32xi1>
    %960 = arith.select %959, %955, %901 : vector<2x32xi1>, vector<2x32xf32>
    %961 = vector.shape_cast %957 : vector<2x1xi1> to vector<2x1xi1>
    %962 = vector.broadcast %961 : vector<2x1xi1> to vector<2x32xi1>
    %963 = arith.select %962, %953, %904 : vector<2x32xi1>, vector<2x32xf32>
    %964 = arith.negf %940 : vector<2x128xf32>
    %965 = math.exp %964 : vector<2x128xf32>
    %cst_220 = arith.constant 1.000000e+00 : f32
    %966 = vector.broadcast %cst_220 : f32 to vector<2x128xf32>
    %967 = arith.addf %966, %965 : vector<2x128xf32>
    %968 = arith.divf %966, %967 : vector<2x128xf32>
    %969 = math.tanh %940 : vector<2x128xf32>
    %970 = vector.extract_strided_slice %968 {offsets = [0, 0], sizes = [2, 32], strides = [1, 1]} : vector<2x128xf32> to vector<2x32xf32>
    %971 = vector.extract_strided_slice %968 {offsets = [0, 32], sizes = [2, 32], strides = [1, 1]} : vector<2x128xf32> to vector<2x32xf32>
    %972 = vector.extract_strided_slice %969 {offsets = [0, 64], sizes = [2, 32], strides = [1, 1]} : vector<2x128xf32> to vector<2x32xf32>
    %973 = vector.extract_strided_slice %968 {offsets = [0, 96], sizes = [2, 32], strides = [1, 1]} : vector<2x128xf32> to vector<2x32xf32>
    %974 = arith.mulf %971, %927 : vector<2x32xf32>
    %975 = arith.mulf %970, %972 : vector<2x32xf32>
    %976 = arith.addf %974, %975 : vector<2x32xf32>
    %977 = math.tanh %976 : vector<2x32xf32>
    %978 = arith.mulf %973, %977 : vector<2x32xf32>
    %979 = vector.broadcast %928 : i32 to vector<2x1xi32>
    %980 = arith.cmpi slt, %979, %0 : vector<2x1xi32>
    %981 = vector.shape_cast %980 : vector<2x1xi1> to vector<2x1xi1>
    %982 = vector.broadcast %981 : vector<2x1xi1> to vector<2x32xi1>
    %983 = arith.select %982, %978, %924 : vector<2x32xi1>, vector<2x32xf32>
    %984 = vector.shape_cast %980 : vector<2x1xi1> to vector<2x1xi1>
    %985 = vector.broadcast %984 : vector<2x1xi1> to vector<2x32xi1>
    %986 = arith.select %985, %976, %927 : vector<2x32xi1>, vector<2x32xf32>
    %c7_i32_221 = arith.constant 7 : i32
    %c7_i32_222 = arith.constant 7 : i32
    %987 = arith.subi %c7_i32_222, %c7_i32_221 : i32
    %c2_i32_223 = arith.constant 2 : i32
    %988 = arith.muli %c7_i32_221, %c2_i32_223 : i32
    %989 = arith.index_cast %988 : i32 to index
    %c0_224 = arith.constant 0 : index
    %990 = vector.load %arg20[%989, %c0_224] : memref<16x128xf32, #tpu.memory_space<vmem>>, vector<2x128xf32>
    %991 = arith.truncf %960 : vector<2x32xf32> to vector<2x32xbf16>
    %cst_225 = arith.constant dense<0.000000e+00> : vector<2x128xf32>
    %992 = tpu.matmul %991, %570, %cst_225 {dimension_numbers = #tpu.dot_dimension_numbers<[1], [0], [0], [1], [0, 0, 1, 1], [], []>} : vector<2x32xbf16>, vector<32x128xbf16>, vector<2x128xf32> -> vector<2x128xf32>
    %993 = arith.addf %990, %992 : vector<2x128xf32>
    %c2_i32_226 = arith.constant 2 : i32
    %994 = arith.muli %987, %c2_i32_226 : i32
    %995 = arith.index_cast %994 : i32 to index
    %c0_227 = arith.constant 0 : index
    %996 = vector.load %arg21[%995, %c0_227] : memref<16x128xf32, #tpu.memory_space<vmem>>, vector<2x128xf32>
    %997 = arith.truncf %983 : vector<2x32xf32> to vector<2x32xbf16>
    %cst_228 = arith.constant dense<0.000000e+00> : vector<2x128xf32>
    %998 = tpu.matmul %997, %572, %cst_228 {dimension_numbers = #tpu.dot_dimension_numbers<[1], [0], [0], [1], [0, 0, 1, 1], [], []>} : vector<2x32xbf16>, vector<32x128xbf16>, vector<2x128xf32> -> vector<2x128xf32>
    %999 = arith.addf %996, %998 : vector<2x128xf32>
    %1000 = arith.negf %993 : vector<2x128xf32>
    %1001 = math.exp %1000 : vector<2x128xf32>
    %cst_229 = arith.constant 1.000000e+00 : f32
    %1002 = vector.broadcast %cst_229 : f32 to vector<2x128xf32>
    %1003 = arith.addf %1002, %1001 : vector<2x128xf32>
    %1004 = arith.divf %1002, %1003 : vector<2x128xf32>
    %1005 = math.tanh %993 : vector<2x128xf32>
    %1006 = vector.extract_strided_slice %1004 {offsets = [0, 0], sizes = [2, 32], strides = [1, 1]} : vector<2x128xf32> to vector<2x32xf32>
    %1007 = vector.extract_strided_slice %1004 {offsets = [0, 32], sizes = [2, 32], strides = [1, 1]} : vector<2x128xf32> to vector<2x32xf32>
    %1008 = vector.extract_strided_slice %1005 {offsets = [0, 64], sizes = [2, 32], strides = [1, 1]} : vector<2x128xf32> to vector<2x32xf32>
    %1009 = vector.extract_strided_slice %1004 {offsets = [0, 96], sizes = [2, 32], strides = [1, 1]} : vector<2x128xf32> to vector<2x32xf32>
    %1010 = arith.mulf %1007, %963 : vector<2x32xf32>
    %1011 = arith.mulf %1006, %1008 : vector<2x32xf32>
    %1012 = arith.addf %1010, %1011 : vector<2x32xf32>
    %1013 = math.tanh %1012 : vector<2x32xf32>
    %1014 = arith.mulf %1009, %1013 : vector<2x32xf32>
    %1015 = vector.broadcast %c7_i32_221 : i32 to vector<2x1xi32>
    %1016 = arith.cmpi slt, %1015, %0 : vector<2x1xi32>
    %1017 = vector.shape_cast %1016 : vector<2x1xi1> to vector<2x1xi1>
    %1018 = vector.broadcast %1017 : vector<2x1xi1> to vector<2x32xi1>
    %1019 = arith.select %1018, %1014, %960 : vector<2x32xi1>, vector<2x32xf32>
    %1020 = vector.shape_cast %1016 : vector<2x1xi1> to vector<2x1xi1>
    %1021 = vector.broadcast %1020 : vector<2x1xi1> to vector<2x32xi1>
    %1022 = arith.select %1021, %1012, %963 : vector<2x32xi1>, vector<2x32xf32>
    %1023 = arith.negf %999 : vector<2x128xf32>
    %1024 = math.exp %1023 : vector<2x128xf32>
    %cst_230 = arith.constant 1.000000e+00 : f32
    %1025 = vector.broadcast %cst_230 : f32 to vector<2x128xf32>
    %1026 = arith.addf %1025, %1024 : vector<2x128xf32>
    %1027 = arith.divf %1025, %1026 : vector<2x128xf32>
    %1028 = math.tanh %999 : vector<2x128xf32>
    %1029 = vector.extract_strided_slice %1027 {offsets = [0, 0], sizes = [2, 32], strides = [1, 1]} : vector<2x128xf32> to vector<2x32xf32>
    %1030 = vector.extract_strided_slice %1027 {offsets = [0, 32], sizes = [2, 32], strides = [1, 1]} : vector<2x128xf32> to vector<2x32xf32>
    %1031 = vector.extract_strided_slice %1028 {offsets = [0, 64], sizes = [2, 32], strides = [1, 1]} : vector<2x128xf32> to vector<2x32xf32>
    %1032 = vector.extract_strided_slice %1027 {offsets = [0, 96], sizes = [2, 32], strides = [1, 1]} : vector<2x128xf32> to vector<2x32xf32>
    %1033 = arith.mulf %1030, %986 : vector<2x32xf32>
    %1034 = arith.mulf %1029, %1031 : vector<2x32xf32>
    %1035 = arith.addf %1033, %1034 : vector<2x32xf32>
    %1036 = math.tanh %1035 : vector<2x32xf32>
    %1037 = arith.mulf %1032, %1036 : vector<2x32xf32>
    %1038 = vector.broadcast %987 : i32 to vector<2x1xi32>
    %1039 = arith.cmpi slt, %1038, %0 : vector<2x1xi32>
    %1040 = vector.shape_cast %1039 : vector<2x1xi1> to vector<2x1xi1>
    %1041 = vector.broadcast %1040 : vector<2x1xi1> to vector<2x32xi1>
    %1042 = arith.select %1041, %1037, %983 : vector<2x32xi1>, vector<2x32xf32>
    %1043 = vector.shape_cast %1039 : vector<2x1xi1> to vector<2x1xi1>
    %1044 = vector.broadcast %1043 : vector<2x1xi1> to vector<2x32xi1>
    %1045 = arith.select %1044, %1035, %986 : vector<2x32xi1>, vector<2x32xf32>
    %c8_i32_231 = arith.constant 8 : i32
    %1046 = tpu.concatenate %1019, %1042 in 1 : vector<2x32xf32>, vector<2x32xf32> -> vector<2x64xf32>
    %c0_232 = arith.constant 0 : index
    %c0_233 = arith.constant 0 : index
    %1047 = vector.load %arg3[%c0_232, %c0_233] : memref<64x4xf32, #tpu.memory_space<vmem>>, vector<64x4xf32>
    %cst_234 = arith.constant dense<0.000000e+00> : vector<2x4xf32>
    %1048 = tpu.matmul %1046, %1047, %cst_234 {dimension_numbers = #tpu.dot_dimension_numbers<[1], [0], [0], [1], [0, 0, 1, 1], [], []>} : vector<2x64xf32>, vector<64x4xf32>, vector<2x4xf32> -> vector<2x4xf32>
    %c0_235 = arith.constant 0 : index
    %c0_236 = arith.constant 0 : index
    %1049 = vector.load %arg4[%c0_235, %c0_236] : memref<1x4xf32, #tpu.memory_space<vmem>>, vector<1x4xf32>
    %1050 = vector.broadcast %1049 : vector<1x4xf32> to vector<2x4xf32>
    %1051 = arith.addf %1048, %1050 : vector<2x4xf32>
    %c0_237 = arith.constant 0 : index
    %c0_238 = arith.constant 0 : index
    %1052 = vector.load %arg17[%c0_237, %c0_238] : memref<2x4xf32, #tpu.memory_space<vmem>>, vector<2x4xf32>
    tpu.vector_store %arg17[%c0_237, %c0_238], %1051 {strides = array<i32>} : memref<2x4xf32, #tpu.memory_space<vmem>>, vector<2x4xf32>,
    return
  }
}

</mosaic_0001>

<llo_original>
// kernel: tpu_custom_call.1
$region0: #{tpu_custom_call.1}
  #allocation0 [shape = 'u32[]', space=smem, size = 0x4, offset = 0x4, fixed_abs, tag = 'smem constant byte address 0x4 - core index']
  #allocation1 [shape = 'u32[144,128]{1,0:T(1,128)}', space=vmem, size = 0x12000, scoped, tag = 'internal scratch']
  #allocation2 [shape = 'f32[16,32]{1,0:T(8,128)}', space=vmem, size = 0x2000, scoped, tag = 'scratch operand']
  #allocation3 [shape = 'f32[16,32]{1,0:T(8,128)}', space=vmem, size = 0x2000, scoped, tag = 'scratch operand']
  #allocation4 [shape = 'f32[16,128]{1,0:T(8,128)}', space=vmem, size = 0x2000, scoped, tag = 'scratch operand']
  #allocation5 [shape = 'f32[16,128]{1,0:T(8,128)}', space=vmem, size = 0x2000, scoped, tag = 'scratch operand']
  %s0 = inlined_call_operand.hbm [shape: s32[16,1], index: 0, kind: input, shape index: {}]
  %s1 = inlined_call_operand.hbm [shape: s32[2,1], index: 1, kind: input, shape index: {}]
  %s2 = inlined_call_operand.hbm [shape: f32[128,64], index: 2, kind: input, shape index: {}]
  %s3 = inlined_call_operand.hbm [shape: f32[64,4], index: 3, kind: input, shape index: {}]
  %s4 = inlined_call_operand.hbm [shape: f32[1,4], index: 4, kind: input, shape index: {}]
  %s5 = inlined_call_operand.hbm [shape: f32[64,128], index: 5, kind: input, shape index: {}]
  %s6 = inlined_call_operand.hbm [shape: f32[32,128], index: 6, kind: input, shape index: {}]
  %s7 = inlined_call_operand.hbm [shape: f32[1,128], index: 7, kind: input, shape index: {}]
  %s8 = inlined_call_operand.hbm [shape: f32[64,128], index: 8, kind: input, shape index: {}]
  %s9 = inlined_call_operand.hbm [shape: f32[32,128], index: 9, kind: input, shape index: {}]
  %s10 = inlined_call_operand.hbm [shape: f32[1,128], index: 10, kind: input, shape index: {}]
  %s11 = inlined_call_operand.hbm [shape: f32[64,128], index: 11, kind: input, shape index: {}]
  %s12 = inlined_call_operand.hbm [shape: f32[32,128], index: 12, kind: input, shape index: {}]
  %s13 = inlined_call_operand.hbm [shape: f32[1,128], index: 13, kind: input, shape index: {}]
  %s14 = inlined_call_operand.hbm [shape: f32[64,128], index: 14, kind: input, shape index: {}]
  %s15 = inlined_call_operand.hbm [shape: f32[32,128], index: 15, kind: input, shape index: {}]
  %s16 = inlined_call_operand.hbm [shape: f32[1,128], index: 16, kind: input, shape index: {}]
  %s17 = inlined_call_operand.hbm [shape: f32[2,4], index: 17, kind: output, shape index: {}]
  %s18 = sld [smem:[#allocation0]]
  $region146: #{tpu_custom_call.1} parent=0
    _
  %s20 = ssub.s32 1, %s18
  %s21 = scalar_select 0, %s20, %s18
  $region1: #{tpu_custom_call.1} parent=0
    #allocation6 [shape = 'u8[8192]{0}', space=vmem, size = 0x2000, scoped, tag = 'input window, operand 0, single buffered']
    #allocation7 [shape = 's32[1]{0}', space=sflag, size = 0x4, scoped, tag = 'scoped memory for tpu_custom_call.1']
    #allocation8 [shape = 's32[1]{0}', space=sflag, size = 0x4, scoped, tag = 'scoped memory for tpu_custom_call.1']
    #allocation9 [shape = 'u8[1024]{0}', space=vmem, size = 0x400, scoped, tag = 'input window, operand 1, single buffered']
    #allocation10 [shape = 's32[1]{0}', space=sflag, size = 0x4, scoped, tag = 'scoped memory for tpu_custom_call.1']
    #allocation11 [shape = 'u8[65536]{0}', space=vmem, size = 0x10000, scoped, tag = 'input window, operand 2, single buffered']
    #allocation12 [shape = 'u8[32768]{0}', space=vmem, size = 0x8000, scoped, tag = 'input window, operand 3, single buffered']
    #allocation13 [shape = 's32[1]{0}', space=sflag, size = 0x4, scoped, tag = 'scoped memory for tpu_custom_call.1']
    #allocation14 [shape = 'u8[512]{0}', space=vmem, size = 0x400, scoped, tag = 'input window, operand 4, single buffered']
    #allocation15 [shape = 'u8[32768]{0}', space=vmem, size = 0x8000, scoped, tag = 'input window, operand 5, single buffered']
    #allocation16 [shape = 's32[1]{0}', space=sflag, size = 0x4, scoped, tag = 'scoped memory for tpu_custom_call.1']
    #allocation17 [shape = 'u8[16384]{0}', space=vmem, size = 0x4000, scoped, tag = 'input window, operand 6, single buffered']
    #allocation18 [shape = 'u8[512]{0}', space=vmem, size = 0x400, scoped, tag = 'input window, operand 7, single buffered']
    #allocation19 [shape = 's32[1]{0}', space=sflag, size = 0x4, scoped, tag = 'scoped memory for tpu_custom_call.1']
    #allocation20 [shape = 'u8[32768]{0}', space=vmem, size = 0x8000, scoped, tag = 'input window, operand 8, single buffered']
    #allocation21 [shape = 'u8[16384]{0}', space=vmem, size = 0x4000, scoped, tag = 'input window, operand 9, single buffered']
    #allocation22 [shape = 's32[1]{0}', space=sflag, size = 0x4, scoped, tag = 'scoped memory for tpu_custom_call.1']
    #allocation23 [shape = 'u8[512]{0}', space=vmem, size = 0x400, scoped, tag = 'input window, operand 10, single buffered']
    #allocation24 [shape = 'u8[32768]{0}', space=vmem, size = 0x8000, scoped, tag = 'input window, operand 11, single buffered']
    #allocation25 [shape = 's32[1]{0}', space=sflag, size = 0x4, scoped, tag = 'scoped memory for tpu_custom_call.1']
    #allocation26 [shape = 'u8[16384]{0}', space=vmem, size = 0x4000, scoped, tag = 'input window, operand 12, single buffered']
    #allocation27 [shape = 'u8[512]{0}', space=vmem, size = 0x400, scoped, tag = 'input window, operand 13, single buffered']
    #allocation28 [shape = 's32[1]{0}', space=sflag, size = 0x4, scoped, tag = 'scoped memory for tpu_custom_call.1']
    #allocation29 [shape = 'u8[32768]{0}', space=vmem, size = 0x8000, scoped, tag = 'input window, operand 14, single buffered']
    #allocation30 [shape = 'u8[16384]{0}', space=vmem, size = 0x4000, scoped, tag = 'input window, operand 15, single buffered']
    #allocation31 [shape = 's32[1]{0}', space=sflag, size = 0x4, scoped, tag = 'scoped memory for tpu_custom_call.1']
    #allocation32 [shape = 'u8[512]{0}', space=vmem, size = 0x400, scoped, tag = 'input window, operand 16, single buffered']
    #allocation33 [shape = 'u8[1024]{0}', space=vmem, size = 0x400, scoped, tag = 'output window, operand 0, single buffered']
    %22 = vsyncpa [#allocation7], 0
    %23 = vsyncpa [#allocation10], 0
    %24 = vsyncpa [#allocation13], 0
    %25 = vsyncpa [#allocation16], 0
    %26 = vsyncpa [#allocation19], 0
    %27 = vsyncpa [#allocation22], 0
    %28 = vsyncpa [#allocation25], 0
    %29 = vsyncpa [#allocation28], 0
    %30 = vsyncpa [#allocation31], 0
    %31 = vsyncpa [#allocation8], 0
    // Predicated region
    $region2: #{tpu_custom_call.1} parent=1 // pred_check
      _
    $region3: #{tpu_custom_call.1} parent=1 // pred_check_branch
      %33 = sbr.rel (0) target = $region5
    $region4: #{tpu_custom_call.1} parent=1 // pred_region
      %s35 = ssub.s32 256, 256
      %36 = vsyncadd [#allocation7], %s35
      %s37 = sshll.u32 [#allocation6], 4
      %s38 = int_to_ptr.vmem [resolvable:$true] %s37
      %43 = dma.hbm_to_vmem [thread:$0]  %s0, 256, %s38, [#allocation7], 128, 128, 8
    $region5: #{tpu_custom_call.1} parent=1 // pred_fallthru
      _
    // Predicated region
    $region6: #{tpu_custom_call.1} parent=1 // pred_check
      _
    $region7: #{tpu_custom_call.1} parent=1 // pred_check_branch
      %45 = sbr.rel (0) target = $region9
    $region8: #{tpu_custom_call.1} parent=1 // pred_region
      %s47 = ssub.s32 32, 32
      %48 = vsyncadd [#allocation10], %s47
      %s50 = sshll.u32 [#allocation9], 4
      %s51 = int_to_ptr.vmem [resolvable:$true] %s50
      %53 = dma.hbm_to_vmem [thread:$0]  %s1, 32, %s51, [#allocation10]
    $region9: #{tpu_custom_call.1} parent=1 // pred_fallthru
      _
    // Predicated region
    $region10: #{tpu_custom_call.1} parent=1 // pred_check
      _
    $region11: #{tpu_custom_call.1} parent=1 // pred_check_branch
      %55 = sbr.rel (0) target = $region13
    $region12: #{tpu_custom_call.1} parent=1 // pred_region
      %s57 = ssub.s32 2048, 2048
      %58 = vsyncadd [#allocation10], %s57
      %s59 = sshll.u32 [#allocation11], 4
      %s60 = int_to_ptr.vmem [resolvable:$true] %s59
      %65 = dma.hbm_to_vmem [thread:$0]  %s2, 2048, %s60, [#allocation10], 128, 128, 8
    $region13: #{tpu_custom_call.1} parent=1 // pred_fallthru
      _
    // Predicated region
    $region14: #{tpu_custom_call.1} parent=1 // pred_check
      _
    $region15: #{tpu_custom_call.1} parent=1 // pred_check_branch
      %67 = sbr.rel (0) target = $region17
    $region16: #{tpu_custom_call.1} parent=1 // pred_region
      %s69 = ssub.s32 1024, 1024
      %70 = vsyncadd [#allocation13], %s69
      %s71 = sshll.u32 [#allocation12], 4
      %s72 = int_to_ptr.vmem [resolvable:$true] %s71
      %77 = dma.hbm_to_vmem [thread:$0]  %s3, 1024, %s72, [#allocation13], 128, 128, 8
    $region17: #{tpu_custom_call.1} parent=1 // pred_fallthru
      _
    // Predicated region
    $region18: #{tpu_custom_call.1} parent=1 // pred_check
      _
    $region19: #{tpu_custom_call.1} parent=1 // pred_check_branch
      %79 = sbr.rel (0) target = $region21
    $region20: #{tpu_custom_call.1} parent=1 // pred_region
      %s81 = ssub.s32 16, 16
      %82 = vsyncadd [#allocation13], %s81
      %s84 = sshll.u32 [#allocation14], 4
      %s85 = int_to_ptr.vmem [resolvable:$true] %s84
      %87 = dma.hbm_to_vmem [thread:$0]  %s4, 16, %s85, [#allocation13]
    $region21: #{tpu_custom_call.1} parent=1 // pred_fallthru
      _
    // Predicated region
    $region22: #{tpu_custom_call.1} parent=1 // pred_check
      _
    $region23: #{tpu_custom_call.1} parent=1 // pred_check_branch
      %89 = sbr.rel (0) target = $region25
    $region24: #{tpu_custom_call.1} parent=1 // pred_region
      %s91 = ssub.s32 1024, 1024
      %92 = vsyncadd [#allocation16], %s91
      %s93 = sshll.u32 [#allocation15], 4
      %s94 = int_to_ptr.vmem [resolvable:$true] %s93
      %99 = dma.hbm_to_vmem [thread:$0]  %s5, 1024, %s94, [#allocation16], 128, 128, 8
    $region25: #{tpu_custom_call.1} parent=1 // pred_fallthru
      _
    // Predicated region
    $region26: #{tpu_custom_call.1} parent=1 // pred_check
      _
    $region27: #{tpu_custom_call.1} parent=1 // pred_check_branch
      %101 = sbr.rel (0) target = $region29
    $region28: #{tpu_custom_call.1} parent=1 // pred_region
      %s103 = ssub.s32 512, 512
      %104 = vsyncadd [#allocation16], %s103
      %s105 = sshll.u32 [#allocation17], 4
      %s106 = int_to_ptr.vmem [resolvable:$true] %s105
      %111 = dma.hbm_to_vmem [thread:$0]  %s6, 512, %s106, [#allocation16], 128, 128, 8
    $region29: #{tpu_custom_call.1} parent=1 // pred_fallthru
      _
    // Predicated region
    $region30: #{tpu_custom_call.1} parent=1 // pred_check
      _
    $region31: #{tpu_custom_call.1} parent=1 // pred_check_branch
      %113 = sbr.rel (0) target = $region33
    $region32: #{tpu_custom_call.1} parent=1 // pred_region
      %s115 = ssub.s32 16, 16
      %116 = vsyncadd [#allocation19], %s115
      %s118 = sshll.u32 [#allocation18], 4
      %s119 = int_to_ptr.vmem [resolvable:$true] %s118
      %121 = dma.hbm_to_vmem [thread:$0]  %s7, 16, %s119, [#allocation19]
    $region33: #{tpu_custom_call.1} parent=1 // pred_fallthru
      _
    // Predicated region
    $region34: #{tpu_custom_call.1} parent=1 // pred_check
      _
    $region35: #{tpu_custom_call.1} parent=1 // pred_check_branch
      %123 = sbr.rel (0) target = $region37
    $region36: #{tpu_custom_call.1} parent=1 // pred_region
      %s125 = ssub.s32 1024, 1024
      %126 = vsyncadd [#allocation19], %s125
      %s127 = sshll.u32 [#allocation20], 4
      %s128 = int_to_ptr.vmem [resolvable:$true] %s127
      %133 = dma.hbm_to_vmem [thread:$0]  %s8, 1024, %s128, [#allocation19], 128, 128, 8
    $region37: #{tpu_custom_call.1} parent=1 // pred_fallthru
      _
    // Predicated region
    $region38: #{tpu_custom_call.1} parent=1 // pred_check
      _
    $region39: #{tpu_custom_call.1} parent=1 // pred_check_branch
      %135 = sbr.rel (0) target = $region41
    $region40: #{tpu_custom_call.1} parent=1 // pred_region
      %s137 = ssub.s32 512, 512
      %138 = vsyncadd [#allocation22], %s137
      %s139 = sshll.u32 [#allocation21], 4
      %s140 = int_to_ptr.vmem [resolvable:$true] %s139
      %145 = dma.hbm_to_vmem [thread:$0]  %s9, 512, %s140, [#allocation22], 128, 128, 8
    $region41: #{tpu_custom_call.1} parent=1 // pred_fallthru
      _
    // Predicated region
    $region42: #{tpu_custom_call.1} parent=1 // pred_check
      _
    $region43: #{tpu_custom_call.1} parent=1 // pred_check_branch
      %147 = sbr.rel (0) target = $region45
    $region44: #{tpu_custom_call.1} parent=1 // pred_region
      %s149 = ssub.s32 16, 16
      %150 = vsyncadd [#allocation22], %s149
      %s152 = sshll.u32 [#allocation23], 4
      %s153 = int_to_ptr.vmem [resolvable:$true] %s152
      %155 = dma.hbm_to_vmem [thread:$0]  %s10, 16, %s153, [#allocation22]
    $region45: #{tpu_custom_call.1} parent=1 // pred_fallthru
      _
    // Predicated region
    $region46: #{tpu_custom_call.1} parent=1 // pred_check
      _
    $region47: #{tpu_custom_call.1} parent=1 // pred_check_branch
      %157 = sbr.rel (0) target = $region49
    $region48: #{tpu_custom_call.1} parent=1 // pred_region
      %s159 = ssub.s32 1024, 1024
      %160 = vsyncadd [#allocation25], %s159
      %s161 = sshll.u32 [#allocation24], 4
      %s162 = int_to_ptr.vmem [resolvable:$true] %s161
      %167 = dma.hbm_to_vmem [thread:$0]  %s11, 1024, %s162, [#allocation25], 128, 128, 8
    $region49: #{tpu_custom_call.1} parent=1 // pred_fallthru
      _
    // Predicated region
    $region50: #{tpu_custom_call.1} parent=1 // pred_check
      _
    $region51: #{tpu_custom_call.1} parent=1 // pred_check_branch
      %169 = sbr.rel (0) target = $region53
    $region52: #{tpu_custom_call.1} parent=1 // pred_region
      %s171 = ssub.s32 512, 512
      %172 = vsyncadd [#allocation25], %s171
      %s173 = sshll.u32 [#allocation26], 4
      %s174 = int_to_ptr.vmem [resolvable:$true] %s173
      %179 = dma.hbm_to_vmem [thread:$0]  %s12, 512, %s174, [#allocation25], 128, 128, 8
    $region53: #{tpu_custom_call.1} parent=1 // pred_fallthru
      _
    // Predicated region
    $region54: #{tpu_custom_call.1} parent=1 // pred_check
      _
    $region55: #{tpu_custom_call.1} parent=1 // pred_check_branch
      %181 = sbr.rel (0) target = $region57
    $region56: #{tpu_custom_call.1} parent=1 // pred_region
      %s183 = ssub.s32 16, 16
      %184 = vsyncadd [#allocation28], %s183
      %s186 = sshll.u32 [#allocation27], 4
      %s187 = int_to_ptr.vmem [resolvable:$true] %s186
      %189 = dma.hbm_to_vmem [thread:$0]  %s13, 16, %s187, [#allocation28]
    $region57: #{tpu_custom_call.1} parent=1 // pred_fallthru
      _
    // Predicated region
    $region58: #{tpu_custom_call.1} parent=1 // pred_check
      _
    $region59: #{tpu_custom_call.1} parent=1 // pred_check_branch
      %191 = sbr.rel (0) target = $region61
    $region60: #{tpu_custom_call.1} parent=1 // pred_region
      %s193 = ssub.s32 1024, 1024
      %194 = vsyncadd [#allocation28], %s193
      %s195 = sshll.u32 [#allocation29], 4
      %s196 = int_to_ptr.vmem [resolvable:$true] %s195
      %201 = dma.hbm_to_vmem [thread:$0]  %s14, 1024, %s196, [#allocation28], 128, 128, 8
    $region61: #{tpu_custom_call.1} parent=1 // pred_fallthru
      _
    // Predicated region
    $region62: #{tpu_custom_call.1} parent=1 // pred_check
      _
    $region63: #{tpu_custom_call.1} parent=1 // pred_check_branch
      %203 = sbr.rel (0) target = $region65
    $region64: #{tpu_custom_call.1} parent=1 // pred_region
      %s205 = ssub.s32 512, 512
      %206 = vsyncadd [#allocation31], %s205
      %s207 = sshll.u32 [#allocation30], 4
      %s208 = int_to_ptr.vmem [resolvable:$true] %s207
      %213 = dma.hbm_to_vmem [thread:$0]  %s15, 512, %s208, [#allocation31], 128, 128, 8
    $region65: #{tpu_custom_call.1} parent=1 // pred_fallthru
      _
    // Predicated region
    $region66: #{tpu_custom_call.1} parent=1 // pred_check
      _
    $region67: #{tpu_custom_call.1} parent=1 // pred_check_branch
      %215 = sbr.rel (0) target = $region69
    $region68: #{tpu_custom_call.1} parent=1 // pred_region
      %s217 = ssub.s32 16, 16
      %218 = vsyncadd [#allocation31], %s217
      %s220 = sshll.u32 [#allocation32], 4
      %s221 = int_to_ptr.vmem [resolvable:$true] %s220
      %223 = dma.hbm_to_vmem [thread:$0]  %s16, 16, %s221, [#allocation31]
    $region69: #{tpu_custom_call.1} parent=1 // pred_fallthru
      _
    // Predicated region
    $region70: #{tpu_custom_call.1} parent=1 // pred_check
      _
    $region71: #{tpu_custom_call.1} parent=1 // pred_check_branch
      %225 = sbr.rel (0) target = $region73
    $region72: #{tpu_custom_call.1} parent=1 // pred_region
      %226 = dma.done [#allocation7], 256
    $region73: #{tpu_custom_call.1} parent=1 // pred_fallthru
      _
    // Predicated region
    $region74: #{tpu_custom_call.1} parent=1 // pred_check
      _
    $region75: #{tpu_custom_call.1} parent=1 // pred_check_branch
      %228 = sbr.rel (0) target = $region77
    $region76: #{tpu_custom_call.1} parent=1 // pred_region
      %229 = dma.done [#allocation10], 32
    $region77: #{tpu_custom_call.1} parent=1 // pred_fallthru
      _
    // Predicated region
    $region78: #{tpu_custom_call.1} parent=1 // pred_check
      _
    $region79: #{tpu_custom_call.1} parent=1 // pred_check_branch
      %231 = sbr.rel (0) target = $region81
    $region80: #{tpu_custom_call.1} parent=1 // pred_region
      %232 = dma.done [#allocation10], 2048
    $region81: #{tpu_custom_call.1} parent=1 // pred_fallthru
      _
    // Predicated region
    $region82: #{tpu_custom_call.1} parent=1 // pred_check
      _
    $region83: #{tpu_custom_call.1} parent=1 // pred_check_branch
      %234 = sbr.rel (0) target = $region85
    $region84: #{tpu_custom_call.1} parent=1 // pred_region
      %235 = dma.done [#allocation13], 1024
    $region85: #{tpu_custom_call.1} parent=1 // pred_fallthru
      _
    // Predicated region
    $region86: #{tpu_custom_call.1} parent=1 // pred_check
      _
    $region87: #{tpu_custom_call.1} parent=1 // pred_check_branch
      %237 = sbr.rel (0) target = $region89
    $region88: #{tpu_custom_call.1} parent=1 // pred_region
      %238 = dma.done [#allocation13], 16
    $region89: #{tpu_custom_call.1} parent=1 // pred_fallthru
      _
    // Predicated region
    $region90: #{tpu_custom_call.1} parent=1 // pred_check
      _
    $region91: #{tpu_custom_call.1} parent=1 // pred_check_branch
      %240 = sbr.rel (0) target = $region93
    $region92: #{tpu_custom_call.1} parent=1 // pred_region
      %241 = dma.done [#allocation16], 1024
    $region93: #{tpu_custom_call.1} parent=1 // pred_fallthru
      _
    // Predicated region
    $region94: #{tpu_custom_call.1} parent=1 // pred_check
      _
    $region95: #{tpu_custom_call.1} parent=1 // pred_check_branch
      %243 = sbr.rel (0) target = $region97
    $region96: #{tpu_custom_call.1} parent=1 // pred_region
      %244 = dma.done [#allocation16], 512
    $region97: #{tpu_custom_call.1} parent=1 // pred_fallthru
      _
    // Predicated region
    $region98: #{tpu_custom_call.1} parent=1 // pred_check
      _
    $region99: #{tpu_custom_call.1} parent=1 // pred_check_branch
      %246 = sbr.rel (0) target = $region101
    $region100: #{tpu_custom_call.1} parent=1 // pred_region
      %247 = dma.done [#allocation19], 16
    $region101: #{tpu_custom_call.1} parent=1 // pred_fallthru
      _
    // Predicated region
    $region102: #{tpu_custom_call.1} parent=1 // pred_check
      _
    $region103: #{tpu_custom_call.1} parent=1 // pred_check_branch
      %249 = sbr.rel (0) target = $region105
    $region104: #{tpu_custom_call.1} parent=1 // pred_region
      %250 = dma.done [#allocation19], 1024
    $region105: #{tpu_custom_call.1} parent=1 // pred_fallthru
      _
    // Predicated region
    $region106: #{tpu_custom_call.1} parent=1 // pred_check
      _
    $region107: #{tpu_custom_call.1} parent=1 // pred_check_branch
      %252 = sbr.rel (0) target = $region109
    $region108: #{tpu_custom_call.1} parent=1 // pred_region
      %253 = dma.done [#allocation22], 512
    $region109: #{tpu_custom_call.1} parent=1 // pred_fallthru
      _
    // Predicated region
    $region110: #{tpu_custom_call.1} parent=1 // pred_check
      _
    $region111: #{tpu_custom_call.1} parent=1 // pred_check_branch
      %255 = sbr.rel (0) target = $region113
    $region112: #{tpu_custom_call.1} parent=1 // pred_region
      %256 = dma.done [#allocation22], 16
    $region113: #{tpu_custom_call.1} parent=1 // pred_fallthru
      _
    // Predicated region
    $region114: #{tpu_custom_call.1} parent=1 // pred_check
      _
    $region115: #{tpu_custom_call.1} parent=1 // pred_check_branch
      %258 = sbr.rel (0) target = $region117
    $region116: #{tpu_custom_call.1} parent=1 // pred_region
      %259 = dma.done [#allocation25], 1024
    $region117: #{tpu_custom_call.1} parent=1 // pred_fallthru
      _
    // Predicated region
    $region118: #{tpu_custom_call.1} parent=1 // pred_check
      _
    $region119: #{tpu_custom_call.1} parent=1 // pred_check_branch
      %261 = sbr.rel (0) target = $region121
    $region120: #{tpu_custom_call.1} parent=1 // pred_region
      %262 = dma.done [#allocation25], 512
    $region121: #{tpu_custom_call.1} parent=1 // pred_fallthru
      _
    // Predicated region
    $region122: #{tpu_custom_call.1} parent=1 // pred_check
      _
    $region123: #{tpu_custom_call.1} parent=1 // pred_check_branch
      %264 = sbr.rel (0) target = $region125
    $region124: #{tpu_custom_call.1} parent=1 // pred_region
      %265 = dma.done [#allocation28], 16
    $region125: #{tpu_custom_call.1} parent=1 // pred_fallthru
      _
    // Predicated region
    $region126: #{tpu_custom_call.1} parent=1 // pred_check
      _
    $region127: #{tpu_custom_call.1} parent=1 // pred_check_branch
      %267 = sbr.rel (0) target = $region129
    $region128: #{tpu_custom_call.1} parent=1 // pred_region
      %268 = dma.done [#allocation28], 1024
    $region129: #{tpu_custom_call.1} parent=1 // pred_fallthru
      _
    // Predicated region
    $region130: #{tpu_custom_call.1} parent=1 // pred_check
      _
    $region131: #{tpu_custom_call.1} parent=1 // pred_check_branch
      %270 = sbr.rel (0) target = $region133
    $region132: #{tpu_custom_call.1} parent=1 // pred_region
      %271 = dma.done [#allocation31], 512
    $region133: #{tpu_custom_call.1} parent=1 // pred_fallthru
      _
    // Predicated region
    $region134: #{tpu_custom_call.1} parent=1 // pred_check
      _
    $region135: #{tpu_custom_call.1} parent=1 // pred_check_branch
      %273 = sbr.rel (0) target = $region137
    $region136: #{tpu_custom_call.1} parent=1 // pred_region
      %274 = dma.done [#allocation31], 16
    $region137: #{tpu_custom_call.1} parent=1 // pred_fallthru
      _
    %v276 = vld [vmem:[#allocation9] sm:$0x3]
    %v277 = vld [vmem:[#allocation6] sm:$0xff]
    %v278 = vld [vmem:[#allocation6 + $0x8] sm:$0xff]
    %v279 = vlaneseq
    %v280 = vand.u32 %v279, 127
    %281 = vset.pattern.permute.xlu0 0
    %282 = vperm.xlu0 %281, %v277
    %v283 = vpop.permute.xlu0 %282
    %284 = vset.pattern.permute.xlu0 0
    %285 = vperm.xlu0 %284, %v278
    %v286 = vpop.permute.xlu0 %285
    %vm287 = vcmp.eq.s32.totalorder %v280, %v283
    %vm288 = vcmp.eq.s32.totalorder %v280, %v286
    %v289 = vsel %vm287, 1, 0
    %v290 = vsel %vm288, 1, 0
    %v291 = vcvt.s32.f32 %v289
    %v292 = vcvt.s32.f32 %v290
    %v293 = vpack.c.bf16 %v292, %v291
    %v294 = vld [vmem:[#allocation11] sm:$0xff]
    %v295 = vld [vmem:[#allocation11 + $0x8] sm:$0xff]
    %v296 = vld [vmem:[#allocation11 + $0x10] sm:$0xff]
    %v297 = vld [vmem:[#allocation11 + $0x18] sm:$0xff]
    %v298 = vld [vmem:[#allocation11 + $0x20] sm:$0xff]
    %v299 = vld [vmem:[#allocation11 + $0x28] sm:$0xff]
    %v300 = vld [vmem:[#allocation11 + $0x30] sm:$0xff]
    %v301 = vld [vmem:[#allocation11 + $0x38] sm:$0xff]
    %v302 = vld [vmem:[#allocation11 + $0x40] sm:$0xff]
    %v303 = vld [vmem:[#allocation11 + $0x48] sm:$0xff]
    %v304 = vld [vmem:[#allocation11 + $0x50] sm:$0xff]
    %v305 = vld [vmem:[#allocation11 + $0x58] sm:$0xff]
    %v306 = vld [vmem:[#allocation11 + $0x60] sm:$0xff]
    %v307 = vld [vmem:[#allocation11 + $0x68] sm:$0xff]
    %v308 = vld [vmem:[#allocation11 + $0x70] sm:$0xff]
    %v309 = vld [vmem:[#allocation11 + $0x78] sm:$0xff]
    %v310 = vpack.c.bf16 %v295, %v294
    %v311 = vpack.c.bf16 %v297, %v296
    %v312 = vpack.c.bf16 %v299, %v298
    %v313 = vpack.c.bf16 %v301, %v300
    %v314 = vpack.c.bf16 %v303, %v302
    %v315 = vpack.c.bf16 %v305, %v304
    %v316 = vpack.c.bf16 %v307, %v306
    %v317 = vpack.c.bf16 %v309, %v308
    %318 = vmatprep.subr.bf16.mxu0 0
    %319 = vmatpush1.bf16.msra.mxu0 %v310
    %320 = vmatprep.subr.bf16.mxu0 0
    %321 = vmatpush1.bf16.msra.mxu0 %v311
    %322 = vmatprep.subr.bf16.mxu0 0
    %323 = vmatpush1.bf16.msra.mxu0 %v312
    %324 = vmatprep.subr.bf16.mxu0 0
    %325 = vmatpush1.bf16.msra.mxu0 %v313
    %326 = vmatprep.subr.bf16.mxu0 0
    %327 = vmatpush1.bf16.msra.mxu0 %v314
    %328 = vmatprep.subr.bf16.mxu0 0
    %329 = vmatpush1.bf16.msra.mxu0 %v315
    %330 = vmatprep.subr.bf16.mxu0 0
    %331 = vmatpush1.bf16.msra.mxu0 %v316
    %332 = vmatprep.subr.bf16.mxu0 0
    %333 = vmatpush1.bf16.msra.mxu0 %v317
    %334 = vmatprep.subr.bf16.mxu0 0
    %335 = vmatpush1.bf16.msra.mxu0 0
    %336 = vmatprep.subr.bf16.mxu0 0
    %337 = vmatpush1.bf16.msra.mxu0 0
    %338 = vmatprep.subr.bf16.mxu0 0
    %339 = vmatpush1.bf16.msra.mxu0 0
    %340 = vmatprep.subr.bf16.mxu0 0
    %341 = vmatpush1.bf16.msra.mxu0 0
    %342 = vmatprep.subr.bf16.mxu0 0
    %343 = vmatpush1.bf16.msra.mxu0 0
    %344 = vmatprep.subr.bf16.mxu0 0
    %345 = vmatpush1.bf16.msra.mxu0 0
    %346 = vmatprep.subr.bf16.mxu0 0
    %347 = vmatpush1.bf16.msra.mxu0 0
    %348 = vmatprep.subr.bf16.mxu0 0
    %349 = vmatpush1.bf16.msra.mxu0 0
    %350 = vmatprep.mubr.bf16.mxu0 0
    %351 = vmatmul.mubr.bf16.gmra.mrb[0].mxu0 %v293
    %v352 = vpop.f32.mrb[0].mxu0
    %v353 = vadd.f32 0.0, %v352
    %v354 = vpop.f32.mrb[0].mxu0
    %v355 = vpop.f32.mrb[0].mxu0
    %v356 = vadd.f32 0.0, %v355
    %v357 = vpop.f32.mrb[0].mxu0
    %358 = vdwg.mxu0
    %v359 = vpack.c.bf16 %v356, %v353
    %v360 = vld [vmem:[#allocation15] sm:$0xff]
    %v361 = vld [vmem:[#allocation15 + $0x8] sm:$0xff]
    %v362 = vld [vmem:[#allocation15 + $0x10] sm:$0xff]
    %v363 = vld [vmem:[#allocation15 + $0x18] sm:$0xff]
    %v364 = vld [vmem:[#allocation15 + $0x20] sm:$0xff]
    %v365 = vld [vmem:[#allocation15 + $0x28] sm:$0xff]
    %v366 = vld [vmem:[#allocation15 + $0x30] sm:$0xff]
    %v367 = vld [vmem:[#allocation15 + $0x38] sm:$0xff]
    %v368 = vpack.c.bf16 %v361, %v360
    %v369 = vpack.c.bf16 %v363, %v362
    %v370 = vpack.c.bf16 %v365, %v364
    %v371 = vpack.c.bf16 %v367, %v366
    %v372 = vld [vmem:[#allocation18] sm:$0x1]
    %v374 = vlaneseq
    %v375 = vshrl.u32 %v374, 7
    %v376 = vsub.s32 0, %v375
    %v377 = vrot.slane %v372, %v376
    %vm379 = vcmask 523264
    %v381 = vsel %vm379, %v359, 0
    %383 = vmatprep.subr.bf16.mxu0 0
    %384 = vmatpush1.bf16.msra.mxu0 %v368
    %385 = vmatprep.subr.bf16.mxu0 0
    %386 = vmatpush1.bf16.msra.mxu0 %v369
    %387 = vmatprep.subr.bf16.mxu0 0
    %388 = vmatpush1.bf16.msra.mxu0 %v370
    %389 = vmatprep.subr.bf16.mxu0 0
    %390 = vmatpush1.bf16.msra.mxu0 %v371
    %391 = vmatprep.subr.bf16.mxu0 0
    %392 = vmatpush1.bf16.msra.mxu0 0
    %393 = vmatprep.subr.bf16.mxu0 0
    %394 = vmatpush1.bf16.msra.mxu0 0
    %395 = vmatprep.subr.bf16.mxu0 0
    %396 = vmatpush1.bf16.msra.mxu0 0
    %397 = vmatprep.subr.bf16.mxu0 0
    %398 = vmatpush1.bf16.msra.mxu0 0
    %399 = vmatprep.subr.bf16.mxu0 0
    %400 = vmatpush1.bf16.msra.mxu0 0
    %401 = vmatprep.subr.bf16.mxu0 0
    %402 = vmatpush1.bf16.msra.mxu0 0
    %403 = vmatprep.subr.bf16.mxu0 0
    %404 = vmatpush1.bf16.msra.mxu0 0
    %405 = vmatprep.subr.bf16.mxu0 0
    %406 = vmatpush1.bf16.msra.mxu0 0
    %407 = vmatprep.subr.bf16.mxu0 0
    %408 = vmatpush1.bf16.msra.mxu0 0
    %409 = vmatprep.subr.bf16.mxu0 0
    %410 = vmatpush1.bf16.msra.mxu0 0
    %411 = vmatprep.subr.bf16.mxu0 0
    %412 = vmatpush1.bf16.msra.mxu0 0
    %413 = vmatprep.subr.bf16.mxu0 0
    %414 = vmatpush1.bf16.msra.mxu0 0
    %415 = vmatprep.mubr.bf16.mxu0 0
    %416 = vmatmul.mubr.bf16.gmra.mrb[0].mxu0 %v381
    %v417 = vpop.f32.mrb[0].mxu0
    %v418 = vadd.f32 %v377, %v417
    %v419 = vpop.f32.mrb[0].mxu0
    %v420 = vpop.f32.mrb[0].mxu0
    %v421 = vadd.f32 %v377, %v420
    %v422 = vpop.f32.mrb[0].mxu0
    %423 = vdwg.mxu0
    %424 = vst [vmem:[#allocation4] sm:$0xff] %v418
    %425 = vst [vmem:[#allocation4 + $0x8] sm:$0xff] %v421
    %v426 = vld [vmem:[#allocation20] sm:$0xff]
    %v427 = vld [vmem:[#allocation20 + $0x8] sm:$0xff]
    %v428 = vld [vmem:[#allocation20 + $0x10] sm:$0xff]
    %v429 = vld [vmem:[#allocation20 + $0x18] sm:$0xff]
    %v430 = vld [vmem:[#allocation20 + $0x20] sm:$0xff]
    %v431 = vld [vmem:[#allocation20 + $0x28] sm:$0xff]
    %v432 = vld [vmem:[#allocation20 + $0x30] sm:$0xff]
    %v433 = vld [vmem:[#allocation20 + $0x38] sm:$0xff]
    %v434 = vpack.c.bf16 %v427, %v426
    %v435 = vpack.c.bf16 %v429, %v428
    %v436 = vpack.c.bf16 %v431, %v430
    %v437 = vpack.c.bf16 %v433, %v432
    %v438 = vld [vmem:[#allocation23] sm:$0x1]
    %v440 = vlaneseq
    %v441 = vshrl.u32 %v440, 7
    %v442 = vsub.s32 0, %v441
    %v443 = vrot.slane %v438, %v442
    %445 = vmatprep.subr.bf16.mxu0 0
    %446 = vmatpush1.bf16.msra.mxu0 %v434
    %447 = vmatprep.subr.bf16.mxu0 0
    %448 = vmatpush1.bf16.msra.mxu0 %v435
    %449 = vmatprep.subr.bf16.mxu0 0
    %450 = vmatpush1.bf16.msra.mxu0 %v436
    %451 = vmatprep.subr.bf16.mxu0 0
    %452 = vmatpush1.bf16.msra.mxu0 %v437
    %453 = vmatprep.subr.bf16.mxu0 0
    %454 = vmatpush1.bf16.msra.mxu0 0
    %455 = vmatprep.subr.bf16.mxu0 0
    %456 = vmatpush1.bf16.msra.mxu0 0
    %457 = vmatprep.subr.bf16.mxu0 0
    %458 = vmatpush1.bf16.msra.mxu0 0
    %459 = vmatprep.subr.bf16.mxu0 0
    %460 = vmatpush1.bf16.msra.mxu0 0
    %461 = vmatprep.subr.bf16.mxu0 0
    %462 = vmatpush1.bf16.msra.mxu0 0
    %463 = vmatprep.subr.bf16.mxu0 0
    %464 = vmatpush1.bf16.msra.mxu0 0
    %465 = vmatprep.subr.bf16.mxu0 0
    %466 = vmatpush1.bf16.msra.mxu0 0
    %467 = vmatprep.subr.bf16.mxu0 0
    %468 = vmatpush1.bf16.msra.mxu0 0
    %469 = vmatprep.subr.bf16.mxu0 0
    %470 = vmatpush1.bf16.msra.mxu0 0
    %471 = vmatprep.subr.bf16.mxu0 0
    %472 = vmatpush1.bf16.msra.mxu0 0
    %473 = vmatprep.subr.bf16.mxu0 0
    %474 = vmatpush1.bf16.msra.mxu0 0
    %475 = vmatprep.subr.bf16.mxu0 0
    %476 = vmatpush1.bf16.msra.mxu0 0
    %477 = vmatprep.mubr.bf16.mxu0 0
    %478 = vmatmul.mubr.bf16.gmra.mrb[0].mxu0 %v381
    %v479 = vpop.f32.mrb[0].mxu0
    %v480 = vadd.f32 %v443, %v479
    %v481 = vpop.f32.mrb[0].mxu0
    %v482 = vpop.f32.mrb[0].mxu0
    %v483 = vadd.f32 %v443, %v482
    %v484 = vpop.f32.mrb[0].mxu0
    %485 = vdwg.mxu0
    %486 = vst [vmem:[#allocation5] sm:$0xff] %v480
    %487 = vst [vmem:[#allocation5 + $0x8] sm:$0xff] %v483
    %v488 = vld [vmem:[#allocation17] sm:$0xff]
    %v489 = vld [vmem:[#allocation17 + $0x8] sm:$0xff]
    %v490 = vld [vmem:[#allocation17 + $0x10] sm:$0xff]
    %v491 = vld [vmem:[#allocation17 + $0x18] sm:$0xff]
    %v492 = vpack.c.bf16 %v489, %v488
    %v493 = vpack.c.bf16 %v491, %v490
    %v494 = vld [vmem:[#allocation21] sm:$0xff]
    %v495 = vld [vmem:[#allocation21 + $0x8] sm:$0xff]
    %v496 = vld [vmem:[#allocation21 + $0x10] sm:$0xff]
    %v497 = vld [vmem:[#allocation21 + $0x18] sm:$0xff]
    %v498 = vpack.c.bf16 %v495, %v494
    %v499 = vpack.c.bf16 %v497, %v496
    %v500 = vld [vmem:[#allocation4] sm:$0x3]
    %vm501 = vcmask 261120
    %v503 = vsel %vm501, 0, 0
    %505 = vmatprep.subr.bf16.mxu0 0
    %506 = vmatpush1.bf16.msra.mxu0 %v492
    %507 = vmatprep.subr.bf16.mxu0 0
    %508 = vmatpush1.bf16.msra.mxu0 %v493
    %509 = vmatprep.subr.bf16.mxu0 0
    %510 = vmatpush1.bf16.msra.mxu0 0
    %511 = vmatprep.subr.bf16.mxu0 0
    %512 = vmatpush1.bf16.msra.mxu0 0
    %513 = vmatprep.subr.bf16.mxu0 0
    %514 = vmatpush1.bf16.msra.mxu0 0
    %515 = vmatprep.subr.bf16.mxu0 0
    %516 = vmatpush1.bf16.msra.mxu0 0
    %517 = vmatprep.subr.bf16.mxu0 0
    %518 = vmatpush1.bf16.msra.mxu0 0
    %519 = vmatprep.subr.bf16.mxu0 0
    %520 = vmatpush1.bf16.msra.mxu0 0
    %521 = vmatprep.subr.bf16.mxu0 0
    %522 = vmatpush1.bf16.msra.mxu0 0
    %523 = vmatprep.subr.bf16.mxu0 0
    %524 = vmatpush1.bf16.msra.mxu0 0
    %525 = vmatprep.subr.bf16.mxu0 0
    %526 = vmatpush1.bf16.msra.mxu0 0
    %527 = vmatprep.subr.bf16.mxu0 0
    %528 = vmatpush1.bf16.msra.mxu0 0
    %529 = vmatprep.subr.bf16.mxu0 0
    %530 = vmatpush1.bf16.msra.mxu0 0
    %531 = vmatprep.subr.bf16.mxu0 0
    %532 = vmatpush1.bf16.msra.mxu0 0
    %533 = vmatprep.subr.bf16.mxu0 0
    %534 = vmatpush1.bf16.msra.mxu0 0
    %535 = vmatprep.subr.bf16.mxu0 0
    %536 = vmatpush1.bf16.msra.mxu0 0
    %537 = vmatprep.mubr.bf16.mxu0 0
    %538 = vmatmul.mubr.bf16.gmra.mrb[0].mxu0 %v503
    %v539 = vpop.f32.mrb[0].mxu0
    %v540 = vadd.f32 0.0, %v539
    %v541 = vpop.f32.mrb[0].mxu0
    %v542 = vpop.f32.mrb[0].mxu0
    %v543 = vpop.f32.mrb[0].mxu0
    %544 = vdwg.mxu0
    %v545 = vadd.f32 %v500, %v540
    %v546 = vld [vmem:[#allocation5 + $0xe] sm:$0x3]
    %547 = vmatprep.subr.bf16.mxu0 0
    %548 = vmatpush1.bf16.msra.mxu0 %v498
    %549 = vmatprep.subr.bf16.mxu0 0
    %550 = vmatpush1.bf16.msra.mxu0 %v499
    %551 = vmatprep.subr.bf16.mxu0 0
    %552 = vmatpush1.bf16.msra.mxu0 0
    %553 = vmatprep.subr.bf16.mxu0 0
    %554 = vmatpush1.bf16.msra.mxu0 0
    %555 = vmatprep.subr.bf16.mxu0 0
    %556 = vmatpush1.bf16.msra.mxu0 0
    %557 = vmatprep.subr.bf16.mxu0 0
    %558 = vmatpush1.bf16.msra.mxu0 0
    %559 = vmatprep.subr.bf16.mxu0 0
    %560 = vmatpush1.bf16.msra.mxu0 0
    %561 = vmatprep.subr.bf16.mxu0 0
    %562 = vmatpush1.bf16.msra.mxu0 0
    %563 = vmatprep.subr.bf16.mxu0 0
    %564 = vmatpush1.bf16.msra.mxu0 0
    %565 = vmatprep.subr.bf16.mxu0 0
    %566 = vmatpush1.bf16.msra.mxu0 0
    %567 = vmatprep.subr.bf16.mxu0 0
    %568 = vmatpush1.bf16.msra.mxu0 0
    %569 = vmatprep.subr.bf16.mxu0 0
    %570 = vmatpush1.bf16.msra.mxu0 0
    %571 = vmatprep.subr.bf16.mxu0 0
    %572 = vmatpush1.bf16.msra.mxu0 0
    %573 = vmatprep.subr.bf16.mxu0 0
    %574 = vmatpush1.bf16.msra.mxu0 0
    %575 = vmatprep.subr.bf16.mxu0 0
    %576 = vmatpush1.bf16.msra.mxu0 0
    %577 = vmatprep.subr.bf16.mxu0 0
    %578 = vmatpush1.bf16.msra.mxu0 0
    %579 = vmatprep.mubr.bf16.mxu0 0
    %580 = vmatmul.mubr.bf16.gmra.mrb[0].mxu0 %v503
    %v581 = vpop.f32.mrb[0].mxu0
    %v582 = vadd.f32 0.0, %v581
    %v583 = vpop.f32.mrb[0].mxu0
    %v584 = vpop.f32.mrb[0].mxu0
    %v585 = vpop.f32.mrb[0].mxu0
    %586 = vdwg.mxu0
    %v587 = vadd.f32 %v546, %v582
    %v588 = vxor.u32 %v545, 2147483648
    %v589 = vmul.f32 %v588, 1.442695
    %v590 = vpow.pop %v589
    %v591 = vadd.f32 %v590, 1.0
    %v592 = vrcp.pop %v591
    %v593 = vmul.f32 1.0, %v592
    %v594 = vtanh.pop %v545
    %v595 = vmul.f32 %v593, 0.0
    %597 = vrot.lane.b32.xlu0 %v594, 64
    %v598 = vpop.permute.xlu0 %597
    %v600 = vmul.f32 %v593, %v598
    %602 = vrot.lane.b32.xlu0 %v600, 32
    %v603 = vpop.permute.xlu0 %602
    %v605 = vadd.f32 %v595, %v603
    %v606 = vtanh.pop %v605
    %608 = vrot.lane.b32.xlu0 %v606, 64
    %v609 = vpop.permute.xlu0 %608
    %v611 = vmul.f32 %v593, %v609
    %vm612 = vcmp.gt.s32.totalorder %v276, 0
    %v613 = vsel %vm612, 1, 0
    %614 = vset.pattern.permute.xlu0 0
    %615 = vperm.xlu0 %614, %v613
    %v616 = vpop.permute.xlu0 %615
    %vm617 = vcmp.eq.s32.totalorder %v616, 1
    %v618 = vsel %vm617, %v611, 0.0
    %v619 = vsel %vm617, %v605, 0.0
    %v620 = vxor.u32 %v587, 2147483648
    %v621 = vmul.f32 %v620, 1.442695
    %v622 = vpow.pop %v621
    %v623 = vadd.f32 %v622, 1.0
    %v624 = vrcp.pop %v623
    %v625 = vmul.f32 1.0, %v624
    %v626 = vtanh.pop %v587
    %v627 = vmul.f32 %v625, 0.0
    %629 = vrot.lane.b32.xlu0 %v626, 64
    %v630 = vpop.permute.xlu0 %629
    %v632 = vmul.f32 %v625, %v630
    %634 = vrot.lane.b32.xlu0 %v632, 32
    %v635 = vpop.permute.xlu0 %634
    %v637 = vadd.f32 %v627, %v635
    %v638 = vtanh.pop %v637
    %640 = vrot.lane.b32.xlu0 %v638, 64
    %v641 = vpop.permute.xlu0 %640
    %v643 = vmul.f32 %v625, %v641
    %vm644 = vcmp.gt.s32.totalorder %v276, 7
    %v645 = vsel %vm644, 1, 0
    %646 = vset.pattern.permute.xlu0 0
    %647 = vperm.xlu0 %646, %v645
    %v648 = vpop.permute.xlu0 %647
    %vm649 = vcmp.eq.s32.totalorder %v648, 1
    %v650 = vsel %vm649, %v643, 0.0
    %v651 = vsel %vm649, %v637, 0.0
    %653 = vrot.lane.b32.xlu0 %v611, 32
    %v654 = vpop.permute.xlu0 %653
    %vm656 = vcmask 254976
    %657 = vst.msk [vmem:[#allocation2] sm:$0x3] %vm656, %v654
    %659 = vrot.lane.b32.xlu0 %v643, 32
    %v660 = vpop.permute.xlu0 %659
    %662 = vst.msk [vmem:[#allocation3 + $0xe] sm:$0x3] %vm656, %v660
    %v663 = vld [vmem:[#allocation4 + $0x2] sm:$0x3]
    %v664 = vpack.c.bf16 %v618, %v618
    %666 = vrot.lane.b32.xlu0 %v664, 32
    %v667 = vpop.permute.xlu0 %666
    %v669 = vsel %vm501, %v667, 0
    %671 = vmatprep.subr.bf16.mxu0 0
    %672 = vmatpush1.bf16.msra.mxu0 %v492
    %673 = vmatprep.subr.bf16.mxu0 0
    %674 = vmatpush1.bf16.msra.mxu0 %v493
    %675 = vmatprep.subr.bf16.mxu0 0
    %676 = vmatpush1.bf16.msra.mxu0 0
    %677 = vmatprep.subr.bf16.mxu0 0
    %678 = vmatpush1.bf16.msra.mxu0 0
    %679 = vmatprep.subr.bf16.mxu0 0
    %680 = vmatpush1.bf16.msra.mxu0 0
    %681 = vmatprep.subr.bf16.mxu0 0
    %682 = vmatpush1.bf16.msra.mxu0 0
    %683 = vmatprep.subr.bf16.mxu0 0
    %684 = vmatpush1.bf16.msra.mxu0 0
    %685 = vmatprep.subr.bf16.mxu0 0
    %686 = vmatpush1.bf16.msra.mxu0 0
    %687 = vmatprep.subr.bf16.mxu0 0
    %688 = vmatpush1.bf16.msra.mxu0 0
    %689 = vmatprep.subr.bf16.mxu0 0
    %690 = vmatpush1.bf16.msra.mxu0 0
    %691 = vmatprep.subr.bf16.mxu0 0
    %692 = vmatpush1.bf16.msra.mxu0 0
    %693 = vmatprep.subr.bf16.mxu0 0
    %694 = vmatpush1.bf16.msra.mxu0 0
    %695 = vmatprep.subr.bf16.mxu0 0
    %696 = vmatpush1.bf16.msra.mxu0 0
    %697 = vmatprep.subr.bf16.mxu0 0
    %698 = vmatpush1.bf16.msra.mxu0 0
    %699 = vmatprep.subr.bf16.mxu0 0
    %700 = vmatpush1.bf16.msra.mxu0 0
    %701 = vmatprep.subr.bf16.mxu0 0
    %702 = vmatpush1.bf16.msra.mxu0 0
    %703 = vmatprep.mubr.bf16.mxu0 0
    %704 = vmatmul.mubr.bf16.gmra.mrb[0].mxu0 %v669
    %v705 = vpop.f32.mrb[0].mxu0
    %v706 = vadd.f32 0.0, %v705
    %v707 = vpop.f32.mrb[0].mxu0
    %v708 = vpop.f32.mrb[0].mxu0
    %v709 = vpop.f32.mrb[0].mxu0
    %710 = vdwg.mxu0
    %v711 = vadd.f32 %v663, %v706
    %v712 = vld [vmem:[#allocation5 + $0xc] sm:$0x3]
    %v713 = vpack.c.bf16 %v650, %v650
    %715 = vrot.lane.b32.xlu0 %v713, 32
    %v716 = vpop.permute.xlu0 %715
    %v718 = vsel %vm501, %v716, 0
    %720 = vmatprep.subr.bf16.mxu0 0
    %721 = vmatpush1.bf16.msra.mxu0 %v498
    %722 = vmatprep.subr.bf16.mxu0 0
    %723 = vmatpush1.bf16.msra.mxu0 %v499
    %724 = vmatprep.subr.bf16.mxu0 0
    %725 = vmatpush1.bf16.msra.mxu0 0
    %726 = vmatprep.subr.bf16.mxu0 0
    %727 = vmatpush1.bf16.msra.mxu0 0
    %728 = vmatprep.subr.bf16.mxu0 0
    %729 = vmatpush1.bf16.msra.mxu0 0
    %730 = vmatprep.subr.bf16.mxu0 0
    %731 = vmatpush1.bf16.msra.mxu0 0
    %732 = vmatprep.subr.bf16.mxu0 0
    %733 = vmatpush1.bf16.msra.mxu0 0
    %734 = vmatprep.subr.bf16.mxu0 0
    %735 = vmatpush1.bf16.msra.mxu0 0
    %736 = vmatprep.subr.bf16.mxu0 0
    %737 = vmatpush1.bf16.msra.mxu0 0
    %738 = vmatprep.subr.bf16.mxu0 0
    %739 = vmatpush1.bf16.msra.mxu0 0
    %740 = vmatprep.subr.bf16.mxu0 0
    %741 = vmatpush1.bf16.msra.mxu0 0
    %742 = vmatprep.subr.bf16.mxu0 0
    %743 = vmatpush1.bf16.msra.mxu0 0
    %744 = vmatprep.subr.bf16.mxu0 0
    %745 = vmatpush1.bf16.msra.mxu0 0
    %746 = vmatprep.subr.bf16.mxu0 0
    %747 = vmatpush1.bf16.msra.mxu0 0
    %748 = vmatprep.subr.bf16.mxu0 0
    %749 = vmatpush1.bf16.msra.mxu0 0
    %750 = vmatprep.subr.bf16.mxu0 0
    %751 = vmatpush1.bf16.msra.mxu0 0
    %752 = vmatprep.mubr.bf16.mxu0 0
    %753 = vmatmul.mubr.bf16.gmra.mrb[0].mxu0 %v718
    %v754 = vpop.f32.mrb[0].mxu0
    %v755 = vadd.f32 0.0, %v754
    %v756 = vpop.f32.mrb[0].mxu0
    %v757 = vpop.f32.mrb[0].mxu0
    %v758 = vpop.f32.mrb[0].mxu0
    %759 = vdwg.mxu0
    %v760 = vadd.f32 %v712, %v755
    %v761 = vxor.u32 %v711, 2147483648
    %v762 = vmul.f32 %v761, 1.442695
    %v763 = vpow.pop %v762
    %v764 = vadd.f32 %v763, 1.0
    %v765 = vrcp.pop %v764
    %v766 = vmul.f32 1.0, %v765
    %v767 = vtanh.pop %v711
    %v768 = vmul.f32 %v766, %v619
    %770 = vrot.lane.b32.xlu0 %v767, 64
    %v771 = vpop.permute.xlu0 %770
    %v773 = vmul.f32 %v766, %v771
    %775 = vrot.lane.b32.xlu0 %v773, 32
    %v776 = vpop.permute.xlu0 %775
    %v778 = vadd.f32 %v768, %v776
    %v779 = vtanh.pop %v778
    %781 = vrot.lane.b32.xlu0 %v779, 64
    %v782 = vpop.permute.xlu0 %781
    %v784 = vmul.f32 %v766, %v782
    %vm785 = vcmp.gt.s32.totalorder %v276, 1
    %v786 = vsel %vm785, 1, 0
    %787 = vset.pattern.permute.xlu0 0
    %788 = vperm.xlu0 %787, %v786
    %v789 = vpop.permute.xlu0 %788
    %vm790 = vcmp.eq.s32.totalorder %v789, 1
    %v791 = vsel %vm790, %v784, %v618
    %v792 = vsel %vm790, %v778, %v619
    %v793 = vxor.u32 %v760, 2147483648
    %v794 = vmul.f32 %v793, 1.442695
    %v795 = vpow.pop %v794
    %v796 = vadd.f32 %v795, 1.0
    %v797 = vrcp.pop %v796
    %v798 = vmul.f32 1.0, %v797
    %v799 = vtanh.pop %v760
    %v800 = vmul.f32 %v798, %v651
    %802 = vrot.lane.b32.xlu0 %v799, 64
    %v803 = vpop.permute.xlu0 %802
    %v805 = vmul.f32 %v798, %v803
    %807 = vrot.lane.b32.xlu0 %v805, 32
    %v808 = vpop.permute.xlu0 %807
    %v810 = vadd.f32 %v800, %v808
    %v811 = vtanh.pop %v810
    %813 = vrot.lane.b32.xlu0 %v811, 64
    %v814 = vpop.permute.xlu0 %813
    %v816 = vmul.f32 %v798, %v814
    %vm817 = vcmp.gt.s32.totalorder %v276, 6
    %v818 = vsel %vm817, 1, 0
    %819 = vset.pattern.permute.xlu0 0
    %820 = vperm.xlu0 %819, %v818
    %v821 = vpop.permute.xlu0 %820
    %vm822 = vcmp.eq.s32.totalorder %v821, 1
    %v823 = vsel %vm822, %v816, %v650
    %v824 = vsel %vm822, %v810, %v651
    %826 = vrot.lane.b32.xlu0 %v784, 32
    %v827 = vpop.permute.xlu0 %826
    %829 = vst.msk [vmem:[#allocation2 + $0x2] sm:$0x3] %vm656, %v827
    %831 = vrot.lane.b32.xlu0 %v816, 32
    %v832 = vpop.permute.xlu0 %831
    %834 = vst.msk [vmem:[#allocation3 + $0xc] sm:$0x3] %vm656, %v832
    %v835 = vld [vmem:[#allocation4 + $0x4] sm:$0x3]
    %v836 = vpack.c.bf16 %v791, %v791
    %838 = vrot.lane.b32.xlu0 %v836, 32
    %v839 = vpop.permute.xlu0 %838
    %v841 = vsel %vm501, %v839, 0
    %843 = vmatprep.subr.bf16.mxu0 0
    %844 = vmatpush1.bf16.msra.mxu0 %v492
    %845 = vmatprep.subr.bf16.mxu0 0
    %846 = vmatpush1.bf16.msra.mxu0 %v493
    %847 = vmatprep.subr.bf16.mxu0 0
    %848 = vmatpush1.bf16.msra.mxu0 0
    %849 = vmatprep.subr.bf16.mxu0 0
    %850 = vmatpush1.bf16.msra.mxu0 0
    %851 = vmatprep.subr.bf16.mxu0 0
    %852 = vmatpush1.bf16.msra.mxu0 0
    %853 = vmatprep.subr.bf16.mxu0 0
    %854 = vmatpush1.bf16.msra.mxu0 0
    %855 = vmatprep.subr.bf16.mxu0 0
    %856 = vmatpush1.bf16.msra.mxu0 0
    %857 = vmatprep.subr.bf16.mxu0 0
    %858 = vmatpush1.bf16.msra.mxu0 0
    %859 = vmatprep.subr.bf16.mxu0 0
    %860 = vmatpush1.bf16.msra.mxu0 0
    %861 = vmatprep.subr.bf16.mxu0 0
    %862 = vmatpush1.bf16.msra.mxu0 0
    %863 = vmatprep.subr.bf16.mxu0 0
    %864 = vmatpush1.bf16.msra.mxu0 0
    %865 = vmatprep.subr.bf16.mxu0 0
    %866 = vmatpush1.bf16.msra.mxu0 0
    %867 = vmatprep.subr.bf16.mxu0 0
    %868 = vmatpush1.bf16.msra.mxu0 0
    %869 = vmatprep.subr.bf16.mxu0 0
    %870 = vmatpush1.bf16.msra.mxu0 0
    %871 = vmatprep.subr.bf16.mxu0 0
    %872 = vmatpush1.bf16.msra.mxu0 0
    %873 = vmatprep.subr.bf16.mxu0 0
    %874 = vmatpush1.bf16.msra.mxu0 0
    %875 = vmatprep.mubr.bf16.mxu0 0
    %876 = vmatmul.mubr.bf16.gmra.mrb[0].mxu0 %v841
    %v877 = vpop.f32.mrb[0].mxu0
    %v878 = vadd.f32 0.0, %v877
    %v879 = vpop.f32.mrb[0].mxu0
    %v880 = vpop.f32.mrb[0].mxu0
    %v881 = vpop.f32.mrb[0].mxu0
    %882 = vdwg.mxu0
    %v883 = vadd.f32 %v835, %v878
    %v884 = vld [vmem:[#allocation5 + $0xa] sm:$0x3]
    %v885 = vpack.c.bf16 %v823, %v823
    %887 = vrot.lane.b32.xlu0 %v885, 32
    %v888 = vpop.permute.xlu0 %887
    %v890 = vsel %vm501, %v888, 0
    %892 = vmatprep.subr.bf16.mxu0 0
    %893 = vmatpush1.bf16.msra.mxu0 %v498
    %894 = vmatprep.subr.bf16.mxu0 0
    %895 = vmatpush1.bf16.msra.mxu0 %v499
    %896 = vmatprep.subr.bf16.mxu0 0
    %897 = vmatpush1.bf16.msra.mxu0 0
    %898 = vmatprep.subr.bf16.mxu0 0
    %899 = vmatpush1.bf16.msra.mxu0 0
    %900 = vmatprep.subr.bf16.mxu0 0
    %901 = vmatpush1.bf16.msra.mxu0 0
    %902 = vmatprep.subr.bf16.mxu0 0
    %903 = vmatpush1.bf16.msra.mxu0 0
    %904 = vmatprep.subr.bf16.mxu0 0
    %905 = vmatpush1.bf16.msra.mxu0 0
    %906 = vmatprep.subr.bf16.mxu0 0
    %907 = vmatpush1.bf16.msra.mxu0 0
    %908 = vmatprep.subr.bf16.mxu0 0
    %909 = vmatpush1.bf16.msra.mxu0 0
    %910 = vmatprep.subr.bf16.mxu0 0
    %911 = vmatpush1.bf16.msra.mxu0 0
    %912 = vmatprep.subr.bf16.mxu0 0
    %913 = vmatpush1.bf16.msra.mxu0 0
    %914 = vmatprep.subr.bf16.mxu0 0
    %915 = vmatpush1.bf16.msra.mxu0 0
    %916 = vmatprep.subr.bf16.mxu0 0
    %917 = vmatpush1.bf16.msra.mxu0 0
    %918 = vmatprep.subr.bf16.mxu0 0
    %919 = vmatpush1.bf16.msra.mxu0 0
    %920 = vmatprep.subr.bf16.mxu0 0
    %921 = vmatpush1.bf16.msra.mxu0 0
    %922 = vmatprep.subr.bf16.mxu0 0
    %923 = vmatpush1.bf16.msra.mxu0 0
    %924 = vmatprep.mubr.bf16.mxu0 0
    %925 = vmatmul.mubr.bf16.gmra.mrb[0].mxu0 %v890
    %v926 = vpop.f32.mrb[0].mxu0
    %v927 = vadd.f32 0.0, %v926
    %v928 = vpop.f32.mrb[0].mxu0
    %v929 = vpop.f32.mrb[0].mxu0
    %v930 = vpop.f32.mrb[0].mxu0
    %931 = vdwg.mxu0
    %v932 = vadd.f32 %v884, %v927
    %v933 = vxor.u32 %v883, 2147483648
    %v934 = vmul.f32 %v933, 1.442695
    %v935 = vpow.pop %v934
    %v936 = vadd.f32 %v935, 1.0
    %v937 = vrcp.pop %v936
    %v938 = vmul.f32 1.0, %v937
    %v939 = vtanh.pop %v883
    %v940 = vmul.f32 %v938, %v792
    %942 = vrot.lane.b32.xlu0 %v939, 64
    %v943 = vpop.permute.xlu0 %942
    %v945 = vmul.f32 %v938, %v943
    %947 = vrot.lane.b32.xlu0 %v945, 32
    %v948 = vpop.permute.xlu0 %947
    %v950 = vadd.f32 %v940, %v948
    %v951 = vtanh.pop %v950
    %953 = vrot.lane.b32.xlu0 %v951, 64
    %v954 = vpop.permute.xlu0 %953
    %v956 = vmul.f32 %v938, %v954
    %vm957 = vcmp.gt.s32.totalorder %v276, 2
    %v958 = vsel %vm957, 1, 0
    %959 = vset.pattern.permute.xlu0 0
    %960 = vperm.xlu0 %959, %v958
    %v961 = vpop.permute.xlu0 %960
    %vm962 = vcmp.eq.s32.totalorder %v961, 1
    %v963 = vsel %vm962, %v956, %v791
    %v964 = vsel %vm962, %v950, %v792
    %v965 = vxor.u32 %v932, 2147483648
    %v966 = vmul.f32 %v965, 1.442695
    %v967 = vpow.pop %v966
    %v968 = vadd.f32 %v967, 1.0
    %v969 = vrcp.pop %v968
    %v970 = vmul.f32 1.0, %v969
    %v971 = vtanh.pop %v932
    %v972 = vmul.f32 %v970, %v824
    %974 = vrot.lane.b32.xlu0 %v971, 64
    %v975 = vpop.permute.xlu0 %974
    %v977 = vmul.f32 %v970, %v975
    %979 = vrot.lane.b32.xlu0 %v977, 32
    %v980 = vpop.permute.xlu0 %979
    %v982 = vadd.f32 %v972, %v980
    %v983 = vtanh.pop %v982
    %985 = vrot.lane.b32.xlu0 %v983, 64
    %v986 = vpop.permute.xlu0 %985
    %v988 = vmul.f32 %v970, %v986
    %vm989 = vcmp.gt.s32.totalorder %v276, 5
    %v990 = vsel %vm989, 1, 0
    %991 = vset.pattern.permute.xlu0 0
    %992 = vperm.xlu0 %991, %v990
    %v993 = vpop.permute.xlu0 %992
    %vm994 = vcmp.eq.s32.totalorder %v993, 1
    %v995 = vsel %vm994, %v988, %v823
    %v996 = vsel %vm994, %v982, %v824
    %998 = vrot.lane.b32.xlu0 %v956, 32
    %v999 = vpop.permute.xlu0 %998
    %1001 = vst.msk [vmem:[#allocation2 + $0x4] sm:$0x3] %vm656, %v999
    %1003 = vrot.lane.b32.xlu0 %v988, 32
    %v1004 = vpop.permute.xlu0 %1003
    %1006 = vst.msk [vmem:[#allocation3 + $0xa] sm:$0x3] %vm656, %v1004
    %v1007 = vld [vmem:[#allocation4 + $0x6] sm:$0x3]
    %v1008 = vpack.c.bf16 %v963, %v963
    %1010 = vrot.lane.b32.xlu0 %v1008, 32
    %v1011 = vpop.permute.xlu0 %1010
    %v1013 = vsel %vm501, %v1011, 0
    %1015 = vmatprep.subr.bf16.mxu0 0
    %1016 = vmatpush1.bf16.msra.mxu0 %v492
    %1017 = vmatprep.subr.bf16.mxu0 0
    %1018 = vmatpush1.bf16.msra.mxu0 %v493
    %1019 = vmatprep.subr.bf16.mxu0 0
    %1020 = vmatpush1.bf16.msra.mxu0 0
    %1021 = vmatprep.subr.bf16.mxu0 0
    %1022 = vmatpush1.bf16.msra.mxu0 0
    %1023 = vmatprep.subr.bf16.mxu0 0
    %1024 = vmatpush1.bf16.msra.mxu0 0
    %1025 = vmatprep.subr.bf16.mxu0 0
    %1026 = vmatpush1.bf16.msra.mxu0 0
    %1027 = vmatprep.subr.bf16.mxu0 0
    %1028 = vmatpush1.bf16.msra.mxu0 0
    %1029 = vmatprep.subr.bf16.mxu0 0
    %1030 = vmatpush1.bf16.msra.mxu0 0
    %1031 = vmatprep.subr.bf16.mxu0 0
    %1032 = vmatpush1.bf16.msra.mxu0 0
    %1033 = vmatprep.subr.bf16.mxu0 0
    %1034 = vmatpush1.bf16.msra.mxu0 0
    %1035 = vmatprep.subr.bf16.mxu0 0
    %1036 = vmatpush1.bf16.msra.mxu0 0
    %1037 = vmatprep.subr.bf16.mxu0 0
    %1038 = vmatpush1.bf16.msra.mxu0 0
    %1039 = vmatprep.subr.bf16.mxu0 0
    %1040 = vmatpush1.bf16.msra.mxu0 0
    %1041 = vmatprep.subr.bf16.mxu0 0
    %1042 = vmatpush1.bf16.msra.mxu0 0
    %1043 = vmatprep.subr.bf16.mxu0 0
    %1044 = vmatpush1.bf16.msra.mxu0 0
    %1045 = vmatprep.subr.bf16.mxu0 0
    %1046 = vmatpush1.bf16.msra.mxu0 0
    %1047 = vmatprep.mubr.bf16.mxu0 0
    %1048 = vmatmul.mubr.bf16.gmra.mrb[0].mxu0 %v1013
    %v1049 = vpop.f32.mrb[0].mxu0
    %v1050 = vadd.f32 0.0, %v1049
    %v1051 = vpop.f32.mrb[0].mxu0
    %v1052 = vpop.f32.mrb[0].mxu0
    %v1053 = vpop.f32.mrb[0].mxu0
    %1054 = vdwg.mxu0
    %v1055 = vadd.f32 %v1007, %v1050
    %v1056 = vld [vmem:[#allocation5 + $0x8] sm:$0x3]
    %v1057 = vpack.c.bf16 %v995, %v995
    %1059 = vrot.lane.b32.xlu0 %v1057, 32
    %v1060 = vpop.permute.xlu0 %1059
    %v1062 = vsel %vm501, %v1060, 0
    %1064 = vmatprep.subr.bf16.mxu0 0
    %1065 = vmatpush1.bf16.msra.mxu0 %v498
    %1066 = vmatprep.subr.bf16.mxu0 0
    %1067 = vmatpush1.bf16.msra.mxu0 %v499
    %1068 = vmatprep.subr.bf16.mxu0 0
    %1069 = vmatpush1.bf16.msra.mxu0 0
    %1070 = vmatprep.subr.bf16.mxu0 0
    %1071 = vmatpush1.bf16.msra.mxu0 0
    %1072 = vmatprep.subr.bf16.mxu0 0
    %1073 = vmatpush1.bf16.msra.mxu0 0
    %1074 = vmatprep.subr.bf16.mxu0 0
    %1075 = vmatpush1.bf16.msra.mxu0 0
    %1076 = vmatprep.subr.bf16.mxu0 0
    %1077 = vmatpush1.bf16.msra.mxu0 0
    %1078 = vmatprep.subr.bf16.mxu0 0
    %1079 = vmatpush1.bf16.msra.mxu0 0
    %1080 = vmatprep.subr.bf16.mxu0 0
    %1081 = vmatpush1.bf16.msra.mxu0 0
    %1082 = vmatprep.subr.bf16.mxu0 0
    %1083 = vmatpush1.bf16.msra.mxu0 0
    %1084 = vmatprep.subr.bf16.mxu0 0
    %1085 = vmatpush1.bf16.msra.mxu0 0
    %1086 = vmatprep.subr.bf16.mxu0 0
    %1087 = vmatpush1.bf16.msra.mxu0 0
    %1088 = vmatprep.subr.bf16.mxu0 0
    %1089 = vmatpush1.bf16.msra.mxu0 0
    %1090 = vmatprep.subr.bf16.mxu0 0
    %1091 = vmatpush1.bf16.msra.mxu0 0
    %1092 = vmatprep.subr.bf16.mxu0 0
    %1093 = vmatpush1.bf16.msra.mxu0 0
    %1094 = vmatprep.subr.bf16.mxu0 0
    %1095 = vmatpush1.bf16.msra.mxu0 0
    %1096 = vmatprep.mubr.bf16.mxu0 0
    %1097 = vmatmul.mubr.bf16.gmra.mrb[0].mxu0 %v1062
    %v1098 = vpop.f32.mrb[0].mxu0
    %v1099 = vadd.f32 0.0, %v1098
    %v1100 = vpop.f32.mrb[0].mxu0
    %v1101 = vpop.f32.mrb[0].mxu0
    %v1102 = vpop.f32.mrb[0].mxu0
    %1103 = vdwg.mxu0
    %v1104 = vadd.f32 %v1056, %v1099
    %v1105 = vxor.u32 %v1055, 2147483648
    %v1106 = vmul.f32 %v1105, 1.442695
    %v1107 = vpow.pop %v1106
    %v1108 = vadd.f32 %v1107, 1.0
    %v1109 = vrcp.pop %v1108
    %v1110 = vmul.f32 1.0, %v1109
    %v1111 = vtanh.pop %v1055
    %v1112 = vmul.f32 %v1110, %v964
    %1114 = vrot.lane.b32.xlu0 %v1111, 64
    %v1115 = vpop.permute.xlu0 %1114
    %v1117 = vmul.f32 %v1110, %v1115
    %1119 = vrot.lane.b32.xlu0 %v1117, 32
    %v1120 = vpop.permute.xlu0 %1119
    %v1122 = vadd.f32 %v1112, %v1120
    %v1123 = vtanh.pop %v1122
    %1125 = vrot.lane.b32.xlu0 %v1123, 64
    %v1126 = vpop.permute.xlu0 %1125
    %v1128 = vmul.f32 %v1110, %v1126
    %vm1129 = vcmp.gt.s32.totalorder %v276, 3
    %v1130 = vsel %vm1129, 1, 0
    %1131 = vset.pattern.permute.xlu0 0
    %1132 = vperm.xlu0 %1131, %v1130
    %v1133 = vpop.permute.xlu0 %1132
    %vm1134 = vcmp.eq.s32.totalorder %v1133, 1
    %v1135 = vsel %vm1134, %v1128, %v963
    %v1136 = vsel %vm1134, %v1122, %v964
    %v1137 = vxor.u32 %v1104, 2147483648
    %v1138 = vmul.f32 %v1137, 1.442695
    %v1139 = vpow.pop %v1138
    %v1140 = vadd.f32 %v1139, 1.0
    %v1141 = vrcp.pop %v1140
    %v1142 = vmul.f32 1.0, %v1141
    %v1143 = vtanh.pop %v1104
    %v1144 = vmul.f32 %v1142, %v996
    %1146 = vrot.lane.b32.xlu0 %v1143, 64
    %v1147 = vpop.permute.xlu0 %1146
    %v1149 = vmul.f32 %v1142, %v1147
    %1151 = vrot.lane.b32.xlu0 %v1149, 32
    %v1152 = vpop.permute.xlu0 %1151
    %v1154 = vadd.f32 %v1144, %v1152
    %v1155 = vtanh.pop %v1154
    %1157 = vrot.lane.b32.xlu0 %v1155, 64
    %v1158 = vpop.permute.xlu0 %1157
    %v1160 = vmul.f32 %v1142, %v1158
    %vm1161 = vcmp.gt.s32.totalorder %v276, 4
    %v1162 = vsel %vm1161, 1, 0
    %1163 = vset.pattern.permute.xlu0 0
    %1164 = vperm.xlu0 %1163, %v1162
    %v1165 = vpop.permute.xlu0 %1164
    %vm1166 = vcmp.eq.s32.totalorder %v1165, 1
    %v1167 = vsel %vm1166, %v1160, %v995
    %v1168 = vsel %vm1166, %v1154, %v996
    %1170 = vrot.lane.b32.xlu0 %v1128, 32
    %v1171 = vpop.permute.xlu0 %1170
    %1173 = vst.msk [vmem:[#allocation2 + $0x6] sm:$0x3] %vm656, %v1171
    %1175 = vrot.lane.b32.xlu0 %v1160, 32
    %v1176 = vpop.permute.xlu0 %1175
    %1178 = vst.msk [vmem:[#allocation3 + $0x8] sm:$0x3] %vm656, %v1176
    %v1179 = vld [vmem:[#allocation4 + $0x8] sm:$0x3]
    %v1180 = vpack.c.bf16 %v1135, %v1135
    %1182 = vrot.lane.b32.xlu0 %v1180, 32
    %v1183 = vpop.permute.xlu0 %1182
    %v1185 = vsel %vm501, %v1183, 0
    %1187 = vmatprep.subr.bf16.mxu0 0
    %1188 = vmatpush1.bf16.msra.mxu0 %v492
    %1189 = vmatprep.subr.bf16.mxu0 0
    %1190 = vmatpush1.bf16.msra.mxu0 %v493
    %1191 = vmatprep.subr.bf16.mxu0 0
    %1192 = vmatpush1.bf16.msra.mxu0 0
    %1193 = vmatprep.subr.bf16.mxu0 0
    %1194 = vmatpush1.bf16.msra.mxu0 0
    %1195 = vmatprep.subr.bf16.mxu0 0
    %1196 = vmatpush1.bf16.msra.mxu0 0
    %1197 = vmatprep.subr.bf16.mxu0 0
    %1198 = vmatpush1.bf16.msra.mxu0 0
    %1199 = vmatprep.subr.bf16.mxu0 0
    %1200 = vmatpush1.bf16.msra.mxu0 0
    %1201 = vmatprep.subr.bf16.mxu0 0
    %1202 = vmatpush1.bf16.msra.mxu0 0
    %1203 = vmatprep.subr.bf16.mxu0 0
    %1204 = vmatpush1.bf16.msra.mxu0 0
    %1205 = vmatprep.subr.bf16.mxu0 0
    %1206 = vmatpush1.bf16.msra.mxu0 0
    %1207 = vmatprep.subr.bf16.mxu0 0
    %1208 = vmatpush1.bf16.msra.mxu0 0
    %1209 = vmatprep.subr.bf16.mxu0 0
    %1210 = vmatpush1.bf16.msra.mxu0 0
    %1211 = vmatprep.subr.bf16.mxu0 0
    %1212 = vmatpush1.bf16.msra.mxu0 0
    %1213 = vmatprep.subr.bf16.mxu0 0
    %1214 = vmatpush1.bf16.msra.mxu0 0
    %1215 = vmatprep.subr.bf16.mxu0 0
    %1216 = vmatpush1.bf16.msra.mxu0 0
    %1217 = vmatprep.subr.bf16.mxu0 0
    %1218 = vmatpush1.bf16.msra.mxu0 0
    %1219 = vmatprep.mubr.bf16.mxu0 0
    %1220 = vmatmul.mubr.bf16.gmra.mrb[0].mxu0 %v1185
    %v1221 = vpop.f32.mrb[0].mxu0
    %v1222 = vadd.f32 0.0, %v1221
    %v1223 = vpop.f32.mrb[0].mxu0
    %v1224 = vpop.f32.mrb[0].mxu0
    %v1225 = vpop.f32.mrb[0].mxu0
    %1226 = vdwg.mxu0
    %v1227 = vadd.f32 %v1179, %v1222
    %v1228 = vld [vmem:[#allocation5 + $0x6] sm:$0x3]
    %v1229 = vpack.c.bf16 %v1167, %v1167
    %1231 = vrot.lane.b32.xlu0 %v1229, 32
    %v1232 = vpop.permute.xlu0 %1231
    %v1234 = vsel %vm501, %v1232, 0
    %1236 = vmatprep.subr.bf16.mxu0 0
    %1237 = vmatpush1.bf16.msra.mxu0 %v498
    %1238 = vmatprep.subr.bf16.mxu0 0
    %1239 = vmatpush1.bf16.msra.mxu0 %v499
    %1240 = vmatprep.subr.bf16.mxu0 0
    %1241 = vmatpush1.bf16.msra.mxu0 0
    %1242 = vmatprep.subr.bf16.mxu0 0
    %1243 = vmatpush1.bf16.msra.mxu0 0
    %1244 = vmatprep.subr.bf16.mxu0 0
    %1245 = vmatpush1.bf16.msra.mxu0 0
    %1246 = vmatprep.subr.bf16.mxu0 0
    %1247 = vmatpush1.bf16.msra.mxu0 0
    %1248 = vmatprep.subr.bf16.mxu0 0
    %1249 = vmatpush1.bf16.msra.mxu0 0
    %1250 = vmatprep.subr.bf16.mxu0 0
    %1251 = vmatpush1.bf16.msra.mxu0 0
    %1252 = vmatprep.subr.bf16.mxu0 0
    %1253 = vmatpush1.bf16.msra.mxu0 0
    %1254 = vmatprep.subr.bf16.mxu0 0
    %1255 = vmatpush1.bf16.msra.mxu0 0
    %1256 = vmatprep.subr.bf16.mxu0 0
    %1257 = vmatpush1.bf16.msra.mxu0 0
    %1258 = vmatprep.subr.bf16.mxu0 0
    %1259 = vmatpush1.bf16.msra.mxu0 0
    %1260 = vmatprep.subr.bf16.mxu0 0
    %1261 = vmatpush1.bf16.msra.mxu0 0
    %1262 = vmatprep.subr.bf16.mxu0 0
    %1263 = vmatpush1.bf16.msra.mxu0 0
    %1264 = vmatprep.subr.bf16.mxu0 0
    %1265 = vmatpush1.bf16.msra.mxu0 0
    %1266 = vmatprep.subr.bf16.mxu0 0
    %1267 = vmatpush1.bf16.msra.mxu0 0
    %1268 = vmatprep.mubr.bf16.mxu0 0
    %1269 = vmatmul.mubr.bf16.gmra.mrb[0].mxu0 %v1234
    %v1270 = vpop.f32.mrb[0].mxu0
    %v1271 = vadd.f32 0.0, %v1270
    %v1272 = vpop.f32.mrb[0].mxu0
    %v1273 = vpop.f32.mrb[0].mxu0
    %v1274 = vpop.f32.mrb[0].mxu0
    %1275 = vdwg.mxu0
    %v1276 = vadd.f32 %v1228, %v1271
    %v1277 = vxor.u32 %v1227, 2147483648
    %v1278 = vmul.f32 %v1277, 1.442695
    %v1279 = vpow.pop %v1278
    %v1280 = vadd.f32 %v1279, 1.0
    %v1281 = vrcp.pop %v1280
    %v1282 = vmul.f32 1.0, %v1281
    %v1283 = vtanh.pop %v1227
    %v1284 = vmul.f32 %v1282, %v1136
    %1286 = vrot.lane.b32.xlu0 %v1283, 64
    %v1287 = vpop.permute.xlu0 %1286
    %v1289 = vmul.f32 %v1282, %v1287
    %1291 = vrot.lane.b32.xlu0 %v1289, 32
    %v1292 = vpop.permute.xlu0 %1291
    %v1294 = vadd.f32 %v1284, %v1292
    %v1295 = vtanh.pop %v1294
    %1297 = vrot.lane.b32.xlu0 %v1295, 64
    %v1298 = vpop.permute.xlu0 %1297
    %v1300 = vmul.f32 %v1282, %v1298
    %v1301 = vsel %vm1166, %v1300, %v1135
    %v1302 = vsel %vm1166, %v1294, %v1136
    %v1303 = vxor.u32 %v1276, 2147483648
    %v1304 = vmul.f32 %v1303, 1.442695
    %v1305 = vpow.pop %v1304
    %v1306 = vadd.f32 %v1305, 1.0
    %v1307 = vrcp.pop %v1306
    %v1308 = vmul.f32 1.0, %v1307
    %v1309 = vtanh.pop %v1276
    %v1310 = vmul.f32 %v1308, %v1168
    %1312 = vrot.lane.b32.xlu0 %v1309, 64
    %v1313 = vpop.permute.xlu0 %1312
    %v1315 = vmul.f32 %v1308, %v1313
    %1317 = vrot.lane.b32.xlu0 %v1315, 32
    %v1318 = vpop.permute.xlu0 %1317
    %v1320 = vadd.f32 %v1310, %v1318
    %v1321 = vtanh.pop %v1320
    %1323 = vrot.lane.b32.xlu0 %v1321, 64
    %v1324 = vpop.permute.xlu0 %1323
    %v1326 = vmul.f32 %v1308, %v1324
    %v1327 = vsel %vm1134, %v1326, %v1167
    %v1328 = vsel %vm1134, %v1320, %v1168
    %1330 = vrot.lane.b32.xlu0 %v1300, 32
    %v1331 = vpop.permute.xlu0 %1330
    %1333 = vst.msk [vmem:[#allocation2 + $0x8] sm:$0x3] %vm656, %v1331
    %1335 = vrot.lane.b32.xlu0 %v1326, 32
    %v1336 = vpop.permute.xlu0 %1335
    %1338 = vst.msk [vmem:[#allocation3 + $0x6] sm:$0x3] %vm656, %v1336
    %v1339 = vld [vmem:[#allocation4 + $0xa] sm:$0x3]
    %v1340 = vpack.c.bf16 %v1301, %v1301
    %1342 = vrot.lane.b32.xlu0 %v1340, 32
    %v1343 = vpop.permute.xlu0 %1342
    %v1345 = vsel %vm501, %v1343, 0
    %1347 = vmatprep.subr.bf16.mxu0 0
    %1348 = vmatpush1.bf16.msra.mxu0 %v492
    %1349 = vmatprep.subr.bf16.mxu0 0
    %1350 = vmatpush1.bf16.msra.mxu0 %v493
    %1351 = vmatprep.subr.bf16.mxu0 0
    %1352 = vmatpush1.bf16.msra.mxu0 0
    %1353 = vmatprep.subr.bf16.mxu0 0
    %1354 = vmatpush1.bf16.msra.mxu0 0
    %1355 = vmatprep.subr.bf16.mxu0 0
    %1356 = vmatpush1.bf16.msra.mxu0 0
    %1357 = vmatprep.subr.bf16.mxu0 0
    %1358 = vmatpush1.bf16.msra.mxu0 0
    %1359 = vmatprep.subr.bf16.mxu0 0
    %1360 = vmatpush1.bf16.msra.mxu0 0
    %1361 = vmatprep.subr.bf16.mxu0 0
    %1362 = vmatpush1.bf16.msra.mxu0 0
    %1363 = vmatprep.subr.bf16.mxu0 0
    %1364 = vmatpush1.bf16.msra.mxu0 0
    %1365 = vmatprep.subr.bf16.mxu0 0
    %1366 = vmatpush1.bf16.msra.mxu0 0
    %1367 = vmatprep.subr.bf16.mxu0 0
    %1368 = vmatpush1.bf16.msra.mxu0 0
    %1369 = vmatprep.subr.bf16.mxu0 0
    %1370 = vmatpush1.bf16.msra.mxu0 0
    %1371 = vmatprep.subr.bf16.mxu0 0
    %1372 = vmatpush1.bf16.msra.mxu0 0
    %1373 = vmatprep.subr.bf16.mxu0 0
    %1374 = vmatpush1.bf16.msra.mxu0 0
    %1375 = vmatprep.subr.bf16.mxu0 0
    %1376 = vmatpush1.bf16.msra.mxu0 0
    %1377 = vmatprep.subr.bf16.mxu0 0
    %1378 = vmatpush1.bf16.msra.mxu0 0
    %1379 = vmatprep.mubr.bf16.mxu0 0
    %1380 = vmatmul.mubr.bf16.gmra.mrb[0].mxu0 %v1345
    %v1381 = vpop.f32.mrb[0].mxu0
    %v1382 = vadd.f32 0.0, %v1381
    %v1383 = vpop.f32.mrb[0].mxu0
    %v1384 = vpop.f32.mrb[0].mxu0
    %v1385 = vpop.f32.mrb[0].mxu0
    %1386 = vdwg.mxu0
    %v1387 = vadd.f32 %v1339, %v1382
    %v1388 = vld [vmem:[#allocation5 + $0x4] sm:$0x3]
    %v1389 = vpack.c.bf16 %v1327, %v1327
    %1391 = vrot.lane.b32.xlu0 %v1389, 32
    %v1392 = vpop.permute.xlu0 %1391
    %v1394 = vsel %vm501, %v1392, 0
    %1396 = vmatprep.subr.bf16.mxu0 0
    %1397 = vmatpush1.bf16.msra.mxu0 %v498
    %1398 = vmatprep.subr.bf16.mxu0 0
    %1399 = vmatpush1.bf16.msra.mxu0 %v499
    %1400 = vmatprep.subr.bf16.mxu0 0
    %1401 = vmatpush1.bf16.msra.mxu0 0
    %1402 = vmatprep.subr.bf16.mxu0 0
    %1403 = vmatpush1.bf16.msra.mxu0 0
    %1404 = vmatprep.subr.bf16.mxu0 0
    %1405 = vmatpush1.bf16.msra.mxu0 0
    %1406 = vmatprep.subr.bf16.mxu0 0
    %1407 = vmatpush1.bf16.msra.mxu0 0
    %1408 = vmatprep.subr.bf16.mxu0 0
    %1409 = vmatpush1.bf16.msra.mxu0 0
    %1410 = vmatprep.subr.bf16.mxu0 0
    %1411 = vmatpush1.bf16.msra.mxu0 0
    %1412 = vmatprep.subr.bf16.mxu0 0
    %1413 = vmatpush1.bf16.msra.mxu0 0
    %1414 = vmatprep.subr.bf16.mxu0 0
    %1415 = vmatpush1.bf16.msra.mxu0 0
    %1416 = vmatprep.subr.bf16.mxu0 0
    %1417 = vmatpush1.bf16.msra.mxu0 0
    %1418 = vmatprep.subr.bf16.mxu0 0
    %1419 = vmatpush1.bf16.msra.mxu0 0
    %1420 = vmatprep.subr.bf16.mxu0 0
    %1421 = vmatpush1.bf16.msra.mxu0 0
    %1422 = vmatprep.subr.bf16.mxu0 0
    %1423 = vmatpush1.bf16.msra.mxu0 0
    %1424 = vmatprep.subr.bf16.mxu0 0
    %1425 = vmatpush1.bf16.msra.mxu0 0
    %1426 = vmatprep.subr.bf16.mxu0 0
    %1427 = vmatpush1.bf16.msra.mxu0 0
    %1428 = vmatprep.mubr.bf16.mxu0 0
    %1429 = vmatmul.mubr.bf16.gmra.mrb[0].mxu0 %v1394
    %v1430 = vpop.f32.mrb[0].mxu0
    %v1431 = vadd.f32 0.0, %v1430
    %v1432 = vpop.f32.mrb[0].mxu0
    %v1433 = vpop.f32.mrb[0].mxu0
    %v1434 = vpop.f32.mrb[0].mxu0
    %1435 = vdwg.mxu0
    %v1436 = vadd.f32 %v1388, %v1431
    %v1437 = vxor.u32 %v1387, 2147483648
    %v1438 = vmul.f32 %v1437, 1.442695
    %v1439 = vpow.pop %v1438
    %v1440 = vadd.f32 %v1439, 1.0
    %v1441 = vrcp.pop %v1440
    %v1442 = vmul.f32 1.0, %v1441
    %v1443 = vtanh.pop %v1387
    %v1444 = vmul.f32 %v1442, %v1302
    %1446 = vrot.lane.b32.xlu0 %v1443, 64
    %v1447 = vpop.permute.xlu0 %1446
    %v1449 = vmul.f32 %v1442, %v1447
    %1451 = vrot.lane.b32.xlu0 %v1449, 32
    %v1452 = vpop.permute.xlu0 %1451
    %v1454 = vadd.f32 %v1444, %v1452
    %v1455 = vtanh.pop %v1454
    %1457 = vrot.lane.b32.xlu0 %v1455, 64
    %v1458 = vpop.permute.xlu0 %1457
    %v1460 = vmul.f32 %v1442, %v1458
    %v1461 = vsel %vm994, %v1460, %v1301
    %v1462 = vsel %vm994, %v1454, %v1302
    %v1463 = vxor.u32 %v1436, 2147483648
    %v1464 = vmul.f32 %v1463, 1.442695
    %v1465 = vpow.pop %v1464
    %v1466 = vadd.f32 %v1465, 1.0
    %v1467 = vrcp.pop %v1466
    %v1468 = vmul.f32 1.0, %v1467
    %v1469 = vtanh.pop %v1436
    %v1470 = vmul.f32 %v1468, %v1328
    %1472 = vrot.lane.b32.xlu0 %v1469, 64
    %v1473 = vpop.permute.xlu0 %1472
    %v1475 = vmul.f32 %v1468, %v1473
    %1477 = vrot.lane.b32.xlu0 %v1475, 32
    %v1478 = vpop.permute.xlu0 %1477
    %v1480 = vadd.f32 %v1470, %v1478
    %v1481 = vtanh.pop %v1480
    %1483 = vrot.lane.b32.xlu0 %v1481, 64
    %v1484 = vpop.permute.xlu0 %1483
    %v1486 = vmul.f32 %v1468, %v1484
    %v1487 = vsel %vm962, %v1486, %v1327
    %v1488 = vsel %vm962, %v1480, %v1328
    %1490 = vrot.lane.b32.xlu0 %v1460, 32
    %v1491 = vpop.permute.xlu0 %1490
    %1493 = vst.msk [vmem:[#allocation2 + $0xa] sm:$0x3] %vm656, %v1491
    %1495 = vrot.lane.b32.xlu0 %v1486, 32
    %v1496 = vpop.permute.xlu0 %1495
    %1498 = vst.msk [vmem:[#allocation3 + $0x4] sm:$0x3] %vm656, %v1496
    %v1499 = vld [vmem:[#allocation4 + $0xc] sm:$0x3]
    %v1500 = vpack.c.bf16 %v1461, %v1461
    %1502 = vrot.lane.b32.xlu0 %v1500, 32
    %v1503 = vpop.permute.xlu0 %1502
    %v1505 = vsel %vm501, %v1503, 0
    %1507 = vmatprep.subr.bf16.mxu0 0
    %1508 = vmatpush1.bf16.msra.mxu0 %v492
    %1509 = vmatprep.subr.bf16.mxu0 0
    %1510 = vmatpush1.bf16.msra.mxu0 %v493
    %1511 = vmatprep.subr.bf16.mxu0 0
    %1512 = vmatpush1.bf16.msra.mxu0 0
    %1513 = vmatprep.subr.bf16.mxu0 0
    %1514 = vmatpush1.bf16.msra.mxu0 0
    %1515 = vmatprep.subr.bf16.mxu0 0
    %1516 = vmatpush1.bf16.msra.mxu0 0
    %1517 = vmatprep.subr.bf16.mxu0 0
    %1518 = vmatpush1.bf16.msra.mxu0 0
    %1519 = vmatprep.subr.bf16.mxu0 0
    %1520 = vmatpush1.bf16.msra.mxu0 0
    %1521 = vmatprep.subr.bf16.mxu0 0
    %1522 = vmatpush1.bf16.msra.mxu0 0
    %1523 = vmatprep.subr.bf16.mxu0 0
    %1524 = vmatpush1.bf16.msra.mxu0 0
    %1525 = vmatprep.subr.bf16.mxu0 0
    %1526 = vmatpush1.bf16.msra.mxu0 0
    %1527 = vmatprep.subr.bf16.mxu0 0
    %1528 = vmatpush1.bf16.msra.mxu0 0
    %1529 = vmatprep.subr.bf16.mxu0 0
    %1530 = vmatpush1.bf16.msra.mxu0 0
    %1531 = vmatprep.subr.bf16.mxu0 0
    %1532 = vmatpush1.bf16.msra.mxu0 0
    %1533 = vmatprep.subr.bf16.mxu0 0
    %1534 = vmatpush1.bf16.msra.mxu0 0
    %1535 = vmatprep.subr.bf16.mxu0 0
    %1536 = vmatpush1.bf16.msra.mxu0 0
    %1537 = vmatprep.subr.bf16.mxu0 0
    %1538 = vmatpush1.bf16.msra.mxu0 0
    %1539 = vmatprep.mubr.bf16.mxu0 0
    %1540 = vmatmul.mubr.bf16.gmra.mrb[0].mxu0 %v1505
    %v1541 = vpop.f32.mrb[0].mxu0
    %v1542 = vadd.f32 0.0, %v1541
    %v1543 = vpop.f32.mrb[0].mxu0
    %v1544 = vpop.f32.mrb[0].mxu0
    %v1545 = vpop.f32.mrb[0].mxu0
    %1546 = vdwg.mxu0
    %v1547 = vadd.f32 %v1499, %v1542
    %v1548 = vld [vmem:[#allocation5 + $0x2] sm:$0x3]
    %v1549 = vpack.c.bf16 %v1487, %v1487
    %1551 = vrot.lane.b32.xlu0 %v1549, 32
    %v1552 = vpop.permute.xlu0 %1551
    %v1554 = vsel %vm501, %v1552, 0
    %1556 = vmatprep.subr.bf16.mxu0 0
    %1557 = vmatpush1.bf16.msra.mxu0 %v498
    %1558 = vmatprep.subr.bf16.mxu0 0
    %1559 = vmatpush1.bf16.msra.mxu0 %v499
    %1560 = vmatprep.subr.bf16.mxu0 0
    %1561 = vmatpush1.bf16.msra.mxu0 0
    %1562 = vmatprep.subr.bf16.mxu0 0
    %1563 = vmatpush1.bf16.msra.mxu0 0
    %1564 = vmatprep.subr.bf16.mxu0 0
    %1565 = vmatpush1.bf16.msra.mxu0 0
    %1566 = vmatprep.subr.bf16.mxu0 0
    %1567 = vmatpush1.bf16.msra.mxu0 0
    %1568 = vmatprep.subr.bf16.mxu0 0
    %1569 = vmatpush1.bf16.msra.mxu0 0
    %1570 = vmatprep.subr.bf16.mxu0 0
    %1571 = vmatpush1.bf16.msra.mxu0 0
    %1572 = vmatprep.subr.bf16.mxu0 0
    %1573 = vmatpush1.bf16.msra.mxu0 0
    %1574 = vmatprep.subr.bf16.mxu0 0
    %1575 = vmatpush1.bf16.msra.mxu0 0
    %1576 = vmatprep.subr.bf16.mxu0 0
    %1577 = vmatpush1.bf16.msra.mxu0 0
    %1578 = vmatprep.subr.bf16.mxu0 0
    %1579 = vmatpush1.bf16.msra.mxu0 0
    %1580 = vmatprep.subr.bf16.mxu0 0
    %1581 = vmatpush1.bf16.msra.mxu0 0
    %1582 = vmatprep.subr.bf16.mxu0 0
    %1583 = vmatpush1.bf16.msra.mxu0 0
    %1584 = vmatprep.subr.bf16.mxu0 0
    %1585 = vmatpush1.bf16.msra.mxu0 0
    %1586 = vmatprep.subr.bf16.mxu0 0
    %1587 = vmatpush1.bf16.msra.mxu0 0
    %1588 = vmatprep.mubr.bf16.mxu0 0
    %1589 = vmatmul.mubr.bf16.gmra.mrb[0].mxu0 %v1554
    %v1590 = vpop.f32.mrb[0].mxu0
    %v1591 = vadd.f32 0.0, %v1590
    %v1592 = vpop.f32.mrb[0].mxu0
    %v1593 = vpop.f32.mrb[0].mxu0
    %v1594 = vpop.f32.mrb[0].mxu0
    %1595 = vdwg.mxu0
    %v1596 = vadd.f32 %v1548, %v1591
    %v1597 = vxor.u32 %v1547, 2147483648
    %v1598 = vmul.f32 %v1597, 1.442695
    %v1599 = vpow.pop %v1598
    %v1600 = vadd.f32 %v1599, 1.0
    %v1601 = vrcp.pop %v1600
    %v1602 = vmul.f32 1.0, %v1601
    %v1603 = vtanh.pop %v1547
    %v1604 = vmul.f32 %v1602, %v1462
    %1606 = vrot.lane.b32.xlu0 %v1603, 64
    %v1607 = vpop.permute.xlu0 %1606
    %v1609 = vmul.f32 %v1602, %v1607
    %1611 = vrot.lane.b32.xlu0 %v1609, 32
    %v1612 = vpop.permute.xlu0 %1611
    %v1614 = vadd.f32 %v1604, %v1612
    %v1615 = vtanh.pop %v1614
    %1617 = vrot.lane.b32.xlu0 %v1615, 64
    %v1618 = vpop.permute.xlu0 %1617
    %v1620 = vmul.f32 %v1602, %v1618
    %v1621 = vsel %vm822, %v1620, %v1461
    %v1622 = vsel %vm822, %v1614, %v1462
    %v1623 = vxor.u32 %v1596, 2147483648
    %v1624 = vmul.f32 %v1623, 1.442695
    %v1625 = vpow.pop %v1624
    %v1626 = vadd.f32 %v1625, 1.0
    %v1627 = vrcp.pop %v1626
    %v1628 = vmul.f32 1.0, %v1627
    %v1629 = vtanh.pop %v1596
    %v1630 = vmul.f32 %v1628, %v1488
    %1632 = vrot.lane.b32.xlu0 %v1629, 64
    %v1633 = vpop.permute.xlu0 %1632
    %v1635 = vmul.f32 %v1628, %v1633
    %1637 = vrot.lane.b32.xlu0 %v1635, 32
    %v1638 = vpop.permute.xlu0 %1637
    %v1640 = vadd.f32 %v1630, %v1638
    %v1641 = vtanh.pop %v1640
    %1643 = vrot.lane.b32.xlu0 %v1641, 64
    %v1644 = vpop.permute.xlu0 %1643
    %v1646 = vmul.f32 %v1628, %v1644
    %v1647 = vsel %vm790, %v1646, %v1487
    %v1648 = vsel %vm790, %v1640, %v1488
    %1650 = vrot.lane.b32.xlu0 %v1620, 32
    %v1651 = vpop.permute.xlu0 %1650
    %1653 = vst.msk [vmem:[#allocation2 + $0xc] sm:$0x3] %vm656, %v1651
    %1655 = vrot.lane.b32.xlu0 %v1646, 32
    %v1656 = vpop.permute.xlu0 %1655
    %1658 = vst.msk [vmem:[#allocation3 + $0x2] sm:$0x3] %vm656, %v1656
    %v1659 = vld [vmem:[#allocation4 + $0xe] sm:$0x3]
    %v1660 = vpack.c.bf16 %v1621, %v1621
    %1662 = vrot.lane.b32.xlu0 %v1660, 32
    %v1663 = vpop.permute.xlu0 %1662
    %v1665 = vsel %vm501, %v1663, 0
    %1667 = vmatprep.subr.bf16.mxu0 0
    %1668 = vmatpush1.bf16.msra.mxu0 %v492
    %1669 = vmatprep.subr.bf16.mxu0 0
    %1670 = vmatpush1.bf16.msra.mxu0 %v493
    %1671 = vmatprep.subr.bf16.mxu0 0
    %1672 = vmatpush1.bf16.msra.mxu0 0
    %1673 = vmatprep.subr.bf16.mxu0 0
    %1674 = vmatpush1.bf16.msra.mxu0 0
    %1675 = vmatprep.subr.bf16.mxu0 0
    %1676 = vmatpush1.bf16.msra.mxu0 0
    %1677 = vmatprep.subr.bf16.mxu0 0
    %1678 = vmatpush1.bf16.msra.mxu0 0
    %1679 = vmatprep.subr.bf16.mxu0 0
    %1680 = vmatpush1.bf16.msra.mxu0 0
    %1681 = vmatprep.subr.bf16.mxu0 0
    %1682 = vmatpush1.bf16.msra.mxu0 0
    %1683 = vmatprep.subr.bf16.mxu0 0
    %1684 = vmatpush1.bf16.msra.mxu0 0
    %1685 = vmatprep.subr.bf16.mxu0 0
    %1686 = vmatpush1.bf16.msra.mxu0 0
    %1687 = vmatprep.subr.bf16.mxu0 0
    %1688 = vmatpush1.bf16.msra.mxu0 0
    %1689 = vmatprep.subr.bf16.mxu0 0
    %1690 = vmatpush1.bf16.msra.mxu0 0
    %1691 = vmatprep.subr.bf16.mxu0 0
    %1692 = vmatpush1.bf16.msra.mxu0 0
    %1693 = vmatprep.subr.bf16.mxu0 0
    %1694 = vmatpush1.bf16.msra.mxu0 0
    %1695 = vmatprep.subr.bf16.mxu0 0
    %1696 = vmatpush1.bf16.msra.mxu0 0
    %1697 = vmatprep.subr.bf16.mxu0 0
    %1698 = vmatpush1.bf16.msra.mxu0 0
    %1699 = vmatprep.mubr.bf16.mxu0 0
    %1700 = vmatmul.mubr.bf16.gmra.mrb[0].mxu0 %v1665
    %v1701 = vpop.f32.mrb[0].mxu0
    %v1702 = vadd.f32 0.0, %v1701
    %v1703 = vpop.f32.mrb[0].mxu0
    %v1704 = vpop.f32.mrb[0].mxu0
    %v1705 = vpop.f32.mrb[0].mxu0
    %1706 = vdwg.mxu0
    %v1707 = vadd.f32 %v1659, %v1702
    %v1708 = vld [vmem:[#allocation5] sm:$0x3]
    %v1709 = vpack.c.bf16 %v1647, %v1647
    %1711 = vrot.lane.b32.xlu0 %v1709, 32
    %v1712 = vpop.permute.xlu0 %1711
    %v1714 = vsel %vm501, %v1712, 0
    %1716 = vmatprep.subr.bf16.mxu0 0
    %1717 = vmatpush1.bf16.msra.mxu0 %v498
    %1718 = vmatprep.subr.bf16.mxu0 0
    %1719 = vmatpush1.bf16.msra.mxu0 %v499
    %1720 = vmatprep.subr.bf16.mxu0 0
    %1721 = vmatpush1.bf16.msra.mxu0 0
    %1722 = vmatprep.subr.bf16.mxu0 0
    %1723 = vmatpush1.bf16.msra.mxu0 0
    %1724 = vmatprep.subr.bf16.mxu0 0
    %1725 = vmatpush1.bf16.msra.mxu0 0
    %1726 = vmatprep.subr.bf16.mxu0 0
    %1727 = vmatpush1.bf16.msra.mxu0 0
    %1728 = vmatprep.subr.bf16.mxu0 0
    %1729 = vmatpush1.bf16.msra.mxu0 0
    %1730 = vmatprep.subr.bf16.mxu0 0
    %1731 = vmatpush1.bf16.msra.mxu0 0
    %1732 = vmatprep.subr.bf16.mxu0 0
    %1733 = vmatpush1.bf16.msra.mxu0 0
    %1734 = vmatprep.subr.bf16.mxu0 0
    %1735 = vmatpush1.bf16.msra.mxu0 0
    %1736 = vmatprep.subr.bf16.mxu0 0
    %1737 = vmatpush1.bf16.msra.mxu0 0
    %1738 = vmatprep.subr.bf16.mxu0 0
    %1739 = vmatpush1.bf16.msra.mxu0 0
    %1740 = vmatprep.subr.bf16.mxu0 0
    %1741 = vmatpush1.bf16.msra.mxu0 0
    %1742 = vmatprep.subr.bf16.mxu0 0
    %1743 = vmatpush1.bf16.msra.mxu0 0
    %1744 = vmatprep.subr.bf16.mxu0 0
    %1745 = vmatpush1.bf16.msra.mxu0 0
    %1746 = vmatprep.subr.bf16.mxu0 0
    %1747 = vmatpush1.bf16.msra.mxu0 0
    %1748 = vmatprep.mubr.bf16.mxu0 0
    %1749 = vmatmul.mubr.bf16.gmra.mrb[0].mxu0 %v1714
    %v1750 = vpop.f32.mrb[0].mxu0
    %v1751 = vadd.f32 0.0, %v1750
    %v1752 = vpop.f32.mrb[0].mxu0
    %v1753 = vpop.f32.mrb[0].mxu0
    %v1754 = vpop.f32.mrb[0].mxu0
    %1755 = vdwg.mxu0
    %v1756 = vadd.f32 %v1708, %v1751
    %v1757 = vxor.u32 %v1707, 2147483648
    %v1758 = vmul.f32 %v1757, 1.442695
    %v1759 = vpow.pop %v1758
    %v1760 = vadd.f32 %v1759, 1.0
    %v1761 = vrcp.pop %v1760
    %v1762 = vmul.f32 1.0, %v1761
    %v1763 = vtanh.pop %v1707
    %v1764 = vmul.f32 %v1762, %v1622
    %1766 = vrot.lane.b32.xlu0 %v1763, 64
    %v1767 = vpop.permute.xlu0 %1766
    %v1769 = vmul.f32 %v1762, %v1767
    %1771 = vrot.lane.b32.xlu0 %v1769, 32
    %v1772 = vpop.permute.xlu0 %1771
    %v1774 = vadd.f32 %v1764, %v1772
    %v1775 = vtanh.pop %v1774
    %1777 = vrot.lane.b32.xlu0 %v1775, 64
    %v1778 = vpop.permute.xlu0 %1777
    %v1780 = vmul.f32 %v1762, %v1778
    %v1781 = vxor.u32 %v1756, 2147483648
    %v1782 = vmul.f32 %v1781, 1.442695
    %v1783 = vpow.pop %v1782
    %v1784 = vadd.f32 %v1783, 1.0
    %v1785 = vrcp.pop %v1784
    %v1786 = vmul.f32 1.0, %v1785
    %v1787 = vtanh.pop %v1756
    %v1788 = vmul.f32 %v1786, %v1648
    %1790 = vrot.lane.b32.xlu0 %v1787, 64
    %v1791 = vpop.permute.xlu0 %1790
    %v1793 = vmul.f32 %v1786, %v1791
    %1795 = vrot.lane.b32.xlu0 %v1793, 32
    %v1796 = vpop.permute.xlu0 %1795
    %v1798 = vadd.f32 %v1788, %v1796
    %v1799 = vtanh.pop %v1798
    %1801 = vrot.lane.b32.xlu0 %v1799, 64
    %v1802 = vpop.permute.xlu0 %1801
    %v1804 = vmul.f32 %v1786, %v1802
    %1806 = vrot.lane.b32.xlu0 %v1780, 32
    %v1807 = vpop.permute.xlu0 %1806
    %1809 = vst.msk [vmem:[#allocation2 + $0xe] sm:$0x3] %vm656, %v1807
    %1811 = vrot.lane.b32.xlu0 %v1804, 32
    %v1812 = vpop.permute.xlu0 %1811
    %1814 = vst.msk [vmem:[#allocation3] sm:$0x3] %vm656, %v1812
    %v1815 = vld [vmem:[#allocation2] sm:$0xff]
    %v1816 = vld [vmem:[#allocation2 + $0x8] sm:$0xff]
    %v1817 = vld [vmem:[#allocation3] sm:$0xff]
    %v1818 = vld [vmem:[#allocation3 + $0x8] sm:$0xff]
    %1821 = vrot.lane.b32.xlu0 %v1817, 32
    %v1822 = vpop.permute.xlu0 %1821
    %1823 = vrot.lane.b32.xlu0 %v1818, 32
    %v1824 = vpop.permute.xlu0 %1823
    %v1827 = vsel %vm501, %v1815, %v1822
    %v1828 = vsel %vm501, %v1816, %v1824
    %v1829 = vpack.c.bf16 %v1828, %v1827
    %v1830 = vld [vmem:[#allocation24] sm:$0xff]
    %v1831 = vld [vmem:[#allocation24 + $0x8] sm:$0xff]
    %v1832 = vld [vmem:[#allocation24 + $0x10] sm:$0xff]
    %v1833 = vld [vmem:[#allocation24 + $0x18] sm:$0xff]
    %v1834 = vld [vmem:[#allocation24 + $0x20] sm:$0xff]
    %v1835 = vld [vmem:[#allocation24 + $0x28] sm:$0xff]
    %v1836 = vld [vmem:[#allocation24 + $0x30] sm:$0xff]
    %v1837 = vld [vmem:[#allocation24 + $0x38] sm:$0xff]
    %v1838 = vpack.c.bf16 %v1831, %v1830
    %v1839 = vpack.c.bf16 %v1833, %v1832
    %v1840 = vpack.c.bf16 %v1835, %v1834
    %v1841 = vpack.c.bf16 %v1837, %v1836
    %v1842 = vld [vmem:[#allocation27] sm:$0x1]
    %v1844 = vlaneseq
    %v1845 = vshrl.u32 %v1844, 7
    %v1846 = vsub.s32 0, %v1845
    %v1847 = vrot.slane %v1842, %v1846
    %v1850 = vsel %vm379, %v1829, 0
    %1852 = vmatprep.subr.bf16.mxu0 0
    %1853 = vmatpush1.bf16.msra.mxu0 %v1838
    %1854 = vmatprep.subr.bf16.mxu0 0
    %1855 = vmatpush1.bf16.msra.mxu0 %v1839
    %1856 = vmatprep.subr.bf16.mxu0 0
    %1857 = vmatpush1.bf16.msra.mxu0 %v1840
    %1858 = vmatprep.subr.bf16.mxu0 0
    %1859 = vmatpush1.bf16.msra.mxu0 %v1841
    %1860 = vmatprep.subr.bf16.mxu0 0
    %1861 = vmatpush1.bf16.msra.mxu0 0
    %1862 = vmatprep.subr.bf16.mxu0 0
    %1863 = vmatpush1.bf16.msra.mxu0 0
    %1864 = vmatprep.subr.bf16.mxu0 0
    %1865 = vmatpush1.bf16.msra.mxu0 0
    %1866 = vmatprep.subr.bf16.mxu0 0
    %1867 = vmatpush1.bf16.msra.mxu0 0
    %1868 = vmatprep.subr.bf16.mxu0 0
    %1869 = vmatpush1.bf16.msra.mxu0 0
    %1870 = vmatprep.subr.bf16.mxu0 0
    %1871 = vmatpush1.bf16.msra.mxu0 0
    %1872 = vmatprep.subr.bf16.mxu0 0
    %1873 = vmatpush1.bf16.msra.mxu0 0
    %1874 = vmatprep.subr.bf16.mxu0 0
    %1875 = vmatpush1.bf16.msra.mxu0 0
    %1876 = vmatprep.subr.bf16.mxu0 0
    %1877 = vmatpush1.bf16.msra.mxu0 0
    %1878 = vmatprep.subr.bf16.mxu0 0
    %1879 = vmatpush1.bf16.msra.mxu0 0
    %1880 = vmatprep.subr.bf16.mxu0 0
    %1881 = vmatpush1.bf16.msra.mxu0 0
    %1882 = vmatprep.subr.bf16.mxu0 0
    %1883 = vmatpush1.bf16.msra.mxu0 0
    %1884 = vmatprep.mubr.bf16.mxu0 0
    %1885 = vmatmul.mubr.bf16.gmra.mrb[0].mxu0 %v1850
    %v1886 = vpop.f32.mrb[0].mxu0
    %v1887 = vadd.f32 %v1847, %v1886
    %v1888 = vpop.f32.mrb[0].mxu0
    %v1889 = vpop.f32.mrb[0].mxu0
    %v1890 = vadd.f32 %v1847, %v1889
    %v1891 = vpop.f32.mrb[0].mxu0
    %1892 = vdwg.mxu0
    %1893 = vst [vmem:[#allocation4] sm:$0xff] %v1887
    %1894 = vst [vmem:[#allocation4 + $0x8] sm:$0xff] %v1890
    %v1895 = vld [vmem:[#allocation29] sm:$0xff]
    %v1896 = vld [vmem:[#allocation29 + $0x8] sm:$0xff]
    %v1897 = vld [vmem:[#allocation29 + $0x10] sm:$0xff]
    %v1898 = vld [vmem:[#allocation29 + $0x18] sm:$0xff]
    %v1899 = vld [vmem:[#allocation29 + $0x20] sm:$0xff]
    %v1900 = vld [vmem:[#allocation29 + $0x28] sm:$0xff]
    %v1901 = vld [vmem:[#allocation29 + $0x30] sm:$0xff]
    %v1902 = vld [vmem:[#allocation29 + $0x38] sm:$0xff]
    %v1903 = vpack.c.bf16 %v1896, %v1895
    %v1904 = vpack.c.bf16 %v1898, %v1897
    %v1905 = vpack.c.bf16 %v1900, %v1899
    %v1906 = vpack.c.bf16 %v1902, %v1901
    %v1907 = vld [vmem:[#allocation32] sm:$0x1]
    %v1909 = vlaneseq
    %v1910 = vshrl.u32 %v1909, 7
    %v1911 = vsub.s32 0, %v1910
    %v1912 = vrot.slane %v1907, %v1911
    %1914 = vmatprep.subr.bf16.mxu0 0
    %1915 = vmatpush1.bf16.msra.mxu0 %v1903
    %1916 = vmatprep.subr.bf16.mxu0 0
    %1917 = vmatpush1.bf16.msra.mxu0 %v1904
    %1918 = vmatprep.subr.bf16.mxu0 0
    %1919 = vmatpush1.bf16.msra.mxu0 %v1905
    %1920 = vmatprep.subr.bf16.mxu0 0
    %1921 = vmatpush1.bf16.msra.mxu0 %v1906
    %1922 = vmatprep.subr.bf16.mxu0 0
    %1923 = vmatpush1.bf16.msra.mxu0 0
    %1924 = vmatprep.subr.bf16.mxu0 0
    %1925 = vmatpush1.bf16.msra.mxu0 0
    %1926 = vmatprep.subr.bf16.mxu0 0
    %1927 = vmatpush1.bf16.msra.mxu0 0
    %1928 = vmatprep.subr.bf16.mxu0 0
    %1929 = vmatpush1.bf16.msra.mxu0 0
    %1930 = vmatprep.subr.bf16.mxu0 0
    %1931 = vmatpush1.bf16.msra.mxu0 0
    %1932 = vmatprep.subr.bf16.mxu0 0
    %1933 = vmatpush1.bf16.msra.mxu0 0
    %1934 = vmatprep.subr.bf16.mxu0 0
    %1935 = vmatpush1.bf16.msra.mxu0 0
    %1936 = vmatprep.subr.bf16.mxu0 0
    %1937 = vmatpush1.bf16.msra.mxu0 0
    %1938 = vmatprep.subr.bf16.mxu0 0
    %1939 = vmatpush1.bf16.msra.mxu0 0
    %1940 = vmatprep.subr.bf16.mxu0 0
    %1941 = vmatpush1.bf16.msra.mxu0 0
    %1942 = vmatprep.subr.bf16.mxu0 0
    %1943 = vmatpush1.bf16.msra.mxu0 0
    %1944 = vmatprep.subr.bf16.mxu0 0
    %1945 = vmatpush1.bf16.msra.mxu0 0
    %1946 = vmatprep.mubr.bf16.mxu0 0
    %1947 = vmatmul.mubr.bf16.gmra.mrb[0].mxu0 %v1850
    %v1948 = vpop.f32.mrb[0].mxu0
    %v1949 = vadd.f32 %v1912, %v1948
    %v1950 = vpop.f32.mrb[0].mxu0
    %v1951 = vpop.f32.mrb[0].mxu0
    %v1952 = vadd.f32 %v1912, %v1951
    %v1953 = vpop.f32.mrb[0].mxu0
    %1954 = vdwg.mxu0
    %1955 = vst [vmem:[#allocation5] sm:$0xff] %v1949
    %1956 = vst [vmem:[#allocation5 + $0x8] sm:$0xff] %v1952
    %v1957 = vld [vmem:[#allocation26] sm:$0xff]
    %v1958 = vld [vmem:[#allocation26 + $0x8] sm:$0xff]
    %v1959 = vld [vmem:[#allocation26 + $0x10] sm:$0xff]
    %v1960 = vld [vmem:[#allocation26 + $0x18] sm:$0xff]
    %v1961 = vpack.c.bf16 %v1958, %v1957
    %v1962 = vpack.c.bf16 %v1960, %v1959
    %v1963 = vld [vmem:[#allocation30] sm:$0xff]
    %v1964 = vld [vmem:[#allocation30 + $0x8] sm:$0xff]
    %v1965 = vld [vmem:[#allocation30 + $0x10] sm:$0xff]
    %v1966 = vld [vmem:[#allocation30 + $0x18] sm:$0xff]
    %v1967 = vpack.c.bf16 %v1964, %v1963
    %v1968 = vpack.c.bf16 %v1966, %v1965
    %v1969 = vld [vmem:[#allocation4] sm:$0x3]
    %1970 = vmatprep.subr.bf16.mxu0 0
    %1971 = vmatpush1.bf16.msra.mxu0 %v1961
    %1972 = vmatprep.subr.bf16.mxu0 0
    %1973 = vmatpush1.bf16.msra.mxu0 %v1962
    %1974 = vmatprep.subr.bf16.mxu0 0
    %1975 = vmatpush1.bf16.msra.mxu0 0
    %1976 = vmatprep.subr.bf16.mxu0 0
    %1977 = vmatpush1.bf16.msra.mxu0 0
    %1978 = vmatprep.subr.bf16.mxu0 0
    %1979 = vmatpush1.bf16.msra.mxu0 0
    %1980 = vmatprep.subr.bf16.mxu0 0
    %1981 = vmatpush1.bf16.msra.mxu0 0
    %1982 = vmatprep.subr.bf16.mxu0 0
    %1983 = vmatpush1.bf16.msra.mxu0 0
    %1984 = vmatprep.subr.bf16.mxu0 0
    %1985 = vmatpush1.bf16.msra.mxu0 0
    %1986 = vmatprep.subr.bf16.mxu0 0
    %1987 = vmatpush1.bf16.msra.mxu0 0
    %1988 = vmatprep.subr.bf16.mxu0 0
    %1989 = vmatpush1.bf16.msra.mxu0 0
    %1990 = vmatprep.subr.bf16.mxu0 0
    %1991 = vmatpush1.bf16.msra.mxu0 0
    %1992 = vmatprep.subr.bf16.mxu0 0
    %1993 = vmatpush1.bf16.msra.mxu0 0
    %1994 = vmatprep.subr.bf16.mxu0 0
    %1995 = vmatpush1.bf16.msra.mxu0 0
    %1996 = vmatprep.subr.bf16.mxu0 0
    %1997 = vmatpush1.bf16.msra.mxu0 0
    %1998 = vmatprep.subr.bf16.mxu0 0
    %1999 = vmatpush1.bf16.msra.mxu0 0
    %2000 = vmatprep.subr.bf16.mxu0 0
    %2001 = vmatpush1.bf16.msra.mxu0 0
    %2002 = vmatprep.mubr.bf16.mxu0 0
    %2003 = vmatmul.mubr.bf16.gmra.mrb[0].mxu0 %v503
    %v2004 = vpop.f32.mrb[0].mxu0
    %v2005 = vadd.f32 0.0, %v2004
    %v2006 = vpop.f32.mrb[0].mxu0
    %v2007 = vpop.f32.mrb[0].mxu0
    %v2008 = vpop.f32.mrb[0].mxu0
    %2009 = vdwg.mxu0
    %v2010 = vadd.f32 %v1969, %v2005
    %v2011 = vld [vmem:[#allocation5 + $0xe] sm:$0x3]
    %2012 = vmatprep.subr.bf16.mxu0 0
    %2013 = vmatpush1.bf16.msra.mxu0 %v1967
    %2014 = vmatprep.subr.bf16.mxu0 0
    %2015 = vmatpush1.bf16.msra.mxu0 %v1968
    %2016 = vmatprep.subr.bf16.mxu0 0
    %2017 = vmatpush1.bf16.msra.mxu0 0
    %2018 = vmatprep.subr.bf16.mxu0 0
    %2019 = vmatpush1.bf16.msra.mxu0 0
    %2020 = vmatprep.subr.bf16.mxu0 0
    %2021 = vmatpush1.bf16.msra.mxu0 0
    %2022 = vmatprep.subr.bf16.mxu0 0
    %2023 = vmatpush1.bf16.msra.mxu0 0
    %2024 = vmatprep.subr.bf16.mxu0 0
    %2025 = vmatpush1.bf16.msra.mxu0 0
    %2026 = vmatprep.subr.bf16.mxu0 0
    %2027 = vmatpush1.bf16.msra.mxu0 0
    %2028 = vmatprep.subr.bf16.mxu0 0
    %2029 = vmatpush1.bf16.msra.mxu0 0
    %2030 = vmatprep.subr.bf16.mxu0 0
    %2031 = vmatpush1.bf16.msra.mxu0 0
    %2032 = vmatprep.subr.bf16.mxu0 0
    %2033 = vmatpush1.bf16.msra.mxu0 0
    %2034 = vmatprep.subr.bf16.mxu0 0
    %2035 = vmatpush1.bf16.msra.mxu0 0
    %2036 = vmatprep.subr.bf16.mxu0 0
    %2037 = vmatpush1.bf16.msra.mxu0 0
    %2038 = vmatprep.subr.bf16.mxu0 0
    %2039 = vmatpush1.bf16.msra.mxu0 0
    %2040 = vmatprep.subr.bf16.mxu0 0
    %2041 = vmatpush1.bf16.msra.mxu0 0
    %2042 = vmatprep.subr.bf16.mxu0 0
    %2043 = vmatpush1.bf16.msra.mxu0 0
    %2044 = vmatprep.mubr.bf16.mxu0 0
    %2045 = vmatmul.mubr.bf16.gmra.mrb[0].mxu0 %v503
    %v2046 = vpop.f32.mrb[0].mxu0
    %v2047 = vadd.f32 0.0, %v2046
    %v2048 = vpop.f32.mrb[0].mxu0
    %v2049 = vpop.f32.mrb[0].mxu0
    %v2050 = vpop.f32.mrb[0].mxu0
    %2051 = vdwg.mxu0
    %v2052 = vadd.f32 %v2011, %v2047
    %v2053 = vxor.u32 %v2010, 2147483648
    %v2054 = vmul.f32 %v2053, 1.442695
    %v2055 = vpow.pop %v2054
    %v2056 = vadd.f32 %v2055, 1.0
    %v2057 = vrcp.pop %v2056
    %v2058 = vmul.f32 1.0, %v2057
    %v2059 = vtanh.pop %v2010
    %v2060 = vmul.f32 %v2058, 0.0
    %2062 = vrot.lane.b32.xlu0 %v2059, 64
    %v2063 = vpop.permute.xlu0 %2062
    %v2065 = vmul.f32 %v2058, %v2063
    %2067 = vrot.lane.b32.xlu0 %v2065, 32
    %v2068 = vpop.permute.xlu0 %2067
    %v2070 = vadd.f32 %v2060, %v2068
    %v2071 = vtanh.pop %v2070
    %2073 = vrot.lane.b32.xlu0 %v2071, 64
    %v2074 = vpop.permute.xlu0 %2073
    %v2076 = vmul.f32 %v2058, %v2074
    %v2077 = vsel %vm617, %v2076, 0.0
    %v2078 = vsel %vm617, %v2070, 0.0
    %v2079 = vxor.u32 %v2052, 2147483648
    %v2080 = vmul.f32 %v2079, 1.442695
    %v2081 = vpow.pop %v2080
    %v2082 = vadd.f32 %v2081, 1.0
    %v2083 = vrcp.pop %v2082
    %v2084 = vmul.f32 1.0, %v2083
    %v2085 = vtanh.pop %v2052
    %v2086 = vmul.f32 %v2084, 0.0
    %2088 = vrot.lane.b32.xlu0 %v2085, 64
    %v2089 = vpop.permute.xlu0 %2088
    %v2091 = vmul.f32 %v2084, %v2089
    %2093 = vrot.lane.b32.xlu0 %v2091, 32
    %v2094 = vpop.permute.xlu0 %2093
    %v2096 = vadd.f32 %v2086, %v2094
    %v2097 = vtanh.pop %v2096
    %2099 = vrot.lane.b32.xlu0 %v2097, 64
    %v2100 = vpop.permute.xlu0 %2099
    %v2102 = vmul.f32 %v2084, %v2100
    %v2103 = vsel %vm649, %v2102, 0.0
    %v2104 = vsel %vm649, %v2096, 0.0
    %v2105 = vld [vmem:[#allocation4 + $0x2] sm:$0x3]
    %v2106 = vpack.c.bf16 %v2077, %v2077
    %2108 = vrot.lane.b32.xlu0 %v2106, 32
    %v2109 = vpop.permute.xlu0 %2108
    %v2111 = vsel %vm501, %v2109, 0
    %2113 = vmatprep.subr.bf16.mxu0 0
    %2114 = vmatpush1.bf16.msra.mxu0 %v1961
    %2115 = vmatprep.subr.bf16.mxu0 0
    %2116 = vmatpush1.bf16.msra.mxu0 %v1962
    %2117 = vmatprep.subr.bf16.mxu0 0
    %2118 = vmatpush1.bf16.msra.mxu0 0
    %2119 = vmatprep.subr.bf16.mxu0 0
    %2120 = vmatpush1.bf16.msra.mxu0 0
    %2121 = vmatprep.subr.bf16.mxu0 0
    %2122 = vmatpush1.bf16.msra.mxu0 0
    %2123 = vmatprep.subr.bf16.mxu0 0
    %2124 = vmatpush1.bf16.msra.mxu0 0
    %2125 = vmatprep.subr.bf16.mxu0 0
    %2126 = vmatpush1.bf16.msra.mxu0 0
    %2127 = vmatprep.subr.bf16.mxu0 0
    %2128 = vmatpush1.bf16.msra.mxu0 0
    %2129 = vmatprep.subr.bf16.mxu0 0
    %2130 = vmatpush1.bf16.msra.mxu0 0
    %2131 = vmatprep.subr.bf16.mxu0 0
    %2132 = vmatpush1.bf16.msra.mxu0 0
    %2133 = vmatprep.subr.bf16.mxu0 0
    %2134 = vmatpush1.bf16.msra.mxu0 0
    %2135 = vmatprep.subr.bf16.mxu0 0
    %2136 = vmatpush1.bf16.msra.mxu0 0
    %2137 = vmatprep.subr.bf16.mxu0 0
    %2138 = vmatpush1.bf16.msra.mxu0 0
    %2139 = vmatprep.subr.bf16.mxu0 0
    %2140 = vmatpush1.bf16.msra.mxu0 0
    %2141 = vmatprep.subr.bf16.mxu0 0
    %2142 = vmatpush1.bf16.msra.mxu0 0
    %2143 = vmatprep.subr.bf16.mxu0 0
    %2144 = vmatpush1.bf16.msra.mxu0 0
    %2145 = vmatprep.mubr.bf16.mxu0 0
    %2146 = vmatmul.mubr.bf16.gmra.mrb[0].mxu0 %v2111
    %v2147 = vpop.f32.mrb[0].mxu0
    %v2148 = vadd.f32 0.0, %v2147
    %v2149 = vpop.f32.mrb[0].mxu0
    %v2150 = vpop.f32.mrb[0].mxu0
    %v2151 = vpop.f32.mrb[0].mxu0
    %2152 = vdwg.mxu0
    %v2153 = vadd.f32 %v2105, %v2148
    %v2154 = vld [vmem:[#allocation5 + $0xc] sm:$0x3]
    %v2155 = vpack.c.bf16 %v2103, %v2103
    %2157 = vrot.lane.b32.xlu0 %v2155, 32
    %v2158 = vpop.permute.xlu0 %2157
    %v2160 = vsel %vm501, %v2158, 0
    %2162 = vmatprep.subr.bf16.mxu0 0
    %2163 = vmatpush1.bf16.msra.mxu0 %v1967
    %2164 = vmatprep.subr.bf16.mxu0 0
    %2165 = vmatpush1.bf16.msra.mxu0 %v1968
    %2166 = vmatprep.subr.bf16.mxu0 0
    %2167 = vmatpush1.bf16.msra.mxu0 0
    %2168 = vmatprep.subr.bf16.mxu0 0
    %2169 = vmatpush1.bf16.msra.mxu0 0
    %2170 = vmatprep.subr.bf16.mxu0 0
    %2171 = vmatpush1.bf16.msra.mxu0 0
    %2172 = vmatprep.subr.bf16.mxu0 0
    %2173 = vmatpush1.bf16.msra.mxu0 0
    %2174 = vmatprep.subr.bf16.mxu0 0
    %2175 = vmatpush1.bf16.msra.mxu0 0
    %2176 = vmatprep.subr.bf16.mxu0 0
    %2177 = vmatpush1.bf16.msra.mxu0 0
    %2178 = vmatprep.subr.bf16.mxu0 0
    %2179 = vmatpush1.bf16.msra.mxu0 0
    %2180 = vmatprep.subr.bf16.mxu0 0
    %2181 = vmatpush1.bf16.msra.mxu0 0
    %2182 = vmatprep.subr.bf16.mxu0 0
    %2183 = vmatpush1.bf16.msra.mxu0 0
    %2184 = vmatprep.subr.bf16.mxu0 0
    %2185 = vmatpush1.bf16.msra.mxu0 0
    %2186 = vmatprep.subr.bf16.mxu0 0
    %2187 = vmatpush1.bf16.msra.mxu0 0
    %2188 = vmatprep.subr.bf16.mxu0 0
    %2189 = vmatpush1.bf16.msra.mxu0 0
    %2190 = vmatprep.subr.bf16.mxu0 0
    %2191 = vmatpush1.bf16.msra.mxu0 0
    %2192 = vmatprep.subr.bf16.mxu0 0
    %2193 = vmatpush1.bf16.msra.mxu0 0
    %2194 = vmatprep.mubr.bf16.mxu0 0
    %2195 = vmatmul.mubr.bf16.gmra.mrb[0].mxu0 %v2160
    %v2196 = vpop.f32.mrb[0].mxu0
    %v2197 = vadd.f32 0.0, %v2196
    %v2198 = vpop.f32.mrb[0].mxu0
    %v2199 = vpop.f32.mrb[0].mxu0
    %v2200 = vpop.f32.mrb[0].mxu0
    %2201 = vdwg.mxu0
    %v2202 = vadd.f32 %v2154, %v2197
    %v2203 = vxor.u32 %v2153, 2147483648
    %v2204 = vmul.f32 %v2203, 1.442695
    %v2205 = vpow.pop %v2204
    %v2206 = vadd.f32 %v2205, 1.0
    %v2207 = vrcp.pop %v2206
    %v2208 = vmul.f32 1.0, %v2207
    %v2209 = vtanh.pop %v2153
    %v2210 = vmul.f32 %v2208, %v2078
    %2212 = vrot.lane.b32.xlu0 %v2209, 64
    %v2213 = vpop.permute.xlu0 %2212
    %v2215 = vmul.f32 %v2208, %v2213
    %2217 = vrot.lane.b32.xlu0 %v2215, 32
    %v2218 = vpop.permute.xlu0 %2217
    %v2220 = vadd.f32 %v2210, %v2218
    %v2221 = vtanh.pop %v2220
    %2223 = vrot.lane.b32.xlu0 %v2221, 64
    %v2224 = vpop.permute.xlu0 %2223
    %v2226 = vmul.f32 %v2208, %v2224
    %v2227 = vsel %vm790, %v2226, %v2077
    %v2228 = vsel %vm790, %v2220, %v2078
    %v2229 = vxor.u32 %v2202, 2147483648
    %v2230 = vmul.f32 %v2229, 1.442695
    %v2231 = vpow.pop %v2230
    %v2232 = vadd.f32 %v2231, 1.0
    %v2233 = vrcp.pop %v2232
    %v2234 = vmul.f32 1.0, %v2233
    %v2235 = vtanh.pop %v2202
    %v2236 = vmul.f32 %v2234, %v2104
    %2238 = vrot.lane.b32.xlu0 %v2235, 64
    %v2239 = vpop.permute.xlu0 %2238
    %v2241 = vmul.f32 %v2234, %v2239
    %2243 = vrot.lane.b32.xlu0 %v2241, 32
    %v2244 = vpop.permute.xlu0 %2243
    %v2246 = vadd.f32 %v2236, %v2244
    %v2247 = vtanh.pop %v2246
    %2249 = vrot.lane.b32.xlu0 %v2247, 64
    %v2250 = vpop.permute.xlu0 %2249
    %v2252 = vmul.f32 %v2234, %v2250
    %v2253 = vsel %vm822, %v2252, %v2103
    %v2254 = vsel %vm822, %v2246, %v2104
    %v2255 = vld [vmem:[#allocation4 + $0x4] sm:$0x3]
    %v2256 = vpack.c.bf16 %v2227, %v2227
    %2258 = vrot.lane.b32.xlu0 %v2256, 32
    %v2259 = vpop.permute.xlu0 %2258
    %v2261 = vsel %vm501, %v2259, 0
    %2263 = vmatprep.subr.bf16.mxu0 0
    %2264 = vmatpush1.bf16.msra.mxu0 %v1961
    %2265 = vmatprep.subr.bf16.mxu0 0
    %2266 = vmatpush1.bf16.msra.mxu0 %v1962
    %2267 = vmatprep.subr.bf16.mxu0 0
    %2268 = vmatpush1.bf16.msra.mxu0 0
    %2269 = vmatprep.subr.bf16.mxu0 0
    %2270 = vmatpush1.bf16.msra.mxu0 0
    %2271 = vmatprep.subr.bf16.mxu0 0
    %2272 = vmatpush1.bf16.msra.mxu0 0
    %2273 = vmatprep.subr.bf16.mxu0 0
    %2274 = vmatpush1.bf16.msra.mxu0 0
    %2275 = vmatprep.subr.bf16.mxu0 0
    %2276 = vmatpush1.bf16.msra.mxu0 0
    %2277 = vmatprep.subr.bf16.mxu0 0
    %2278 = vmatpush1.bf16.msra.mxu0 0
    %2279 = vmatprep.subr.bf16.mxu0 0
    %2280 = vmatpush1.bf16.msra.mxu0 0
    %2281 = vmatprep.subr.bf16.mxu0 0
    %2282 = vmatpush1.bf16.msra.mxu0 0
    %2283 = vmatprep.subr.bf16.mxu0 0
    %2284 = vmatpush1.bf16.msra.mxu0 0
    %2285 = vmatprep.subr.bf16.mxu0 0
    %2286 = vmatpush1.bf16.msra.mxu0 0
    %2287 = vmatprep.subr.bf16.mxu0 0
    %2288 = vmatpush1.bf16.msra.mxu0 0
    %2289 = vmatprep.subr.bf16.mxu0 0
    %2290 = vmatpush1.bf16.msra.mxu0 0
    %2291 = vmatprep.subr.bf16.mxu0 0
    %2292 = vmatpush1.bf16.msra.mxu0 0
    %2293 = vmatprep.subr.bf16.mxu0 0
    %2294 = vmatpush1.bf16.msra.mxu0 0
    %2295 = vmatprep.mubr.bf16.mxu0 0
    %2296 = vmatmul.mubr.bf16.gmra.mrb[0].mxu0 %v2261
    %v2297 = vpop.f32.mrb[0].mxu0
    %v2298 = vadd.f32 0.0, %v2297
    %v2299 = vpop.f32.mrb[0].mxu0
    %v2300 = vpop.f32.mrb[0].mxu0
    %v2301 = vpop.f32.mrb[0].mxu0
    %2302 = vdwg.mxu0
    %v2303 = vadd.f32 %v2255, %v2298
    %v2304 = vld [vmem:[#allocation5 + $0xa] sm:$0x3]
    %v2305 = vpack.c.bf16 %v2253, %v2253
    %2307 = vrot.lane.b32.xlu0 %v2305, 32
    %v2308 = vpop.permute.xlu0 %2307
    %v2310 = vsel %vm501, %v2308, 0
    %2312 = vmatprep.subr.bf16.mxu0 0
    %2313 = vmatpush1.bf16.msra.mxu0 %v1967
    %2314 = vmatprep.subr.bf16.mxu0 0
    %2315 = vmatpush1.bf16.msra.mxu0 %v1968
    %2316 = vmatprep.subr.bf16.mxu0 0
    %2317 = vmatpush1.bf16.msra.mxu0 0
    %2318 = vmatprep.subr.bf16.mxu0 0
    %2319 = vmatpush1.bf16.msra.mxu0 0
    %2320 = vmatprep.subr.bf16.mxu0 0
    %2321 = vmatpush1.bf16.msra.mxu0 0
    %2322 = vmatprep.subr.bf16.mxu0 0
    %2323 = vmatpush1.bf16.msra.mxu0 0
    %2324 = vmatprep.subr.bf16.mxu0 0
    %2325 = vmatpush1.bf16.msra.mxu0 0
    %2326 = vmatprep.subr.bf16.mxu0 0
    %2327 = vmatpush1.bf16.msra.mxu0 0
    %2328 = vmatprep.subr.bf16.mxu0 0
    %2329 = vmatpush1.bf16.msra.mxu0 0
    %2330 = vmatprep.subr.bf16.mxu0 0
    %2331 = vmatpush1.bf16.msra.mxu0 0
    %2332 = vmatprep.subr.bf16.mxu0 0
    %2333 = vmatpush1.bf16.msra.mxu0 0
    %2334 = vmatprep.subr.bf16.mxu0 0
    %2335 = vmatpush1.bf16.msra.mxu0 0
    %2336 = vmatprep.subr.bf16.mxu0 0
    %2337 = vmatpush1.bf16.msra.mxu0 0
    %2338 = vmatprep.subr.bf16.mxu0 0
    %2339 = vmatpush1.bf16.msra.mxu0 0
    %2340 = vmatprep.subr.bf16.mxu0 0
    %2341 = vmatpush1.bf16.msra.mxu0 0
    %2342 = vmatprep.subr.bf16.mxu0 0
    %2343 = vmatpush1.bf16.msra.mxu0 0
    %2344 = vmatprep.mubr.bf16.mxu0 0
    %2345 = vmatmul.mubr.bf16.gmra.mrb[0].mxu0 %v2310
    %v2346 = vpop.f32.mrb[0].mxu0
    %v2347 = vadd.f32 0.0, %v2346
    %v2348 = vpop.f32.mrb[0].mxu0
    %v2349 = vpop.f32.mrb[0].mxu0
    %v2350 = vpop.f32.mrb[0].mxu0
    %2351 = vdwg.mxu0
    %v2352 = vadd.f32 %v2304, %v2347
    %v2353 = vxor.u32 %v2303, 2147483648
    %v2354 = vmul.f32 %v2353, 1.442695
    %v2355 = vpow.pop %v2354
    %v2356 = vadd.f32 %v2355, 1.0
    %v2357 = vrcp.pop %v2356
    %v2358 = vmul.f32 1.0, %v2357
    %v2359 = vtanh.pop %v2303
    %v2360 = vmul.f32 %v2358, %v2228
    %2362 = vrot.lane.b32.xlu0 %v2359, 64
    %v2363 = vpop.permute.xlu0 %2362
    %v2365 = vmul.f32 %v2358, %v2363
    %2367 = vrot.lane.b32.xlu0 %v2365, 32
    %v2368 = vpop.permute.xlu0 %2367
    %v2370 = vadd.f32 %v2360, %v2368
    %v2371 = vtanh.pop %v2370
    %2373 = vrot.lane.b32.xlu0 %v2371, 64
    %v2374 = vpop.permute.xlu0 %2373
    %v2376 = vmul.f32 %v2358, %v2374
    %v2377 = vsel %vm962, %v2376, %v2227
    %v2378 = vsel %vm962, %v2370, %v2228
    %v2379 = vxor.u32 %v2352, 2147483648
    %v2380 = vmul.f32 %v2379, 1.442695
    %v2381 = vpow.pop %v2380
    %v2382 = vadd.f32 %v2381, 1.0
    %v2383 = vrcp.pop %v2382
    %v2384 = vmul.f32 1.0, %v2383
    %v2385 = vtanh.pop %v2352
    %v2386 = vmul.f32 %v2384, %v2254
    %2388 = vrot.lane.b32.xlu0 %v2385, 64
    %v2389 = vpop.permute.xlu0 %2388
    %v2391 = vmul.f32 %v2384, %v2389
    %2393 = vrot.lane.b32.xlu0 %v2391, 32
    %v2394 = vpop.permute.xlu0 %2393
    %v2396 = vadd.f32 %v2386, %v2394
    %v2397 = vtanh.pop %v2396
    %2399 = vrot.lane.b32.xlu0 %v2397, 64
    %v2400 = vpop.permute.xlu0 %2399
    %v2402 = vmul.f32 %v2384, %v2400
    %v2403 = vsel %vm994, %v2402, %v2253
    %v2404 = vsel %vm994, %v2396, %v2254
    %v2405 = vld [vmem:[#allocation4 + $0x6] sm:$0x3]
    %v2406 = vpack.c.bf16 %v2377, %v2377
    %2408 = vrot.lane.b32.xlu0 %v2406, 32
    %v2409 = vpop.permute.xlu0 %2408
    %v2411 = vsel %vm501, %v2409, 0
    %2413 = vmatprep.subr.bf16.mxu0 0
    %2414 = vmatpush1.bf16.msra.mxu0 %v1961
    %2415 = vmatprep.subr.bf16.mxu0 0
    %2416 = vmatpush1.bf16.msra.mxu0 %v1962
    %2417 = vmatprep.subr.bf16.mxu0 0
    %2418 = vmatpush1.bf16.msra.mxu0 0
    %2419 = vmatprep.subr.bf16.mxu0 0
    %2420 = vmatpush1.bf16.msra.mxu0 0
    %2421 = vmatprep.subr.bf16.mxu0 0
    %2422 = vmatpush1.bf16.msra.mxu0 0
    %2423 = vmatprep.subr.bf16.mxu0 0
    %2424 = vmatpush1.bf16.msra.mxu0 0
    %2425 = vmatprep.subr.bf16.mxu0 0
    %2426 = vmatpush1.bf16.msra.mxu0 0
    %2427 = vmatprep.subr.bf16.mxu0 0
    %2428 = vmatpush1.bf16.msra.mxu0 0
    %2429 = vmatprep.subr.bf16.mxu0 0
    %2430 = vmatpush1.bf16.msra.mxu0 0
    %2431 = vmatprep.subr.bf16.mxu0 0
    %2432 = vmatpush1.bf16.msra.mxu0 0
    %2433 = vmatprep.subr.bf16.mxu0 0
    %2434 = vmatpush1.bf16.msra.mxu0 0
    %2435 = vmatprep.subr.bf16.mxu0 0
    %2436 = vmatpush1.bf16.msra.mxu0 0
    %2437 = vmatprep.subr.bf16.mxu0 0
    %2438 = vmatpush1.bf16.msra.mxu0 0
    %2439 = vmatprep.subr.bf16.mxu0 0
    %2440 = vmatpush1.bf16.msra.mxu0 0
    %2441 = vmatprep.subr.bf16.mxu0 0
    %2442 = vmatpush1.bf16.msra.mxu0 0
    %2443 = vmatprep.subr.bf16.mxu0 0
    %2444 = vmatpush1.bf16.msra.mxu0 0
    %2445 = vmatprep.mubr.bf16.mxu0 0
    %2446 = vmatmul.mubr.bf16.gmra.mrb[0].mxu0 %v2411
    %v2447 = vpop.f32.mrb[0].mxu0
    %v2448 = vadd.f32 0.0, %v2447
    %v2449 = vpop.f32.mrb[0].mxu0
    %v2450 = vpop.f32.mrb[0].mxu0
    %v2451 = vpop.f32.mrb[0].mxu0
    %2452 = vdwg.mxu0
    %v2453 = vadd.f32 %v2405, %v2448
    %v2454 = vld [vmem:[#allocation5 + $0x8] sm:$0x3]
    %v2455 = vpack.c.bf16 %v2403, %v2403
    %2457 = vrot.lane.b32.xlu0 %v2455, 32
    %v2458 = vpop.permute.xlu0 %2457
    %v2460 = vsel %vm501, %v2458, 0
    %2462 = vmatprep.subr.bf16.mxu0 0
    %2463 = vmatpush1.bf16.msra.mxu0 %v1967
    %2464 = vmatprep.subr.bf16.mxu0 0
    %2465 = vmatpush1.bf16.msra.mxu0 %v1968
    %2466 = vmatprep.subr.bf16.mxu0 0
    %2467 = vmatpush1.bf16.msra.mxu0 0
    %2468 = vmatprep.subr.bf16.mxu0 0
    %2469 = vmatpush1.bf16.msra.mxu0 0
    %2470 = vmatprep.subr.bf16.mxu0 0
    %2471 = vmatpush1.bf16.msra.mxu0 0
    %2472 = vmatprep.subr.bf16.mxu0 0
    %2473 = vmatpush1.bf16.msra.mxu0 0
    %2474 = vmatprep.subr.bf16.mxu0 0
    %2475 = vmatpush1.bf16.msra.mxu0 0
    %2476 = vmatprep.subr.bf16.mxu0 0
    %2477 = vmatpush1.bf16.msra.mxu0 0
    %2478 = vmatprep.subr.bf16.mxu0 0
    %2479 = vmatpush1.bf16.msra.mxu0 0
    %2480 = vmatprep.subr.bf16.mxu0 0
    %2481 = vmatpush1.bf16.msra.mxu0 0
    %2482 = vmatprep.subr.bf16.mxu0 0
    %2483 = vmatpush1.bf16.msra.mxu0 0
    %2484 = vmatprep.subr.bf16.mxu0 0
    %2485 = vmatpush1.bf16.msra.mxu0 0
    %2486 = vmatprep.subr.bf16.mxu0 0
    %2487 = vmatpush1.bf16.msra.mxu0 0
    %2488 = vmatprep.subr.bf16.mxu0 0
    %2489 = vmatpush1.bf16.msra.mxu0 0
    %2490 = vmatprep.subr.bf16.mxu0 0
    %2491 = vmatpush1.bf16.msra.mxu0 0
    %2492 = vmatprep.subr.bf16.mxu0 0
    %2493 = vmatpush1.bf16.msra.mxu0 0
    %2494 = vmatprep.mubr.bf16.mxu0 0
    %2495 = vmatmul.mubr.bf16.gmra.mrb[0].mxu0 %v2460
    %v2496 = vpop.f32.mrb[0].mxu0
    %v2497 = vadd.f32 0.0, %v2496
    %v2498 = vpop.f32.mrb[0].mxu0
    %v2499 = vpop.f32.mrb[0].mxu0
    %v2500 = vpop.f32.mrb[0].mxu0
    %2501 = vdwg.mxu0
    %v2502 = vadd.f32 %v2454, %v2497
    %v2503 = vxor.u32 %v2453, 2147483648
    %v2504 = vmul.f32 %v2503, 1.442695
    %v2505 = vpow.pop %v2504
    %v2506 = vadd.f32 %v2505, 1.0
    %v2507 = vrcp.pop %v2506
    %v2508 = vmul.f32 1.0, %v2507
    %v2509 = vtanh.pop %v2453
    %v2510 = vmul.f32 %v2508, %v2378
    %2512 = vrot.lane.b32.xlu0 %v2509, 64
    %v2513 = vpop.permute.xlu0 %2512
    %v2515 = vmul.f32 %v2508, %v2513
    %2517 = vrot.lane.b32.xlu0 %v2515, 32
    %v2518 = vpop.permute.xlu0 %2517
    %v2520 = vadd.f32 %v2510, %v2518
    %v2521 = vtanh.pop %v2520
    %2523 = vrot.lane.b32.xlu0 %v2521, 64
    %v2524 = vpop.permute.xlu0 %2523
    %v2526 = vmul.f32 %v2508, %v2524
    %v2527 = vsel %vm1134, %v2526, %v2377
    %v2528 = vsel %vm1134, %v2520, %v2378
    %v2529 = vxor.u32 %v2502, 2147483648
    %v2530 = vmul.f32 %v2529, 1.442695
    %v2531 = vpow.pop %v2530
    %v2532 = vadd.f32 %v2531, 1.0
    %v2533 = vrcp.pop %v2532
    %v2534 = vmul.f32 1.0, %v2533
    %v2535 = vtanh.pop %v2502
    %v2536 = vmul.f32 %v2534, %v2404
    %2538 = vrot.lane.b32.xlu0 %v2535, 64
    %v2539 = vpop.permute.xlu0 %2538
    %v2541 = vmul.f32 %v2534, %v2539
    %2543 = vrot.lane.b32.xlu0 %v2541, 32
    %v2544 = vpop.permute.xlu0 %2543
    %v2546 = vadd.f32 %v2536, %v2544
    %v2547 = vtanh.pop %v2546
    %2549 = vrot.lane.b32.xlu0 %v2547, 64
    %v2550 = vpop.permute.xlu0 %2549
    %v2552 = vmul.f32 %v2534, %v2550
    %v2553 = vsel %vm1166, %v2552, %v2403
    %v2554 = vsel %vm1166, %v2546, %v2404
    %v2555 = vld [vmem:[#allocation4 + $0x8] sm:$0x3]
    %v2556 = vpack.c.bf16 %v2527, %v2527
    %2558 = vrot.lane.b32.xlu0 %v2556, 32
    %v2559 = vpop.permute.xlu0 %2558
    %v2561 = vsel %vm501, %v2559, 0
    %2563 = vmatprep.subr.bf16.mxu0 0
    %2564 = vmatpush1.bf16.msra.mxu0 %v1961
    %2565 = vmatprep.subr.bf16.mxu0 0
    %2566 = vmatpush1.bf16.msra.mxu0 %v1962
    %2567 = vmatprep.subr.bf16.mxu0 0
    %2568 = vmatpush1.bf16.msra.mxu0 0
    %2569 = vmatprep.subr.bf16.mxu0 0
    %2570 = vmatpush1.bf16.msra.mxu0 0
    %2571 = vmatprep.subr.bf16.mxu0 0
    %2572 = vmatpush1.bf16.msra.mxu0 0
    %2573 = vmatprep.subr.bf16.mxu0 0
    %2574 = vmatpush1.bf16.msra.mxu0 0
    %2575 = vmatprep.subr.bf16.mxu0 0
    %2576 = vmatpush1.bf16.msra.mxu0 0
    %2577 = vmatprep.subr.bf16.mxu0 0
    %2578 = vmatpush1.bf16.msra.mxu0 0
    %2579 = vmatprep.subr.bf16.mxu0 0
    %2580 = vmatpush1.bf16.msra.mxu0 0
    %2581 = vmatprep.subr.bf16.mxu0 0
    %2582 = vmatpush1.bf16.msra.mxu0 0
    %2583 = vmatprep.subr.bf16.mxu0 0
    %2584 = vmatpush1.bf16.msra.mxu0 0
    %2585 = vmatprep.subr.bf16.mxu0 0
    %2586 = vmatpush1.bf16.msra.mxu0 0
    %2587 = vmatprep.subr.bf16.mxu0 0
    %2588 = vmatpush1.bf16.msra.mxu0 0
    %2589 = vmatprep.subr.bf16.mxu0 0
    %2590 = vmatpush1.bf16.msra.mxu0 0
    %2591 = vmatprep.subr.bf16.mxu0 0
    %2592 = vmatpush1.bf16.msra.mxu0 0
    %2593 = vmatprep.subr.bf16.mxu0 0
    %2594 = vmatpush1.bf16.msra.mxu0 0
    %2595 = vmatprep.mubr.bf16.mxu0 0
    %2596 = vmatmul.mubr.bf16.gmra.mrb[0].mxu0 %v2561
    %v2597 = vpop.f32.mrb[0].mxu0
    %v2598 = vadd.f32 0.0, %v2597
    %v2599 = vpop.f32.mrb[0].mxu0
    %v2600 = vpop.f32.mrb[0].mxu0
    %v2601 = vpop.f32.mrb[0].mxu0
    %2602 = vdwg.mxu0
    %v2603 = vadd.f32 %v2555, %v2598
    %v2604 = vld [vmem:[#allocation5 + $0x6] sm:$0x3]
    %v2605 = vpack.c.bf16 %v2553, %v2553
    %2607 = vrot.lane.b32.xlu0 %v2605, 32
    %v2608 = vpop.permute.xlu0 %2607
    %v2610 = vsel %vm501, %v2608, 0
    %2612 = vmatprep.subr.bf16.mxu0 0
    %2613 = vmatpush1.bf16.msra.mxu0 %v1967
    %2614 = vmatprep.subr.bf16.mxu0 0
    %2615 = vmatpush1.bf16.msra.mxu0 %v1968
    %2616 = vmatprep.subr.bf16.mxu0 0
    %2617 = vmatpush1.bf16.msra.mxu0 0
    %2618 = vmatprep.subr.bf16.mxu0 0
    %2619 = vmatpush1.bf16.msra.mxu0 0
    %2620 = vmatprep.subr.bf16.mxu0 0
    %2621 = vmatpush1.bf16.msra.mxu0 0
    %2622 = vmatprep.subr.bf16.mxu0 0
    %2623 = vmatpush1.bf16.msra.mxu0 0
    %2624 = vmatprep.subr.bf16.mxu0 0
    %2625 = vmatpush1.bf16.msra.mxu0 0
    %2626 = vmatprep.subr.bf16.mxu0 0
    %2627 = vmatpush1.bf16.msra.mxu0 0
    %2628 = vmatprep.subr.bf16.mxu0 0
    %2629 = vmatpush1.bf16.msra.mxu0 0
    %2630 = vmatprep.subr.bf16.mxu0 0
    %2631 = vmatpush1.bf16.msra.mxu0 0
    %2632 = vmatprep.subr.bf16.mxu0 0
    %2633 = vmatpush1.bf16.msra.mxu0 0
    %2634 = vmatprep.subr.bf16.mxu0 0
    %2635 = vmatpush1.bf16.msra.mxu0 0
    %2636 = vmatprep.subr.bf16.mxu0 0
    %2637 = vmatpush1.bf16.msra.mxu0 0
    %2638 = vmatprep.subr.bf16.mxu0 0
    %2639 = vmatpush1.bf16.msra.mxu0 0
    %2640 = vmatprep.subr.bf16.mxu0 0
    %2641 = vmatpush1.bf16.msra.mxu0 0
    %2642 = vmatprep.subr.bf16.mxu0 0
    %2643 = vmatpush1.bf16.msra.mxu0 0
    %2644 = vmatprep.mubr.bf16.mxu0 0
    %2645 = vmatmul.mubr.bf16.gmra.mrb[0].mxu0 %v2610
    %v2646 = vpop.f32.mrb[0].mxu0
    %v2647 = vadd.f32 0.0, %v2646
    %v2648 = vpop.f32.mrb[0].mxu0
    %v2649 = vpop.f32.mrb[0].mxu0
    %v2650 = vpop.f32.mrb[0].mxu0
    %2651 = vdwg.mxu0
    %v2652 = vadd.f32 %v2604, %v2647
    %v2653 = vxor.u32 %v2603, 2147483648
    %v2654 = vmul.f32 %v2653, 1.442695
    %v2655 = vpow.pop %v2654
    %v2656 = vadd.f32 %v2655, 1.0
    %v2657 = vrcp.pop %v2656
    %v2658 = vmul.f32 1.0, %v2657
    %v2659 = vtanh.pop %v2603
    %v2660 = vmul.f32 %v2658, %v2528
    %2662 = vrot.lane.b32.xlu0 %v2659, 64
    %v2663 = vpop.permute.xlu0 %2662
    %v2665 = vmul.f32 %v2658, %v2663
    %2667 = vrot.lane.b32.xlu0 %v2665, 32
    %v2668 = vpop.permute.xlu0 %2667
    %v2670 = vadd.f32 %v2660, %v2668
    %v2671 = vtanh.pop %v2670
    %2673 = vrot.lane.b32.xlu0 %v2671, 64
    %v2674 = vpop.permute.xlu0 %2673
    %v2676 = vmul.f32 %v2658, %v2674
    %v2677 = vsel %vm1166, %v2676, %v2527
    %v2678 = vsel %vm1166, %v2670, %v2528
    %v2679 = vxor.u32 %v2652, 2147483648
    %v2680 = vmul.f32 %v2679, 1.442695
    %v2681 = vpow.pop %v2680
    %v2682 = vadd.f32 %v2681, 1.0
    %v2683 = vrcp.pop %v2682
    %v2684 = vmul.f32 1.0, %v2683
    %v2685 = vtanh.pop %v2652
    %v2686 = vmul.f32 %v2684, %v2554
    %2688 = vrot.lane.b32.xlu0 %v2685, 64
    %v2689 = vpop.permute.xlu0 %2688
    %v2691 = vmul.f32 %v2684, %v2689
    %2693 = vrot.lane.b32.xlu0 %v2691, 32
    %v2694 = vpop.permute.xlu0 %2693
    %v2696 = vadd.f32 %v2686, %v2694
    %v2697 = vtanh.pop %v2696
    %2699 = vrot.lane.b32.xlu0 %v2697, 64
    %v2700 = vpop.permute.xlu0 %2699
    %v2702 = vmul.f32 %v2684, %v2700
    %v2703 = vsel %vm1134, %v2702, %v2553
    %v2704 = vsel %vm1134, %v2696, %v2554
    %v2705 = vld [vmem:[#allocation4 + $0xa] sm:$0x3]
    %v2706 = vpack.c.bf16 %v2677, %v2677
    %2708 = vrot.lane.b32.xlu0 %v2706, 32
    %v2709 = vpop.permute.xlu0 %2708
    %v2711 = vsel %vm501, %v2709, 0
    %2713 = vmatprep.subr.bf16.mxu0 0
    %2714 = vmatpush1.bf16.msra.mxu0 %v1961
    %2715 = vmatprep.subr.bf16.mxu0 0
    %2716 = vmatpush1.bf16.msra.mxu0 %v1962
    %2717 = vmatprep.subr.bf16.mxu0 0
    %2718 = vmatpush1.bf16.msra.mxu0 0
    %2719 = vmatprep.subr.bf16.mxu0 0
    %2720 = vmatpush1.bf16.msra.mxu0 0
    %2721 = vmatprep.subr.bf16.mxu0 0
    %2722 = vmatpush1.bf16.msra.mxu0 0
    %2723 = vmatprep.subr.bf16.mxu0 0
    %2724 = vmatpush1.bf16.msra.mxu0 0
    %2725 = vmatprep.subr.bf16.mxu0 0
    %2726 = vmatpush1.bf16.msra.mxu0 0
    %2727 = vmatprep.subr.bf16.mxu0 0
    %2728 = vmatpush1.bf16.msra.mxu0 0
    %2729 = vmatprep.subr.bf16.mxu0 0
    %2730 = vmatpush1.bf16.msra.mxu0 0
    %2731 = vmatprep.subr.bf16.mxu0 0
    %2732 = vmatpush1.bf16.msra.mxu0 0
    %2733 = vmatprep.subr.bf16.mxu0 0
    %2734 = vmatpush1.bf16.msra.mxu0 0
    %2735 = vmatprep.subr.bf16.mxu0 0
    %2736 = vmatpush1.bf16.msra.mxu0 0
    %2737 = vmatprep.subr.bf16.mxu0 0
    %2738 = vmatpush1.bf16.msra.mxu0 0
    %2739 = vmatprep.subr.bf16.mxu0 0
    %2740 = vmatpush1.bf16.msra.mxu0 0
    %2741 = vmatprep.subr.bf16.mxu0 0
    %2742 = vmatpush1.bf16.msra.mxu0 0
    %2743 = vmatprep.subr.bf16.mxu0 0
    %2744 = vmatpush1.bf16.msra.mxu0 0
    %2745 = vmatprep.mubr.bf16.mxu0 0
    %2746 = vmatmul.mubr.bf16.gmra.mrb[0].mxu0 %v2711
    %v2747 = vpop.f32.mrb[0].mxu0
    %v2748 = vadd.f32 0.0, %v2747
    %v2749 = vpop.f32.mrb[0].mxu0
    %v2750 = vpop.f32.mrb[0].mxu0
    %v2751 = vpop.f32.mrb[0].mxu0
    %2752 = vdwg.mxu0
    %v2753 = vadd.f32 %v2705, %v2748
    %v2754 = vld [vmem:[#allocation5 + $0x4] sm:$0x3]
    %v2755 = vpack.c.bf16 %v2703, %v2703
    %2757 = vrot.lane.b32.xlu0 %v2755, 32
    %v2758 = vpop.permute.xlu0 %2757
    %v2760 = vsel %vm501, %v2758, 0
    %2762 = vmatprep.subr.bf16.mxu0 0
    %2763 = vmatpush1.bf16.msra.mxu0 %v1967
    %2764 = vmatprep.subr.bf16.mxu0 0
    %2765 = vmatpush1.bf16.msra.mxu0 %v1968
    %2766 = vmatprep.subr.bf16.mxu0 0
    %2767 = vmatpush1.bf16.msra.mxu0 0
    %2768 = vmatprep.subr.bf16.mxu0 0
    %2769 = vmatpush1.bf16.msra.mxu0 0
    %2770 = vmatprep.subr.bf16.mxu0 0
    %2771 = vmatpush1.bf16.msra.mxu0 0
    %2772 = vmatprep.subr.bf16.mxu0 0
    %2773 = vmatpush1.bf16.msra.mxu0 0
    %2774 = vmatprep.subr.bf16.mxu0 0
    %2775 = vmatpush1.bf16.msra.mxu0 0
    %2776 = vmatprep.subr.bf16.mxu0 0
    %2777 = vmatpush1.bf16.msra.mxu0 0
    %2778 = vmatprep.subr.bf16.mxu0 0
    %2779 = vmatpush1.bf16.msra.mxu0 0
    %2780 = vmatprep.subr.bf16.mxu0 0
    %2781 = vmatpush1.bf16.msra.mxu0 0
    %2782 = vmatprep.subr.bf16.mxu0 0
    %2783 = vmatpush1.bf16.msra.mxu0 0
    %2784 = vmatprep.subr.bf16.mxu0 0
    %2785 = vmatpush1.bf16.msra.mxu0 0
    %2786 = vmatprep.subr.bf16.mxu0 0
    %2787 = vmatpush1.bf16.msra.mxu0 0
    %2788 = vmatprep.subr.bf16.mxu0 0
    %2789 = vmatpush1.bf16.msra.mxu0 0
    %2790 = vmatprep.subr.bf16.mxu0 0
    %2791 = vmatpush1.bf16.msra.mxu0 0
    %2792 = vmatprep.subr.bf16.mxu0 0
    %2793 = vmatpush1.bf16.msra.mxu0 0
    %2794 = vmatprep.mubr.bf16.mxu0 0
    %2795 = vmatmul.mubr.bf16.gmra.mrb[0].mxu0 %v2760
    %v2796 = vpop.f32.mrb[0].mxu0
    %v2797 = vadd.f32 0.0, %v2796
    %v2798 = vpop.f32.mrb[0].mxu0
    %v2799 = vpop.f32.mrb[0].mxu0
    %v2800 = vpop.f32.mrb[0].mxu0
    %2801 = vdwg.mxu0
    %v2802 = vadd.f32 %v2754, %v2797
    %v2803 = vxor.u32 %v2753, 2147483648
    %v2804 = vmul.f32 %v2803, 1.442695
    %v2805 = vpow.pop %v2804
    %v2806 = vadd.f32 %v2805, 1.0
    %v2807 = vrcp.pop %v2806
    %v2808 = vmul.f32 1.0, %v2807
    %v2809 = vtanh.pop %v2753
    %v2810 = vmul.f32 %v2808, %v2678
    %2812 = vrot.lane.b32.xlu0 %v2809, 64
    %v2813 = vpop.permute.xlu0 %2812
    %v2815 = vmul.f32 %v2808, %v2813
    %2817 = vrot.lane.b32.xlu0 %v2815, 32
    %v2818 = vpop.permute.xlu0 %2817
    %v2820 = vadd.f32 %v2810, %v2818
    %v2821 = vtanh.pop %v2820
    %2823 = vrot.lane.b32.xlu0 %v2821, 64
    %v2824 = vpop.permute.xlu0 %2823
    %v2826 = vmul.f32 %v2808, %v2824
    %v2827 = vsel %vm994, %v2826, %v2677
    %v2828 = vsel %vm994, %v2820, %v2678
    %v2829 = vxor.u32 %v2802, 2147483648
    %v2830 = vmul.f32 %v2829, 1.442695
    %v2831 = vpow.pop %v2830
    %v2832 = vadd.f32 %v2831, 1.0
    %v2833 = vrcp.pop %v2832
    %v2834 = vmul.f32 1.0, %v2833
    %v2835 = vtanh.pop %v2802
    %v2836 = vmul.f32 %v2834, %v2704
    %2838 = vrot.lane.b32.xlu0 %v2835, 64
    %v2839 = vpop.permute.xlu0 %2838
    %v2841 = vmul.f32 %v2834, %v2839
    %2843 = vrot.lane.b32.xlu0 %v2841, 32
    %v2844 = vpop.permute.xlu0 %2843
    %v2846 = vadd.f32 %v2836, %v2844
    %v2847 = vtanh.pop %v2846
    %2849 = vrot.lane.b32.xlu0 %v2847, 64
    %v2850 = vpop.permute.xlu0 %2849
    %v2852 = vmul.f32 %v2834, %v2850
    %v2853 = vsel %vm962, %v2852, %v2703
    %v2854 = vsel %vm962, %v2846, %v2704
    %v2855 = vld [vmem:[#allocation4 + $0xc] sm:$0x3]
    %v2856 = vpack.c.bf16 %v2827, %v2827
    %2858 = vrot.lane.b32.xlu0 %v2856, 32
    %v2859 = vpop.permute.xlu0 %2858
    %v2861 = vsel %vm501, %v2859, 0
    %2863 = vmatprep.subr.bf16.mxu0 0
    %2864 = vmatpush1.bf16.msra.mxu0 %v1961
    %2865 = vmatprep.subr.bf16.mxu0 0
    %2866 = vmatpush1.bf16.msra.mxu0 %v1962
    %2867 = vmatprep.subr.bf16.mxu0 0
    %2868 = vmatpush1.bf16.msra.mxu0 0
    %2869 = vmatprep.subr.bf16.mxu0 0
    %2870 = vmatpush1.bf16.msra.mxu0 0
    %2871 = vmatprep.subr.bf16.mxu0 0
    %2872 = vmatpush1.bf16.msra.mxu0 0
    %2873 = vmatprep.subr.bf16.mxu0 0
    %2874 = vmatpush1.bf16.msra.mxu0 0
    %2875 = vmatprep.subr.bf16.mxu0 0
    %2876 = vmatpush1.bf16.msra.mxu0 0
    %2877 = vmatprep.subr.bf16.mxu0 0
    %2878 = vmatpush1.bf16.msra.mxu0 0
    %2879 = vmatprep.subr.bf16.mxu0 0
    %2880 = vmatpush1.bf16.msra.mxu0 0
    %2881 = vmatprep.subr.bf16.mxu0 0
    %2882 = vmatpush1.bf16.msra.mxu0 0
    %2883 = vmatprep.subr.bf16.mxu0 0
    %2884 = vmatpush1.bf16.msra.mxu0 0
    %2885 = vmatprep.subr.bf16.mxu0 0
    %2886 = vmatpush1.bf16.msra.mxu0 0
    %2887 = vmatprep.subr.bf16.mxu0 0
    %2888 = vmatpush1.bf16.msra.mxu0 0
    %2889 = vmatprep.subr.bf16.mxu0 0
    %2890 = vmatpush1.bf16.msra.mxu0 0
    %2891 = vmatprep.subr.bf16.mxu0 0
    %2892 = vmatpush1.bf16.msra.mxu0 0
    %2893 = vmatprep.subr.bf16.mxu0 0
    %2894 = vmatpush1.bf16.msra.mxu0 0
    %2895 = vmatprep.mubr.bf16.mxu0 0
    %2896 = vmatmul.mubr.bf16.gmra.mrb[0].mxu0 %v2861
    %v2897 = vpop.f32.mrb[0].mxu0
    %v2898 = vadd.f32 0.0, %v2897
    %v2899 = vpop.f32.mrb[0].mxu0
    %v2900 = vpop.f32.mrb[0].mxu0
    %v2901 = vpop.f32.mrb[0].mxu0
    %2902 = vdwg.mxu0
    %v2903 = vadd.f32 %v2855, %v2898
    %v2904 = vld [vmem:[#allocation5 + $0x2] sm:$0x3]
    %v2905 = vpack.c.bf16 %v2853, %v2853
    %2907 = vrot.lane.b32.xlu0 %v2905, 32
    %v2908 = vpop.permute.xlu0 %2907
    %v2910 = vsel %vm501, %v2908, 0
    %2912 = vmatprep.subr.bf16.mxu0 0
    %2913 = vmatpush1.bf16.msra.mxu0 %v1967
    %2914 = vmatprep.subr.bf16.mxu0 0
    %2915 = vmatpush1.bf16.msra.mxu0 %v1968
    %2916 = vmatprep.subr.bf16.mxu0 0
    %2917 = vmatpush1.bf16.msra.mxu0 0
    %2918 = vmatprep.subr.bf16.mxu0 0
    %2919 = vmatpush1.bf16.msra.mxu0 0
    %2920 = vmatprep.subr.bf16.mxu0 0
    %2921 = vmatpush1.bf16.msra.mxu0 0
    %2922 = vmatprep.subr.bf16.mxu0 0
    %2923 = vmatpush1.bf16.msra.mxu0 0
    %2924 = vmatprep.subr.bf16.mxu0 0
    %2925 = vmatpush1.bf16.msra.mxu0 0
    %2926 = vmatprep.subr.bf16.mxu0 0
    %2927 = vmatpush1.bf16.msra.mxu0 0
    %2928 = vmatprep.subr.bf16.mxu0 0
    %2929 = vmatpush1.bf16.msra.mxu0 0
    %2930 = vmatprep.subr.bf16.mxu0 0
    %2931 = vmatpush1.bf16.msra.mxu0 0
    %2932 = vmatprep.subr.bf16.mxu0 0
    %2933 = vmatpush1.bf16.msra.mxu0 0
    %2934 = vmatprep.subr.bf16.mxu0 0
    %2935 = vmatpush1.bf16.msra.mxu0 0
    %2936 = vmatprep.subr.bf16.mxu0 0
    %2937 = vmatpush1.bf16.msra.mxu0 0
    %2938 = vmatprep.subr.bf16.mxu0 0
    %2939 = vmatpush1.bf16.msra.mxu0 0
    %2940 = vmatprep.subr.bf16.mxu0 0
    %2941 = vmatpush1.bf16.msra.mxu0 0
    %2942 = vmatprep.subr.bf16.mxu0 0
    %2943 = vmatpush1.bf16.msra.mxu0 0
    %2944 = vmatprep.mubr.bf16.mxu0 0
    %2945 = vmatmul.mubr.bf16.gmra.mrb[0].mxu0 %v2910
    %v2946 = vpop.f32.mrb[0].mxu0
    %v2947 = vadd.f32 0.0, %v2946
    %v2948 = vpop.f32.mrb[0].mxu0
    %v2949 = vpop.f32.mrb[0].mxu0
    %v2950 = vpop.f32.mrb[0].mxu0
    %2951 = vdwg.mxu0
    %v2952 = vadd.f32 %v2904, %v2947
    %v2953 = vxor.u32 %v2903, 2147483648
    %v2954 = vmul.f32 %v2953, 1.442695
    %v2955 = vpow.pop %v2954
    %v2956 = vadd.f32 %v2955, 1.0
    %v2957 = vrcp.pop %v2956
    %v2958 = vmul.f32 1.0, %v2957
    %v2959 = vtanh.pop %v2903
    %v2960 = vmul.f32 %v2958, %v2828
    %2962 = vrot.lane.b32.xlu0 %v2959, 64
    %v2963 = vpop.permute.xlu0 %2962
    %v2965 = vmul.f32 %v2958, %v2963
    %2967 = vrot.lane.b32.xlu0 %v2965, 32
    %v2968 = vpop.permute.xlu0 %2967
    %v2970 = vadd.f32 %v2960, %v2968
    %v2971 = vtanh.pop %v2970
    %2973 = vrot.lane.b32.xlu0 %v2971, 64
    %v2974 = vpop.permute.xlu0 %2973
    %v2976 = vmul.f32 %v2958, %v2974
    %v2977 = vsel %vm822, %v2976, %v2827
    %v2978 = vsel %vm822, %v2970, %v2828
    %v2979 = vxor.u32 %v2952, 2147483648
    %v2980 = vmul.f32 %v2979, 1.442695
    %v2981 = vpow.pop %v2980
    %v2982 = vadd.f32 %v2981, 1.0
    %v2983 = vrcp.pop %v2982
    %v2984 = vmul.f32 1.0, %v2983
    %v2985 = vtanh.pop %v2952
    %v2986 = vmul.f32 %v2984, %v2854
    %2988 = vrot.lane.b32.xlu0 %v2985, 64
    %v2989 = vpop.permute.xlu0 %2988
    %v2991 = vmul.f32 %v2984, %v2989
    %2993 = vrot.lane.b32.xlu0 %v2991, 32
    %v2994 = vpop.permute.xlu0 %2993
    %v2996 = vadd.f32 %v2986, %v2994
    %v2997 = vtanh.pop %v2996
    %2999 = vrot.lane.b32.xlu0 %v2997, 64
    %v3000 = vpop.permute.xlu0 %2999
    %v3002 = vmul.f32 %v2984, %v3000
    %v3003 = vsel %vm790, %v3002, %v2853
    %v3004 = vsel %vm790, %v2996, %v2854
    %v3005 = vld [vmem:[#allocation4 + $0xe] sm:$0x3]
    %v3006 = vpack.c.bf16 %v2977, %v2977
    %3008 = vrot.lane.b32.xlu0 %v3006, 32
    %v3009 = vpop.permute.xlu0 %3008
    %v3011 = vsel %vm501, %v3009, 0
    %3013 = vmatprep.subr.bf16.mxu0 0
    %3014 = vmatpush1.bf16.msra.mxu0 %v1961
    %3015 = vmatprep.subr.bf16.mxu0 0
    %3016 = vmatpush1.bf16.msra.mxu0 %v1962
    %3017 = vmatprep.subr.bf16.mxu0 0
    %3018 = vmatpush1.bf16.msra.mxu0 0
    %3019 = vmatprep.subr.bf16.mxu0 0
    %3020 = vmatpush1.bf16.msra.mxu0 0
    %3021 = vmatprep.subr.bf16.mxu0 0
    %3022 = vmatpush1.bf16.msra.mxu0 0
    %3023 = vmatprep.subr.bf16.mxu0 0
    %3024 = vmatpush1.bf16.msra.mxu0 0
    %3025 = vmatprep.subr.bf16.mxu0 0
    %3026 = vmatpush1.bf16.msra.mxu0 0
    %3027 = vmatprep.subr.bf16.mxu0 0
    %3028 = vmatpush1.bf16.msra.mxu0 0
    %3029 = vmatprep.subr.bf16.mxu0 0
    %3030 = vmatpush1.bf16.msra.mxu0 0
    %3031 = vmatprep.subr.bf16.mxu0 0
    %3032 = vmatpush1.bf16.msra.mxu0 0
    %3033 = vmatprep.subr.bf16.mxu0 0
    %3034 = vmatpush1.bf16.msra.mxu0 0
    %3035 = vmatprep.subr.bf16.mxu0 0
    %3036 = vmatpush1.bf16.msra.mxu0 0
    %3037 = vmatprep.subr.bf16.mxu0 0
    %3038 = vmatpush1.bf16.msra.mxu0 0
    %3039 = vmatprep.subr.bf16.mxu0 0
    %3040 = vmatpush1.bf16.msra.mxu0 0
    %3041 = vmatprep.subr.bf16.mxu0 0
    %3042 = vmatpush1.bf16.msra.mxu0 0
    %3043 = vmatprep.subr.bf16.mxu0 0
    %3044 = vmatpush1.bf16.msra.mxu0 0
    %3045 = vmatprep.mubr.bf16.mxu0 0
    %3046 = vmatmul.mubr.bf16.gmra.mrb[0].mxu0 %v3011
    %v3047 = vpop.f32.mrb[0].mxu0
    %v3048 = vadd.f32 0.0, %v3047
    %v3049 = vpop.f32.mrb[0].mxu0
    %v3050 = vpop.f32.mrb[0].mxu0
    %v3051 = vpop.f32.mrb[0].mxu0
    %3052 = vdwg.mxu0
    %v3053 = vadd.f32 %v3005, %v3048
    %v3054 = vld [vmem:[#allocation5] sm:$0x3]
    %v3055 = vpack.c.bf16 %v3003, %v3003
    %3057 = vrot.lane.b32.xlu0 %v3055, 32
    %v3058 = vpop.permute.xlu0 %3057
    %v3060 = vsel %vm501, %v3058, 0
    %3062 = vmatprep.subr.bf16.mxu0 0
    %3063 = vmatpush1.bf16.msra.mxu0 %v1967
    %3064 = vmatprep.subr.bf16.mxu0 0
    %3065 = vmatpush1.bf16.msra.mxu0 %v1968
    %3066 = vmatprep.subr.bf16.mxu0 0
    %3067 = vmatpush1.bf16.msra.mxu0 0
    %3068 = vmatprep.subr.bf16.mxu0 0
    %3069 = vmatpush1.bf16.msra.mxu0 0
    %3070 = vmatprep.subr.bf16.mxu0 0
    %3071 = vmatpush1.bf16.msra.mxu0 0
    %3072 = vmatprep.subr.bf16.mxu0 0
    %3073 = vmatpush1.bf16.msra.mxu0 0
    %3074 = vmatprep.subr.bf16.mxu0 0
    %3075 = vmatpush1.bf16.msra.mxu0 0
    %3076 = vmatprep.subr.bf16.mxu0 0
    %3077 = vmatpush1.bf16.msra.mxu0 0
    %3078 = vmatprep.subr.bf16.mxu0 0
    %3079 = vmatpush1.bf16.msra.mxu0 0
    %3080 = vmatprep.subr.bf16.mxu0 0
    %3081 = vmatpush1.bf16.msra.mxu0 0
    %3082 = vmatprep.subr.bf16.mxu0 0
    %3083 = vmatpush1.bf16.msra.mxu0 0
    %3084 = vmatprep.subr.bf16.mxu0 0
    %3085 = vmatpush1.bf16.msra.mxu0 0
    %3086 = vmatprep.subr.bf16.mxu0 0
    %3087 = vmatpush1.bf16.msra.mxu0 0
    %3088 = vmatprep.subr.bf16.mxu0 0
    %3089 = vmatpush1.bf16.msra.mxu0 0
    %3090 = vmatprep.subr.bf16.mxu0 0
    %3091 = vmatpush1.bf16.msra.mxu0 0
    %3092 = vmatprep.subr.bf16.mxu0 0
    %3093 = vmatpush1.bf16.msra.mxu0 0
    %3094 = vmatprep.mubr.bf16.mxu0 0
    %3095 = vmatmul.mubr.bf16.gmra.mrb[0].mxu0 %v3060
    %v3096 = vpop.f32.mrb[0].mxu0
    %v3097 = vadd.f32 0.0, %v3096
    %v3098 = vpop.f32.mrb[0].mxu0
    %v3099 = vpop.f32.mrb[0].mxu0
    %v3100 = vpop.f32.mrb[0].mxu0
    %3101 = vdwg.mxu0
    %v3102 = vadd.f32 %v3054, %v3097
    %v3103 = vxor.u32 %v3053, 2147483648
    %v3104 = vmul.f32 %v3103, 1.442695
    %v3105 = vpow.pop %v3104
    %v3106 = vadd.f32 %v3105, 1.0
    %v3107 = vrcp.pop %v3106
    %v3108 = vmul.f32 1.0, %v3107
    %v3109 = vtanh.pop %v3053
    %v3110 = vmul.f32 %v3108, %v2978
    %3112 = vrot.lane.b32.xlu0 %v3109, 64
    %v3113 = vpop.permute.xlu0 %3112
    %v3115 = vmul.f32 %v3108, %v3113
    %3117 = vrot.lane.b32.xlu0 %v3115, 32
    %v3118 = vpop.permute.xlu0 %3117
    %v3120 = vadd.f32 %v3110, %v3118
    %v3121 = vtanh.pop %v3120
    %3123 = vrot.lane.b32.xlu0 %v3121, 64
    %v3124 = vpop.permute.xlu0 %3123
    %v3126 = vmul.f32 %v3108, %v3124
    %v3127 = vsel %vm649, %v3126, %v2977
    %v3128 = vxor.u32 %v3102, 2147483648
    %v3129 = vmul.f32 %v3128, 1.442695
    %v3130 = vpow.pop %v3129
    %v3131 = vadd.f32 %v3130, 1.0
    %v3132 = vrcp.pop %v3131
    %v3133 = vmul.f32 1.0, %v3132
    %v3134 = vtanh.pop %v3102
    %v3135 = vmul.f32 %v3133, %v3004
    %3137 = vrot.lane.b32.xlu0 %v3134, 64
    %v3138 = vpop.permute.xlu0 %3137
    %v3140 = vmul.f32 %v3133, %v3138
    %3142 = vrot.lane.b32.xlu0 %v3140, 32
    %v3143 = vpop.permute.xlu0 %3142
    %v3145 = vadd.f32 %v3135, %v3143
    %v3146 = vtanh.pop %v3145
    %3148 = vrot.lane.b32.xlu0 %v3146, 64
    %v3149 = vpop.permute.xlu0 %3148
    %v3151 = vmul.f32 %v3133, %v3149
    %v3152 = vsel %vm617, %v3151, %v3003
    %3154 = vrot.lane.b32.xlu0 %v3127, 32
    %v3155 = vpop.permute.xlu0 %3154
    %3158 = vrot.lane.b32.xlu0 %v3152, 64
    %v3159 = vpop.permute.xlu0 %3158
    %v3161 = vsel %vm501, %v3155, %v3159
    %v3162 = vld [vmem:[#allocation12] sm:$0xff]
    %v3163 = vld [vmem:[#allocation12 + $0x8] sm:$0xff]
    %v3164 = vld [vmem:[#allocation12 + $0x10] sm:$0xff]
    %v3165 = vld [vmem:[#allocation12 + $0x18] sm:$0xff]
    %v3166 = vld [vmem:[#allocation12 + $0x20] sm:$0xff]
    %v3167 = vld [vmem:[#allocation12 + $0x28] sm:$0xff]
    %v3168 = vld [vmem:[#allocation12 + $0x30] sm:$0xff]
    %v3169 = vld [vmem:[#allocation12 + $0x38] sm:$0xff]
    %v3170 = vld [vmem:[#allocation14] sm:$0x1]
    %v3172 = vlaneseq
    %v3173 = vshrl.u32 %v3172, 7
    %v3174 = vsub.s32 0, %v3173
    %v3175 = vrot.slane %v3170, %v3174
    %v3178 = vsel %vm379, %v3161, 0
    %3180 = vmatprep.subr.mxu0 0.0
    %3181 = vmatpush1.msra.mxu0 %v3162
    %3182 = vmatprep.subr.mxu0 0.0
    %3183 = vmatpush1.msra.mxu0 %v3163
    %3184 = vmatprep.subr.mxu0 0.0
    %3185 = vmatpush1.msra.mxu0 %v3164
    %3186 = vmatprep.subr.mxu0 0.0
    %3187 = vmatpush1.msra.mxu0 %v3165
    %3188 = vmatprep.subr.mxu0 0.0
    %3189 = vmatpush1.msra.mxu0 %v3166
    %3190 = vmatprep.subr.mxu0 0.0
    %3191 = vmatpush1.msra.mxu0 %v3167
    %3192 = vmatprep.subr.mxu0 0.0
    %3193 = vmatpush1.msra.mxu0 %v3168
    %3194 = vmatprep.subr.mxu0 0.0
    %3195 = vmatpush1.msra.mxu0 %v3169
    %3196 = vmatprep.subr.mxu0 0.0
    %3197 = vmatpush1.msra.mxu0 0.0
    %3198 = vmatprep.subr.mxu0 0.0
    %3199 = vmatpush1.msra.mxu0 0.0
    %3200 = vmatprep.subr.mxu0 0.0
    %3201 = vmatpush1.msra.mxu0 0.0
    %3202 = vmatprep.subr.mxu0 0.0
    %3203 = vmatpush1.msra.mxu0 0.0
    %3204 = vmatprep.subr.mxu0 0.0
    %3205 = vmatpush1.msra.mxu0 0.0
    %3206 = vmatprep.subr.mxu0 0.0
    %3207 = vmatpush1.msra.mxu0 0.0
    %3208 = vmatprep.subr.mxu0 0.0
    %3209 = vmatpush1.msra.mxu0 0.0
    %3210 = vmatprep.subr.mxu0 0.0
    %3211 = vmatpush1.msra.mxu0 0.0
    %3212 = vmatprep.subr.mxu0 0.0
    %3213 = vmatpush1.msra.mxu0 0.0
    %3214 = vmatprep.subr.mxu0 0.0
    %3215 = vmatpush1.msra.mxu0 0.0
    %3216 = vmatprep.subr.mxu0 0.0
    %3217 = vmatpush1.msra.mxu0 0.0
    %3218 = vmatprep.subr.mxu0 0.0
    %3219 = vmatpush1.msra.mxu0 0.0
    %3220 = vmatprep.subr.mxu0 0.0
    %3221 = vmatpush1.msra.mxu0 0.0
    %3222 = vmatprep.subr.mxu0 0.0
    %3223 = vmatpush1.msra.mxu0 0.0
    %3224 = vmatprep.subr.mxu0 0.0
    %3225 = vmatpush1.msra.mxu0 0.0
    %3226 = vmatprep.subr.mxu0 0.0
    %3227 = vmatpush1.msra.mxu0 0.0
    %3228 = vmatprep.subr.mxu0 0.0
    %3229 = vmatpush1.msra.mxu0 0.0
    %3230 = vmatprep.subr.mxu0 0.0
    %3231 = vmatpush1.msra.mxu0 0.0
    %3232 = vmatprep.subr.mxu0 0.0
    %3233 = vmatpush1.msra.mxu0 0.0
    %3234 = vmatprep.subr.mxu0 0.0
    %3235 = vmatpush1.msra.mxu0 0.0
    %3236 = vmatprep.subr.mxu0 0.0
    %3237 = vmatpush1.msra.mxu0 0.0
    %3238 = vmatprep.subr.mxu0 0.0
    %3239 = vmatpush1.msra.mxu0 0.0
    %3240 = vmatprep.subr.mxu0 0.0
    %3241 = vmatpush1.msra.mxu0 0.0
    %3242 = vmatprep.subr.mxu0 0.0
    %3243 = vmatpush1.msra.mxu0 0.0
    %3244 = vmatprep.mubr.f32.mxu0 0.0
    %3245 = vmatmul.mubr.f32.gmra.mrb[0].mxu0 %v3178
    %v3246 = vpop.f32.mrb[0].mxu0
    %v3247 = vadd.f32 %v3175, %v3246
    %v3248 = vpop.f32.mrb[0].mxu0
    %3249 = vdwg.mxu0
    %vm3250 = vcmask 25600
    %3251 = vst.msk [vmem:[#allocation33] sm:$0x3] %vm3250, %v3247
    // Predicated region
    $region138: #{tpu_custom_call.1} parent=1 // pred_check
      _
    $region139: #{tpu_custom_call.1} parent=1 // pred_check_branch
      %3253 = sbr.rel (0) target = $region141
    $region140: #{tpu_custom_call.1} parent=1 // pred_region
      %s3255 = ssub.s32 32, 32
      %3256 = vsyncadd [#allocation8], %s3255
      %s3258 = sshll.u32 [#allocation33], 4
      %s3259 = int_to_ptr.vmem [resolvable:$true] %s3258
      %3261 = dma.vmem_to_hbm [thread:$0]  %s3259, 32, %s17, [#allocation8]
    $region141: #{tpu_custom_call.1} parent=1 // pred_fallthru
      _
    // Predicated region
    $region142: #{tpu_custom_call.1} parent=1 // pred_check
      _
    $region143: #{tpu_custom_call.1} parent=1 // pred_check_branch
      %3263 = sbr.rel (0) target = $region145
    $region144: #{tpu_custom_call.1} parent=1 // pred_region
      %3264 = dma.done [#allocation8], 32
    $region145: #{tpu_custom_call.1} parent=1 // pred_fallthru
      _
    %3265 = vsyncpa [#allocation7], 1
    %3266 = vsyncpa [#allocation10], 1
    %3267 = vsyncpa [#allocation13], 1
    %3268 = vsyncpa [#allocation16], 1
    %3269 = vsyncpa [#allocation19], 1
    %3270 = vsyncpa [#allocation22], 1
    %3271 = vsyncpa [#allocation25], 1
    %3272 = vsyncpa [#allocation28], 1
    %3273 = vsyncpa [#allocation31], 1
    %3274 = vsyncpa [#allocation8], 1

</llo_original>
